<compile_context>
chip_gen: v7x
topology: tpu7x:2x2x1
jax: 0.10.0
libtpu: 0.0.40
codegen_flags: <defaults>
</compile_context>

<pallas_src>
import functools

import jax
import jax.numpy as jnp
from jax.experimental import pallas as pl
from jax.experimental.pallas import tpu as pltpu


def _round_up(x, m):
    return (x + m - 1) // m * m


def _device_kind():
    try:
        return jax.devices()[0].device_kind.lower()
    except Exception:
        return ""


def _elementwise_dtype():
    """bf16 elementwise/EUP path on v6e/v7x; f32 elsewhere (v5e has no bf16 VPU/EUP)."""
    kind = _device_kind()
    if "v6" in kind or "v7" in kind or "7x" in kind:
        return jnp.bfloat16
    return jnp.float32


def _tpu_defaults():
    """(time_tile, vmem_limit_bytes) tuned per chip family."""
    kind = _device_kind()
    if "v7" in kind or "7x" in kind:
        return 256, 40 * 1024 * 1024          # 64 MiB physical VMEM: stay modest
    return 512, 64 * 1024 * 1024              # v5e/v6e: 128 MiB physical VMEM


def _sigmoid(x):
    # Single EUP op (tanh), no divide; exact reformulation of the logistic.
    return 0.5 * jnp.tanh(0.5 * x) + 0.5


def cfn_encoder_kernel(top_ref, mid_ref, bot_ref, gamma_ref, beta_ref,
                       w1a_ref, b1a_ref, w1b_ref, b1b_ref,
                       wd_ref, bd_ref, w2_ref, b2_ref,
                       o_ref, xwin_ref,
                       *, seq_len, tile_t, halo, inner_dim, kernel_size, ew_dtype):
    """One (batch, time-tile) pair per grid step.

    top/mid/bot: auto-pipelined views of x -- (1, halo, D), (1, tile_t, D),
                 (1, halo, D) f32 -- together the halo'd window of this tile.
    gamma/beta:  (1, D) f32                 LayerNorm affine
    w1a/w1b:     (D, inner) bf16, b1a/b1b: (1, inner) f32   pointwise conv #1 (GLU halves)
    wd:          (K, inner) f32, bd: (1, inner) f32         depthwise conv
    w2:          (inner, D) bf16, b2: (1, D) f32            pointwise conv #2
    o_ref:       (1, tile_t, D)
    xwin_ref:    (tile_t + 2*halo, D) f32 VMEM scratch (assembled window)
    """
    i = pl.program_id(1)
    K = kernel_size
    pad = (K - 1) // 2
    W = tile_t + 2 * halo                              # halo'd window rows (mult. of 8)

    # ---- assemble the halo'd window (all pieces were auto-DMA'd / pipelined) ----
    xwin_ref[0:halo, :] = top_ref[0]
    xwin_ref[halo:halo + tile_t, :] = mid_ref[0]
    xwin_ref[halo + tile_t:halo + tile_t + halo, :] = bot_ref[0]
    x = xwin_ref[...]                                   # (W, D) f32

    # ---- LayerNorm over channels (eps=1e-5), two-pass (centered) variance ----
    mean = jnp.mean(x, axis=-1, keepdims=True)
    xc = x - mean
    var = jnp.mean(xc * xc, axis=-1, keepdims=True)
    xn = xc * jax.lax.rsqrt(var + 1e-5) * gamma_ref[...] + beta_ref[...]   # (W, D)

    # ---- Conv1d(dim, 2*inner, 1) + GLU: two lane-aligned bf16 MXU matmuls ----
    xnb = xn.astype(jnp.bfloat16)
    a = jnp.dot(xnb, w1a_ref[...], preferred_element_type=jnp.float32) + b1a_ref[...]
    gate = jnp.dot(xnb, w1b_ref[...], preferred_element_type=jnp.float32) + b1b_ref[...]
    if ew_dtype == jnp.float32:
        sig = _sigmoid(gate)
    else:
        sig = _sigmoid(gate.astype(ew_dtype)).astype(jnp.float32)   # bf16 EUP tanh
    g = a * sig                                          # (W, inner) f32

    # ---- sequence mask: (W, 1) column, one broadcast multiply ----
    # Zero every row outside [0, seq_len) so halo / right padding behaves exactly
    # like Conv1d's zero 'same' padding.
    row = jax.lax.broadcasted_iota(jnp.int32, (W, 1), 0) + (i * tile_t - halo)
    mask = jnp.logical_and(row >= 0, row < seq_len).astype(jnp.float32)
    g = g * mask

    # ---- Depthwise Conv1d along time ('same', zero padding) ----
    # out[t] = sum_k g[halo + t + k - pad] * wd[k].  Taps are grouped by the
    # residue r = (halo + k - pad) mod 8: one XLU roll per non-zero residue, then
    # each tap is a sublane-aligned static slice of that rolled copy.  Since
    # pad <= halo, no wrapped element ever reaches the rows we keep.
    wd = wd_ref[...]                                     # (K, inner) f32
    groups = {}
    for k in range(K):
        groups.setdefault((halo + k - pad) % 8, []).append(k)

    acc = jnp.zeros((tile_t, inner_dim), jnp.float32)
    for r in sorted(groups):
        rolled = g if r == 0 else pltpu.roll(g, W - r, axis=0)   # rolled[x] = g[x + r]
        for k in groups[r]:
            a0 = halo + k - pad - r                      # static, multiple of 8
            acc = acc + rolled[a0:a0 + tile_t, :] * wd[k:k + 1, :]
    acc = acc + bd_ref[...]                              # (tile_t, inner) f32

    # ---- SiLU (bf16 EUP on v6e/v7x) feeding the bf16 MXU matmul ----
    if ew_dtype == jnp.float32:
        s = (acc * _sigmoid(acc)).astype(jnp.bfloat16)
    else:
        acc_b = acc.astype(jnp.bfloat16)
        s = acc_b * _sigmoid(acc_b)

    # ---- Conv1d(inner, dim, 1): bf16 MXU matmul ----
    out = jnp.dot(s, w2_ref[...], preferred_element_type=jnp.float32) + b2_ref[...]

    # ---- Residual (interior rows of the window are exactly this tile's x rows) ----
    o_ref[0] = (mid_ref[0] + out).astype(o_ref.dtype)


def cfn_encoder_layer(x, params, *, kernel_size=31, time_tile=None,
                      vmem_limit_bytes=None):
    """x: (B, T, D) float32.  params: dict in the kernel layout (see make_params)."""
    B, T, D = x.shape
    inner = params["w2"].shape[0]
    K = kernel_size
    assert K % 2 == 1, "odd kernel_size assumed (module default is 31)"
    pad = (K - 1) // 2

    dflt_tile, dflt_vmem = _tpu_defaults()
    if time_tile is None:
        time_tile = dflt_tile
    if vmem_limit_bytes is None:
        vmem_limit_bytes = dflt_vmem

    halo = _round_up(max(pad, 1), 8)              # sublane-aligned halo (>= pad)
    tT = _round_up(min(time_tile, T), halo)       # multiple of halo (and of 8)
    nT = pl.cdiv(T, tT)
    T_pad = nT * tT
    W = tT + 2 * halo
    hpb = tT // halo                              # halo-sized blocks per time tile

    # Two HBM views of x (both zero-padded); the kernel re-masks everything
    # outside [0, T) so padding never leaks into the depthwise conv.
    x_mid = jnp.pad(x, ((0, 0), (0, T_pad - T), (0, 0)))                 # interior rows
    x_halo = jnp.pad(x, ((0, 0), (halo, halo + T_pad - T), (0, 0)))      # halo edge rows

    ew_dtype = _elementwise_dtype()
    kernel = functools.partial(
        cfn_encoder_kernel, seq_len=T, tile_t=tT, halo=halo,
        inner_dim=inner, kernel_size=K, ew_dtype=ew_dtype)

    def full(shape):  # grid-invariant (weight/bias) block
        return pl.BlockSpec(shape, lambda b, i: tuple(0 for _ in shape))

    out_pad = pl.pallas_call(
        kernel,
        out_shape=jax.ShapeDtypeStruct((B, T_pad, D), x.dtype),
        grid_spec=pltpu.PrefetchScalarGridSpec(
            num_scalar_prefetch=0,
            grid=(B, nT),
            in_specs=[
                # top halo: padded rows [i*tT, i*tT + halo)
                pl.BlockSpec((1, halo, D), lambda b, i: (b, i * hpb, 0)),
                # interior: rows [i*tT, (i+1)*tT) of the (right-padded) x
                pl.BlockSpec((1, tT, D), lambda b, i: (b, i, 0)),
                # bottom halo: padded rows [(i+1)*tT + halo, (i+1)*tT + 2*halo)
                pl.BlockSpec((1, halo, D), lambda b, i: (b, (i + 1) * hpb + 1, 0)),
                full((1, D)),                               # gamma
                full((1, D)),                               # beta
                full((D, inner)),                           # w1a (bf16)
                full((1, inner)),                           # b1a
                full((D, inner)),                           # w1b (bf16)
                full((1, inner)),                           # b1b
                full((K, inner)),                           # wd
                full((1, inner)),                           # bd
                full((inner, D)),                           # w2 (bf16)
                full((1, D)),                               # b2
            ],
            out_specs=pl.BlockSpec((1, tT, D), lambda b, i: (b, i, 0)),
            scratch_shapes=[
                pltpu.VMEM((W, D), jnp.float32),            # assembled halo'd window
            ],
        ),
        compiler_params=pltpu.CompilerParams(
            dimension_semantics=("parallel", "parallel"),
            vmem_limit_bytes=vmem_limit_bytes,
        ),
    )(x_halo, x_mid, x_halo,
      params["gamma"], params["beta"],
      params["w1a"], params["b1a"], params["w1b"], params["b1b"],
      params["wd"], params["bd"], params["w2"], params["b2"])

    return out_pad[:, :T, :]


def ref_forward(x, params, *, kernel_size=31):
    """Pure-JAX f32 reference of the same forward pass (weights upcast from bf16)."""
    f32 = jnp.float32
    K = kernel_size
    pad = (K - 1) // 2
    T = x.shape[1]

    mean = jnp.mean(x, axis=-1, keepdims=True)
    var = jnp.mean((x - mean) ** 2, axis=-1, keepdims=True)
    xn = (x - mean) * jax.lax.rsqrt(var + 1e-5)
    xn = xn * params["gamma"] + params["beta"]

    a = xn @ params["w1a"].astype(f32) + params["b1a"]
    b = xn @ params["w1b"].astype(f32) + params["b1b"]
    g = a * jax.nn.sigmoid(b)

    gp = jnp.pad(g, ((0, 0), (pad, pad), (0, 0)))
    acc = jnp.zeros_like(g)
    for k in range(K):
        acc = acc + gp[:, k:k + T, :] * params["wd"][k]
    acc = acc + params["bd"]

    s = acc * jax.nn.sigmoid(acc)
    out = s @ params["w2"].astype(f32) + params["b2"]
    return x + out


def make_params(key, dim_model, kernel_size=31, expansion_factor=2):
    """Deterministic synthetic parameters (shapes match the PyTorch module)."""
    inner = dim_model * expansion_factor
    K = kernel_size
    ks = jax.random.split(key, 10)
    f32, bf16 = jnp.float32, jnp.bfloat16
    return {
        # LayerNorm(dim_model)
        "gamma": 1.0 + 0.1 * jax.random.normal(ks[0], (1, dim_model), f32),
        "beta": 0.01 * jax.random.normal(ks[1], (1, dim_model), f32),
        # Conv1d(dim, 2*inner, 1): torch weight (2*inner, dim, 1) -> split into the
        # GLU halves and transposed to (dim, inner); stored bf16 for the MXU.
        "w1a": (jax.random.normal(ks[2], (dim_model, inner), f32) * 0.05).astype(bf16),
        "b1a": jax.random.normal(ks[3], (1, inner), f32) * 0.01,
        "w1b": (jax.random.normal(ks[4], (dim_model, inner), f32) * 0.05).astype(bf16),
        "b1b": jax.random.normal(ks[5], (1, inner), f32) * 0.01,
        # Depthwise Conv1d(inner, inner, K, groups=inner): torch weight (inner,1,K)
        # -> (K, inner); kept f32 (roll/MAC path stays f32).
        "wd": jax.random.normal(ks[6], (K, inner), f32) * 0.05,
        "bd": jax.random.normal(ks[7], (1, inner), f32) * 0.01,
        # Conv1d(inner, dim, 1): torch weight (dim, inner, 1) -> (inner, dim), bf16.
        "w2": (jax.random.normal(ks[8], (inner, dim_model), f32) * 0.05).astype(bf16),
        "b2": jax.random.normal(ks[9], (1, dim_model), f32) * 0.01,
    }


if __name__ == "__main__":
    B, T, D = 2, 48, 128      # D multiple of 128 -> lane-dense loads/stores
    K = 31                    # conformer depthwise kernel size (module default)

    key = jax.random.PRNGKey(0)
    kx, kp = jax.random.split(key)
    x = jax.random.normal(kx, (B, T, D), jnp.float32)
    params = make_params(kp, D, kernel_size=K)

    # time_tile=32 so the small demo exercises multiple time tiles, the halo
    # BlockSpecs and the edge masking; real sequences use the per-chip default.
    out = cfn_encoder_layer(x, params, kernel_size=K, time_tile=32)
    out = jax.block_until_ready(out)

    ref = ref_forward(x, params, kernel_size=K)
    assert out.shape == (B, T, D)
    max_err = float(jnp.max(jnp.abs(out - ref)))
    assert jnp.allclose(out, ref, atol=2e-2, rtol=2e-2), (
        f"mismatch vs reference (max abs err {max_err})")

    print("KERNEL_OK")
</pallas_src>

<mosaic_0001>
module attributes {stable_mosaic.version = 11 : i64} {
  func.func @cfn_encoder_kernel(%arg0: i32, %arg1: i32, %arg2: memref<1x16x128xf32, #tpu.memory_space<vmem>>, %arg3: memref<1x32x128xf32, #tpu.memory_space<vmem>>, %arg4: memref<1x16x128xf32, #tpu.memory_space<vmem>>, %arg5: memref<1x128xf32, #tpu.memory_space<vmem>>, %arg6: memref<1x128xf32, #tpu.memory_space<vmem>>, %arg7: memref<128x256xbf16, #tpu.memory_space<vmem>>, %arg8: memref<1x256xf32, #tpu.memory_space<vmem>>, %arg9: memref<128x256xbf16, #tpu.memory_space<vmem>>, %arg10: memref<1x256xf32, #tpu.memory_space<vmem>>, %arg11: memref<31x256xf32, #tpu.memory_space<vmem>>, %arg12: memref<1x256xf32, #tpu.memory_space<vmem>>, %arg13: memref<256x128xbf16, #tpu.memory_space<vmem>>, %arg14: memref<1x128xf32, #tpu.memory_space<vmem>>, %arg15: memref<1x32x128xf32, #tpu.memory_space<vmem>>, %arg16: memref<64x128xf32, #tpu.memory_space<vmem>>) attributes {dimension_semantics = [#tpu.dimension_semantics<parallel>, #tpu.dimension_semantics<parallel>], iteration_bounds = array<i64: 2, 2>, scalar_prefetch = 0 : i64, scratch_operands = 1 : i64, tpu.core_type = #tpu.core_type<tc>, window_params = [{transform_indices = @transform_0, window_bounds = array<i64: 1, 16, 128>}, {transform_indices = @transform_1, window_bounds = array<i64: 1, 32, 128>}, {transform_indices = @transform_2, window_bounds = array<i64: 1, 16, 128>}, {pipeline_mode = #tpu.pipeline_mode<synchronous>, transform_indices = @transform_3, window_bounds = array<i64: 1, 128>}, {pipeline_mode = #tpu.pipeline_mode<synchronous>, transform_indices = @transform_4, window_bounds = array<i64: 1, 128>}, {pipeline_mode = #tpu.pipeline_mode<synchronous>, transform_indices = @transform_5, window_bounds = array<i64: 128, 256>}, {pipeline_mode = #tpu.pipeline_mode<synchronous>, transform_indices = @transform_6, window_bounds = array<i64: 1, 256>}, {pipeline_mode = #tpu.pipeline_mode<synchronous>, transform_indices = @transform_7, window_bounds = array<i64: 128, 256>}, {pipeline_mode = #tpu.pipeline_mode<synchronous>, transform_indices = @transform_8, window_bounds = array<i64: 1, 256>}, {pipeline_mode = #tpu.pipeline_mode<synchronous>, transform_indices = @transform_9, window_bounds = array<i64: 31, 256>}, {pipeline_mode = #tpu.pipeline_mode<synchronous>, transform_indices = @transform_10, window_bounds = array<i64: 1, 256>}, {pipeline_mode = #tpu.pipeline_mode<synchronous>, transform_indices = @transform_11, window_bounds = array<i64: 256, 128>}, {pipeline_mode = #tpu.pipeline_mode<synchronous>, transform_indices = @transform_12, window_bounds = array<i64: 1, 128>}, {transform_indices = @transform_13, window_bounds = array<i64: 1, 32, 128>}]} {
    %c0 = arith.constant 0 : index
    %c0_0 = arith.constant 0 : index
    %c0_1 = arith.constant 0 : index
    %0 = vector.load %arg2[%c0, %c0_0, %c0_1] : memref<1x16x128xf32, #tpu.memory_space<vmem>>, vector<1x16x128xf32>
    %1 = vector.shape_cast %0 : vector<1x16x128xf32> to vector<16x128xf32>
    %c0_2 = arith.constant 0 : index
    %c0_3 = arith.constant 0 : index
    %2 = vector.load %arg16[%c0_2, %c0_3] : memref<64x128xf32, #tpu.memory_space<vmem>>, vector<16x128xf32>
    tpu.vector_store %arg16[%c0_2, %c0_3], %1 {strides = array<i32>} : memref<64x128xf32, #tpu.memory_space<vmem>>, vector<16x128xf32>,
    %c0_4 = arith.constant 0 : index
    %c0_5 = arith.constant 0 : index
    %c0_6 = arith.constant 0 : index
    %3 = vector.load %arg3[%c0_4, %c0_5, %c0_6] : memref<1x32x128xf32, #tpu.memory_space<vmem>>, vector<1x32x128xf32>
    %4 = vector.shape_cast %3 : vector<1x32x128xf32> to vector<32x128xf32>
    %c16 = arith.constant 16 : index
    %c0_7 = arith.constant 0 : index
    %5 = vector.load %arg16[%c16, %c0_7] : memref<64x128xf32, #tpu.memory_space<vmem>>, vector<32x128xf32>
    tpu.vector_store %arg16[%c16, %c0_7], %4 {strides = array<i32>} : memref<64x128xf32, #tpu.memory_space<vmem>>, vector<32x128xf32>,
    %c0_8 = arith.constant 0 : index
    %c0_9 = arith.constant 0 : index
    %c0_10 = arith.constant 0 : index
    %6 = vector.load %arg4[%c0_8, %c0_9, %c0_10] : memref<1x16x128xf32, #tpu.memory_space<vmem>>, vector<1x16x128xf32>
    %7 = vector.shape_cast %6 : vector<1x16x128xf32> to vector<16x128xf32>
    %c48 = arith.constant 48 : index
    %c0_11 = arith.constant 0 : index
    %8 = vector.load %arg16[%c48, %c0_11] : memref<64x128xf32, #tpu.memory_space<vmem>>, vector<16x128xf32>
    tpu.vector_store %arg16[%c48, %c0_11], %7 {strides = array<i32>} : memref<64x128xf32, #tpu.memory_space<vmem>>, vector<16x128xf32>,
    %c0_12 = arith.constant 0 : index
    %c0_13 = arith.constant 0 : index
    %9 = vector.load %arg16[%c0_12, %c0_13] : memref<64x128xf32, #tpu.memory_space<vmem>>, vector<64x128xf32>
    %cst = arith.constant dense<0.000000e+00> : vector<64xf32>
    %10 = vector.multi_reduction <add>, %9, %cst [1] : vector<64x128xf32> to vector<64xf32>
    %11 = vector.shape_cast %10 : vector<64xf32> to vector<64x1xf32>
    %cst_14 = arith.constant 1.280000e+02 : f32
    %12 = vector.broadcast %cst_14 : f32 to vector<64x1xf32>
    %13 = arith.divf %11, %12 : vector<64x1xf32>
    %14 = vector.broadcast %13 : vector<64x1xf32> to vector<64x128xf32>
    %15 = arith.subf %9, %14 : vector<64x128xf32>
    %16 = arith.mulf %15, %15 : vector<64x128xf32>
    %cst_15 = arith.constant dense<0.000000e+00> : vector<64xf32>
    %17 = vector.multi_reduction <add>, %16, %cst_15 [1] : vector<64x128xf32> to vector<64xf32>
    %18 = vector.shape_cast %17 : vector<64xf32> to vector<64x1xf32>
    %cst_16 = arith.constant 1.280000e+02 : f32
    %19 = vector.broadcast %cst_16 : f32 to vector<64x1xf32>
    %20 = arith.divf %18, %19 : vector<64x1xf32>
    %cst_17 = arith.constant 9.99999974E-6 : f32
    %21 = vector.broadcast %cst_17 : f32 to vector<64x1xf32>
    %22 = arith.addf %20, %21 : vector<64x1xf32>
    %23 = math.rsqrt %22 : vector<64x1xf32>
    %24 = vector.broadcast %23 : vector<64x1xf32> to vector<64x128xf32>
    %25 = arith.mulf %15, %24 : vector<64x128xf32>
    %c0_18 = arith.constant 0 : index
    %c0_19 = arith.constant 0 : index
    %26 = vector.load %arg5[%c0_18, %c0_19] : memref<1x128xf32, #tpu.memory_space<vmem>>, vector<1x128xf32>
    %27 = vector.broadcast %26 : vector<1x128xf32> to vector<64x128xf32>
    %28 = arith.mulf %25, %27 : vector<64x128xf32>
    %c0_20 = arith.constant 0 : index
    %c0_21 = arith.constant 0 : index
    %29 = vector.load %arg6[%c0_20, %c0_21] : memref<1x128xf32, #tpu.memory_space<vmem>>, vector<1x128xf32>
    %30 = vector.broadcast %29 : vector<1x128xf32> to vector<64x128xf32>
    %31 = arith.addf %28, %30 : vector<64x128xf32>
    %32 = arith.truncf %31 : vector<64x128xf32> to vector<64x128xbf16>
    %c0_22 = arith.constant 0 : index
    %c0_23 = arith.constant 0 : index
    %33 = vector.load %arg7[%c0_22, %c0_23] : memref<128x256xbf16, #tpu.memory_space<vmem>>, vector<128x256xbf16>
    %cst_24 = arith.constant dense<0.000000e+00> : vector<64x256xf32>
    %34 = tpu.matmul %32, %33, %cst_24 {dimension_numbers = #tpu.dot_dimension_numbers<[1], [0], [0], [1], [0, 0, 1, 1], [], []>} : vector<64x128xbf16>, vector<128x256xbf16>, vector<64x256xf32> -> vector<64x256xf32>
    %c0_25 = arith.constant 0 : index
    %c0_26 = arith.constant 0 : index
    %35 = vector.load %arg8[%c0_25, %c0_26] : memref<1x256xf32, #tpu.memory_space<vmem>>, vector<1x256xf32>
    %36 = vector.broadcast %35 : vector<1x256xf32> to vector<64x256xf32>
    %37 = arith.addf %34, %36 : vector<64x256xf32>
    %c0_27 = arith.constant 0 : index
    %c0_28 = arith.constant 0 : index
    %38 = vector.load %arg9[%c0_27, %c0_28] : memref<128x256xbf16, #tpu.memory_space<vmem>>, vector<128x256xbf16>
    %cst_29 = arith.constant dense<0.000000e+00> : vector<64x256xf32>
    %39 = tpu.matmul %32, %38, %cst_29 {dimension_numbers = #tpu.dot_dimension_numbers<[1], [0], [0], [1], [0, 0, 1, 1], [], []>} : vector<64x128xbf16>, vector<128x256xbf16>, vector<64x256xf32> -> vector<64x256xf32>
    %c0_30 = arith.constant 0 : index
    %c0_31 = arith.constant 0 : index
    %40 = vector.load %arg10[%c0_30, %c0_31] : memref<1x256xf32, #tpu.memory_space<vmem>>, vector<1x256xf32>
    %41 = vector.broadcast %40 : vector<1x256xf32> to vector<64x256xf32>
    %42 = arith.addf %39, %41 : vector<64x256xf32>
    %cst_32 = arith.constant 5.000000e-01 : f32
    %43 = vector.broadcast %cst_32 : f32 to vector<64x256xf32>
    %44 = arith.mulf %43, %42 : vector<64x256xf32>
    %45 = math.tanh %44 : vector<64x256xf32>
    %cst_33 = arith.constant 5.000000e-01 : f32
    %46 = vector.broadcast %cst_33 : f32 to vector<64x256xf32>
    %47 = arith.mulf %46, %45 : vector<64x256xf32>
    %cst_34 = arith.constant 5.000000e-01 : f32
    %48 = vector.broadcast %cst_34 : f32 to vector<64x256xf32>
    %49 = arith.addf %47, %48 : vector<64x256xf32>
    %50 = arith.mulf %37, %49 : vector<64x256xf32>
    %51 = tpu.iota {dimensions = array<i32: 0>} : vector<64x1xi32>
    %c32_i32 = arith.constant 32 : i32
    %52 = arith.muli %arg1, %c32_i32 : i32
    %c16_i32 = arith.constant 16 : i32
    %53 = arith.subi %52, %c16_i32 : i32
    %54 = vector.broadcast %53 : i32 to vector<64x1xi32>
    %55 = arith.addi %51, %54 : vector<64x1xi32>
    %c0_i32 = arith.constant 0 : i32
    %56 = vector.broadcast %c0_i32 : i32 to vector<64x1xi32>
    %57 = arith.cmpi sge, %55, %56 : vector<64x1xi32>
    %c48_i32 = arith.constant 48 : i32
    %58 = vector.broadcast %c48_i32 : i32 to vector<64x1xi32>
    %59 = arith.cmpi slt, %55, %58 : vector<64x1xi32>
    %60 = arith.andi %57, %59 : vector<64x1xi1>
    %61 = arith.extui %60 : vector<64x1xi1> to vector<64x1xi32>
    %62 = arith.sitofp %61 : vector<64x1xi32> to vector<64x1xf32>
    %63 = vector.broadcast %62 : vector<64x1xf32> to vector<64x256xf32>
    %64 = arith.mulf %50, %63 : vector<64x256xf32>
    %c0_35 = arith.constant 0 : index
    %c0_36 = arith.constant 0 : index
    %65 = vector.load %arg11[%c0_35, %c0_36] : memref<31x256xf32, #tpu.memory_space<vmem>>, vector<31x256xf32>
    %cst_37 = arith.constant 0.000000e+00 : f32
    %66 = vector.broadcast %cst_37 : f32 to vector<32x256xf32>
    %67 = vector.extract_strided_slice %64 {offsets = [8, 0], sizes = [32, 256], strides = [1, 1]} : vector<64x256xf32> to vector<32x256xf32>
    %68 = vector.extract_strided_slice %65 {offsets = [7, 0], sizes = [1, 256], strides = [1, 1]} : vector<31x256xf32> to vector<1x256xf32>
    %69 = vector.broadcast %68 : vector<1x256xf32> to vector<32x256xf32>
    %70 = arith.mulf %67, %69 : vector<32x256xf32>
    %71 = arith.addf %66, %70 : vector<32x256xf32>
    %72 = vector.extract_strided_slice %64 {offsets = [16, 0], sizes = [32, 256], strides = [1, 1]} : vector<64x256xf32> to vector<32x256xf32>
    %73 = vector.extract_strided_slice %65 {offsets = [15, 0], sizes = [1, 256], strides = [1, 1]} : vector<31x256xf32> to vector<1x256xf32>
    %74 = vector.broadcast %73 : vector<1x256xf32> to vector<32x256xf32>
    %75 = arith.mulf %72, %74 : vector<32x256xf32>
    %76 = arith.addf %71, %75 : vector<32x256xf32>
    %77 = vector.extract_strided_slice %64 {offsets = [24, 0], sizes = [32, 256], strides = [1, 1]} : vector<64x256xf32> to vector<32x256xf32>
    %78 = vector.extract_strided_slice %65 {offsets = [23, 0], sizes = [1, 256], strides = [1, 1]} : vector<31x256xf32> to vector<1x256xf32>
    %79 = vector.broadcast %78 : vector<1x256xf32> to vector<32x256xf32>
    %80 = arith.mulf %77, %79 : vector<32x256xf32>
    %81 = arith.addf %76, %80 : vector<32x256xf32>
    %c63_i32 = arith.constant 63 : i32
    %82 = tpu.dynamic_rotate %64 by %c63_i32 dim 0 : vector<64x256xf32>, i32 -> vector<64x256xf32>
    %83 = vector.extract_strided_slice %82 {offsets = [0, 0], sizes = [32, 256], strides = [1, 1]} : vector<64x256xf32> to vector<32x256xf32>
    %84 = vector.extract_strided_slice %65 {offsets = [0, 0], sizes = [1, 256], strides = [1, 1]} : vector<31x256xf32> to vector<1x256xf32>
    %85 = vector.broadcast %84 : vector<1x256xf32> to vector<32x256xf32>
    %86 = arith.mulf %83, %85 : vector<32x256xf32>
    %87 = arith.addf %81, %86 : vector<32x256xf32>
    %88 = vector.extract_strided_slice %82 {offsets = [8, 0], sizes = [32, 256], strides = [1, 1]} : vector<64x256xf32> to vector<32x256xf32>
    %89 = vector.extract_strided_slice %65 {offsets = [8, 0], sizes = [1, 256], strides = [1, 1]} : vector<31x256xf32> to vector<1x256xf32>
    %90 = vector.broadcast %89 : vector<1x256xf32> to vector<32x256xf32>
    %91 = arith.mulf %88, %90 : vector<32x256xf32>
    %92 = arith.addf %87, %91 : vector<32x256xf32>
    %93 = vector.extract_strided_slice %82 {offsets = [16, 0], sizes = [32, 256], strides = [1, 1]} : vector<64x256xf32> to vector<32x256xf32>
    %94 = vector.extract_strided_slice %65 {offsets = [16, 0], sizes = [1, 256], strides = [1, 1]} : vector<31x256xf32> to vector<1x256xf32>
    %95 = vector.broadcast %94 : vector<1x256xf32> to vector<32x256xf32>
    %96 = arith.mulf %93, %95 : vector<32x256xf32>
    %97 = arith.addf %92, %96 : vector<32x256xf32>
    %98 = vector.extract_strided_slice %82 {offsets = [24, 0], sizes = [32, 256], strides = [1, 1]} : vector<64x256xf32> to vector<32x256xf32>
    %99 = vector.extract_strided_slice %65 {offsets = [24, 0], sizes = [1, 256], strides = [1, 1]} : vector<31x256xf32> to vector<1x256xf32>
    %100 = vector.broadcast %99 : vector<1x256xf32> to vector<32x256xf32>
    %101 = arith.mulf %98, %100 : vector<32x256xf32>
    %102 = arith.addf %97, %101 : vector<32x256xf32>
    %c62_i32 = arith.constant 62 : i32
    %103 = tpu.dynamic_rotate %64 by %c62_i32 dim 0 : vector<64x256xf32>, i32 -> vector<64x256xf32>
    %104 = vector.extract_strided_slice %103 {offsets = [0, 0], sizes = [32, 256], strides = [1, 1]} : vector<64x256xf32> to vector<32x256xf32>
    %105 = vector.extract_strided_slice %65 {offsets = [1, 0], sizes = [1, 256], strides = [1, 1]} : vector<31x256xf32> to vector<1x256xf32>
    %106 = vector.broadcast %105 : vector<1x256xf32> to vector<32x256xf32>
    %107 = arith.mulf %104, %106 : vector<32x256xf32>
    %108 = arith.addf %102, %107 : vector<32x256xf32>
    %109 = vector.extract_strided_slice %103 {offsets = [8, 0], sizes = [32, 256], strides = [1, 1]} : vector<64x256xf32> to vector<32x256xf32>
    %110 = vector.extract_strided_slice %65 {offsets = [9, 0], sizes = [1, 256], strides = [1, 1]} : vector<31x256xf32> to vector<1x256xf32>
    %111 = vector.broadcast %110 : vector<1x256xf32> to vector<32x256xf32>
    %112 = arith.mulf %109, %111 : vector<32x256xf32>
    %113 = arith.addf %108, %112 : vector<32x256xf32>
    %114 = vector.extract_strided_slice %103 {offsets = [16, 0], sizes = [32, 256], strides = [1, 1]} : vector<64x256xf32> to vector<32x256xf32>
    %115 = vector.extract_strided_slice %65 {offsets = [17, 0], sizes = [1, 256], strides = [1, 1]} : vector<31x256xf32> to vector<1x256xf32>
    %116 = vector.broadcast %115 : vector<1x256xf32> to vector<32x256xf32>
    %117 = arith.mulf %114, %116 : vector<32x256xf32>
    %118 = arith.addf %113, %117 : vector<32x256xf32>
    %119 = vector.extract_strided_slice %103 {offsets = [24, 0], sizes = [32, 256], strides = [1, 1]} : vector<64x256xf32> to vector<32x256xf32>
    %120 = vector.extract_strided_slice %65 {offsets = [25, 0], sizes = [1, 256], strides = [1, 1]} : vector<31x256xf32> to vector<1x256xf32>
    %121 = vector.broadcast %120 : vector<1x256xf32> to vector<32x256xf32>
    %122 = arith.mulf %119, %121 : vector<32x256xf32>
    %123 = arith.addf %118, %122 : vector<32x256xf32>
    %c61_i32 = arith.constant 61 : i32
    %124 = tpu.dynamic_rotate %64 by %c61_i32 dim 0 : vector<64x256xf32>, i32 -> vector<64x256xf32>
    %125 = vector.extract_strided_slice %124 {offsets = [0, 0], sizes = [32, 256], strides = [1, 1]} : vector<64x256xf32> to vector<32x256xf32>
    %126 = vector.extract_strided_slice %65 {offsets = [2, 0], sizes = [1, 256], strides = [1, 1]} : vector<31x256xf32> to vector<1x256xf32>
    %127 = vector.broadcast %126 : vector<1x256xf32> to vector<32x256xf32>
    %128 = arith.mulf %125, %127 : vector<32x256xf32>
    %129 = arith.addf %123, %128 : vector<32x256xf32>
    %130 = vector.extract_strided_slice %124 {offsets = [8, 0], sizes = [32, 256], strides = [1, 1]} : vector<64x256xf32> to vector<32x256xf32>
    %131 = vector.extract_strided_slice %65 {offsets = [10, 0], sizes = [1, 256], strides = [1, 1]} : vector<31x256xf32> to vector<1x256xf32>
    %132 = vector.broadcast %131 : vector<1x256xf32> to vector<32x256xf32>
    %133 = arith.mulf %130, %132 : vector<32x256xf32>
    %134 = arith.addf %129, %133 : vector<32x256xf32>
    %135 = vector.extract_strided_slice %124 {offsets = [16, 0], sizes = [32, 256], strides = [1, 1]} : vector<64x256xf32> to vector<32x256xf32>
    %136 = vector.extract_strided_slice %65 {offsets = [18, 0], sizes = [1, 256], strides = [1, 1]} : vector<31x256xf32> to vector<1x256xf32>
    %137 = vector.broadcast %136 : vector<1x256xf32> to vector<32x256xf32>
    %138 = arith.mulf %135, %137 : vector<32x256xf32>
    %139 = arith.addf %134, %138 : vector<32x256xf32>
    %140 = vector.extract_strided_slice %124 {offsets = [24, 0], sizes = [32, 256], strides = [1, 1]} : vector<64x256xf32> to vector<32x256xf32>
    %141 = vector.extract_strided_slice %65 {offsets = [26, 0], sizes = [1, 256], strides = [1, 1]} : vector<31x256xf32> to vector<1x256xf32>
    %142 = vector.broadcast %141 : vector<1x256xf32> to vector<32x256xf32>
    %143 = arith.mulf %140, %142 : vector<32x256xf32>
    %144 = arith.addf %139, %143 : vector<32x256xf32>
    %c60_i32 = arith.constant 60 : i32
    %145 = tpu.dynamic_rotate %64 by %c60_i32 dim 0 : vector<64x256xf32>, i32 -> vector<64x256xf32>
    %146 = vector.extract_strided_slice %145 {offsets = [0, 0], sizes = [32, 256], strides = [1, 1]} : vector<64x256xf32> to vector<32x256xf32>
    %147 = vector.extract_strided_slice %65 {offsets = [3, 0], sizes = [1, 256], strides = [1, 1]} : vector<31x256xf32> to vector<1x256xf32>
    %148 = vector.broadcast %147 : vector<1x256xf32> to vector<32x256xf32>
    %149 = arith.mulf %146, %148 : vector<32x256xf32>
    %150 = arith.addf %144, %149 : vector<32x256xf32>
    %151 = vector.extract_strided_slice %145 {offsets = [8, 0], sizes = [32, 256], strides = [1, 1]} : vector<64x256xf32> to vector<32x256xf32>
    %152 = vector.extract_strided_slice %65 {offsets = [11, 0], sizes = [1, 256], strides = [1, 1]} : vector<31x256xf32> to vector<1x256xf32>
    %153 = vector.broadcast %152 : vector<1x256xf32> to vector<32x256xf32>
    %154 = arith.mulf %151, %153 : vector<32x256xf32>
    %155 = arith.addf %150, %154 : vector<32x256xf32>
    %156 = vector.extract_strided_slice %145 {offsets = [16, 0], sizes = [32, 256], strides = [1, 1]} : vector<64x256xf32> to vector<32x256xf32>
    %157 = vector.extract_strided_slice %65 {offsets = [19, 0], sizes = [1, 256], strides = [1, 1]} : vector<31x256xf32> to vector<1x256xf32>
    %158 = vector.broadcast %157 : vector<1x256xf32> to vector<32x256xf32>
    %159 = arith.mulf %156, %158 : vector<32x256xf32>
    %160 = arith.addf %155, %159 : vector<32x256xf32>
    %161 = vector.extract_strided_slice %145 {offsets = [24, 0], sizes = [32, 256], strides = [1, 1]} : vector<64x256xf32> to vector<32x256xf32>
    %162 = vector.extract_strided_slice %65 {offsets = [27, 0], sizes = [1, 256], strides = [1, 1]} : vector<31x256xf32> to vector<1x256xf32>
    %163 = vector.broadcast %162 : vector<1x256xf32> to vector<32x256xf32>
    %164 = arith.mulf %161, %163 : vector<32x256xf32>
    %165 = arith.addf %160, %164 : vector<32x256xf32>
    %c59_i32 = arith.constant 59 : i32
    %166 = tpu.dynamic_rotate %64 by %c59_i32 dim 0 : vector<64x256xf32>, i32 -> vector<64x256xf32>
    %167 = vector.extract_strided_slice %166 {offsets = [0, 0], sizes = [32, 256], strides = [1, 1]} : vector<64x256xf32> to vector<32x256xf32>
    %168 = vector.extract_strided_slice %65 {offsets = [4, 0], sizes = [1, 256], strides = [1, 1]} : vector<31x256xf32> to vector<1x256xf32>
    %169 = vector.broadcast %168 : vector<1x256xf32> to vector<32x256xf32>
    %170 = arith.mulf %167, %169 : vector<32x256xf32>
    %171 = arith.addf %165, %170 : vector<32x256xf32>
    %172 = vector.extract_strided_slice %166 {offsets = [8, 0], sizes = [32, 256], strides = [1, 1]} : vector<64x256xf32> to vector<32x256xf32>
    %173 = vector.extract_strided_slice %65 {offsets = [12, 0], sizes = [1, 256], strides = [1, 1]} : vector<31x256xf32> to vector<1x256xf32>
    %174 = vector.broadcast %173 : vector<1x256xf32> to vector<32x256xf32>
    %175 = arith.mulf %172, %174 : vector<32x256xf32>
    %176 = arith.addf %171, %175 : vector<32x256xf32>
    %177 = vector.extract_strided_slice %166 {offsets = [16, 0], sizes = [32, 256], strides = [1, 1]} : vector<64x256xf32> to vector<32x256xf32>
    %178 = vector.extract_strided_slice %65 {offsets = [20, 0], sizes = [1, 256], strides = [1, 1]} : vector<31x256xf32> to vector<1x256xf32>
    %179 = vector.broadcast %178 : vector<1x256xf32> to vector<32x256xf32>
    %180 = arith.mulf %177, %179 : vector<32x256xf32>
    %181 = arith.addf %176, %180 : vector<32x256xf32>
    %182 = vector.extract_strided_slice %166 {offsets = [24, 0], sizes = [32, 256], strides = [1, 1]} : vector<64x256xf32> to vector<32x256xf32>
    %183 = vector.extract_strided_slice %65 {offsets = [28, 0], sizes = [1, 256], strides = [1, 1]} : vector<31x256xf32> to vector<1x256xf32>
    %184 = vector.broadcast %183 : vector<1x256xf32> to vector<32x256xf32>
    %185 = arith.mulf %182, %184 : vector<32x256xf32>
    %186 = arith.addf %181, %185 : vector<32x256xf32>
    %c58_i32 = arith.constant 58 : i32
    %187 = tpu.dynamic_rotate %64 by %c58_i32 dim 0 : vector<64x256xf32>, i32 -> vector<64x256xf32>
    %188 = vector.extract_strided_slice %187 {offsets = [0, 0], sizes = [32, 256], strides = [1, 1]} : vector<64x256xf32> to vector<32x256xf32>
    %189 = vector.extract_strided_slice %65 {offsets = [5, 0], sizes = [1, 256], strides = [1, 1]} : vector<31x256xf32> to vector<1x256xf32>
    %190 = vector.broadcast %189 : vector<1x256xf32> to vector<32x256xf32>
    %191 = arith.mulf %188, %190 : vector<32x256xf32>
    %192 = arith.addf %186, %191 : vector<32x256xf32>
    %193 = vector.extract_strided_slice %187 {offsets = [8, 0], sizes = [32, 256], strides = [1, 1]} : vector<64x256xf32> to vector<32x256xf32>
    %194 = vector.extract_strided_slice %65 {offsets = [13, 0], sizes = [1, 256], strides = [1, 1]} : vector<31x256xf32> to vector<1x256xf32>
    %195 = vector.broadcast %194 : vector<1x256xf32> to vector<32x256xf32>
    %196 = arith.mulf %193, %195 : vector<32x256xf32>
    %197 = arith.addf %192, %196 : vector<32x256xf32>
    %198 = vector.extract_strided_slice %187 {offsets = [16, 0], sizes = [32, 256], strides = [1, 1]} : vector<64x256xf32> to vector<32x256xf32>
    %199 = vector.extract_strided_slice %65 {offsets = [21, 0], sizes = [1, 256], strides = [1, 1]} : vector<31x256xf32> to vector<1x256xf32>
    %200 = vector.broadcast %199 : vector<1x256xf32> to vector<32x256xf32>
    %201 = arith.mulf %198, %200 : vector<32x256xf32>
    %202 = arith.addf %197, %201 : vector<32x256xf32>
    %203 = vector.extract_strided_slice %187 {offsets = [24, 0], sizes = [32, 256], strides = [1, 1]} : vector<64x256xf32> to vector<32x256xf32>
    %204 = vector.extract_strided_slice %65 {offsets = [29, 0], sizes = [1, 256], strides = [1, 1]} : vector<31x256xf32> to vector<1x256xf32>
    %205 = vector.broadcast %204 : vector<1x256xf32> to vector<32x256xf32>
    %206 = arith.mulf %203, %205 : vector<32x256xf32>
    %207 = arith.addf %202, %206 : vector<32x256xf32>
    %c57_i32 = arith.constant 57 : i32
    %208 = tpu.dynamic_rotate %64 by %c57_i32 dim 0 : vector<64x256xf32>, i32 -> vector<64x256xf32>
    %209 = vector.extract_strided_slice %208 {offsets = [0, 0], sizes = [32, 256], strides = [1, 1]} : vector<64x256xf32> to vector<32x256xf32>
    %210 = vector.extract_strided_slice %65 {offsets = [6, 0], sizes = [1, 256], strides = [1, 1]} : vector<31x256xf32> to vector<1x256xf32>
    %211 = vector.broadcast %210 : vector<1x256xf32> to vector<32x256xf32>
    %212 = arith.mulf %209, %211 : vector<32x256xf32>
    %213 = arith.addf %207, %212 : vector<32x256xf32>
    %214 = vector.extract_strided_slice %208 {offsets = [8, 0], sizes = [32, 256], strides = [1, 1]} : vector<64x256xf32> to vector<32x256xf32>
    %215 = vector.extract_strided_slice %65 {offsets = [14, 0], sizes = [1, 256], strides = [1, 1]} : vector<31x256xf32> to vector<1x256xf32>
    %216 = vector.broadcast %215 : vector<1x256xf32> to vector<32x256xf32>
    %217 = arith.mulf %214, %216 : vector<32x256xf32>
    %218 = arith.addf %213, %217 : vector<32x256xf32>
    %219 = vector.extract_strided_slice %208 {offsets = [16, 0], sizes = [32, 256], strides = [1, 1]} : vector<64x256xf32> to vector<32x256xf32>
    %220 = vector.extract_strided_slice %65 {offsets = [22, 0], sizes = [1, 256], strides = [1, 1]} : vector<31x256xf32> to vector<1x256xf32>
    %221 = vector.broadcast %220 : vector<1x256xf32> to vector<32x256xf32>
    %222 = arith.mulf %219, %221 : vector<32x256xf32>
    %223 = arith.addf %218, %222 : vector<32x256xf32>
    %224 = vector.extract_strided_slice %208 {offsets = [24, 0], sizes = [32, 256], strides = [1, 1]} : vector<64x256xf32> to vector<32x256xf32>
    %225 = vector.extract_strided_slice %65 {offsets = [30, 0], sizes = [1, 256], strides = [1, 1]} : vector<31x256xf32> to vector<1x256xf32>
    %226 = vector.broadcast %225 : vector<1x256xf32> to vector<32x256xf32>
    %227 = arith.mulf %224, %226 : vector<32x256xf32>
    %228 = arith.addf %223, %227 : vector<32x256xf32>
    %c0_38 = arith.constant 0 : index
    %c0_39 = arith.constant 0 : index
    %229 = vector.load %arg12[%c0_38, %c0_39] : memref<1x256xf32, #tpu.memory_space<vmem>>, vector<1x256xf32>
    %230 = vector.broadcast %229 : vector<1x256xf32> to vector<32x256xf32>
    %231 = arith.addf %228, %230 : vector<32x256xf32>
    %cst_40 = arith.constant 5.000000e-01 : f32
    %232 = vector.broadcast %cst_40 : f32 to vector<32x256xf32>
    %233 = arith.mulf %232, %231 : vector<32x256xf32>
    %234 = math.tanh %233 : vector<32x256xf32>
    %cst_41 = arith.constant 5.000000e-01 : f32
    %235 = vector.broadcast %cst_41 : f32 to vector<32x256xf32>
    %236 = arith.mulf %235, %234 : vector<32x256xf32>
    %cst_42 = arith.constant 5.000000e-01 : f32
    %237 = vector.broadcast %cst_42 : f32 to vector<32x256xf32>
    %238 = arith.addf %236, %237 : vector<32x256xf32>
    %239 = arith.mulf %231, %238 : vector<32x256xf32>
    %240 = arith.truncf %239 : vector<32x256xf32> to vector<32x256xbf16>
    %c0_43 = arith.constant 0 : index
    %c0_44 = arith.constant 0 : index
    %241 = vector.load %arg13[%c0_43, %c0_44] : memref<256x128xbf16, #tpu.memory_space<vmem>>, vector<256x128xbf16>
    %cst_45 = arith.constant dense<0.000000e+00> : vector<32x128xf32>
    %242 = tpu.matmul %240, %241, %cst_45 {dimension_numbers = #tpu.dot_dimension_numbers<[1], [0], [0], [1], [0, 0, 1, 1], [], []>} : vector<32x256xbf16>, vector<256x128xbf16>, vector<32x128xf32> -> vector<32x128xf32>
    %c0_46 = arith.constant 0 : index
    %c0_47 = arith.constant 0 : index
    %243 = vector.load %arg14[%c0_46, %c0_47] : memref<1x128xf32, #tpu.memory_space<vmem>>, vector<1x128xf32>
    %244 = vector.broadcast %243 : vector<1x128xf32> to vector<32x128xf32>
    %245 = arith.addf %242, %244 : vector<32x128xf32>
    %c0_48 = arith.constant 0 : index
    %c0_49 = arith.constant 0 : index
    %c0_50 = arith.constant 0 : index
    %246 = vector.load %arg3[%c0_48, %c0_49, %c0_50] : memref<1x32x128xf32, #tpu.memory_space<vmem>>, vector<1x32x128xf32>
    %247 = vector.shape_cast %246 : vector<1x32x128xf32> to vector<32x128xf32>
    %248 = arith.addf %247, %245 : vector<32x128xf32>
    %c0_51 = arith.constant 0 : index
    %c0_52 = arith.constant 0 : index
    %c0_53 = arith.constant 0 : index
    %249 = vector.load %arg15[%c0_51, %c0_52, %c0_53] : memref<1x32x128xf32, #tpu.memory_space<vmem>>, vector<1x32x128xf32>
    %250 = vector.shape_cast %249 : vector<1x32x128xf32> to vector<32x128xf32>
    %251 = vector.shape_cast %248 : vector<32x128xf32> to vector<1x32x128xf32>
    tpu.vector_store %arg15[%c0_51, %c0_52, %c0_53], %251 {strides = array<i32>} : memref<1x32x128xf32, #tpu.memory_space<vmem>>, vector<1x32x128xf32>,
    return
  }
  func.func @transform_0(%arg0: i32, %arg1: i32) -> (i32, i32, i32) {
    %c2_i32 = arith.constant 2 : i32
    %0 = arith.muli %arg1, %c2_i32 : i32
    %c0_i32 = arith.constant 0 : i32
    %c0_i32_0 = arith.constant 0 : i32
    return %arg0, %0, %c0_i32 : i32, i32, i32
  }
  func.func @transform_1(%arg0: i32, %arg1: i32) -> (i32, i32, i32) {
    %c0_i32 = arith.constant 0 : i32
    %c0_i32_0 = arith.constant 0 : i32
    return %arg0, %arg1, %c0_i32 : i32, i32, i32
  }
  func.func @transform_2(%arg0: i32, %arg1: i32) -> (i32, i32, i32) {
    %c1_i32 = arith.constant 1 : i32
    %0 = arith.addi %arg1, %c1_i32 : i32
    %c2_i32 = arith.constant 2 : i32
    %1 = arith.muli %0, %c2_i32 : i32
    %c1_i32_0 = arith.constant 1 : i32
    %2 = arith.addi %1, %c1_i32_0 : i32
    %c0_i32 = arith.constant 0 : i32
    %c0_i32_1 = arith.constant 0 : i32
    return %arg0, %2, %c0_i32 : i32, i32, i32
  }
  func.func @transform_3(%arg0: i32, %arg1: i32) -> (i32, i32) {
    %c0_i32 = arith.constant 0 : i32
    %c0_i32_0 = arith.constant 0 : i32
    %c0_i32_1 = arith.constant 0 : i32
    return %c0_i32, %c0_i32_0 : i32, i32
  }
  func.func @transform_4(%arg0: i32, %arg1: i32) -> (i32, i32) {
    %c0_i32 = arith.constant 0 : i32
    %c0_i32_0 = arith.constant 0 : i32
    %c0_i32_1 = arith.constant 0 : i32
    return %c0_i32, %c0_i32_0 : i32, i32
  }
  func.func @transform_5(%arg0: i32, %arg1: i32) -> (i32, i32) {
    %c0_i32 = arith.constant 0 : i32
    %c0_i32_0 = arith.constant 0 : i32
    %c0_i32_1 = arith.constant 0 : i32
    return %c0_i32, %c0_i32_0 : i32, i32
  }
  func.func @transform_6(%arg0: i32, %arg1: i32) -> (i32, i32) {
    %c0_i32 = arith.constant 0 : i32
    %c0_i32_0 = arith.constant 0 : i32
    %c0_i32_1 = arith.constant 0 : i32
    return %c0_i32, %c0_i32_0 : i32, i32
  }
  func.func @transform_7(%arg0: i32, %arg1: i32) -> (i32, i32) {
    %c0_i32 = arith.constant 0 : i32
    %c0_i32_0 = arith.constant 0 : i32
    %c0_i32_1 = arith.constant 0 : i32
    return %c0_i32, %c0_i32_0 : i32, i32
  }
  func.func @transform_8(%arg0: i32, %arg1: i32) -> (i32, i32) {
    %c0_i32 = arith.constant 0 : i32
    %c0_i32_0 = arith.constant 0 : i32
    %c0_i32_1 = arith.constant 0 : i32
    return %c0_i32, %c0_i32_0 : i32, i32
  }
  func.func @transform_9(%arg0: i32, %arg1: i32) -> (i32, i32) {
    %c0_i32 = arith.constant 0 : i32
    %c0_i32_0 = arith.constant 0 : i32
    %c0_i32_1 = arith.constant 0 : i32
    return %c0_i32, %c0_i32_0 : i32, i32
  }
  func.func @transform_10(%arg0: i32, %arg1: i32) -> (i32, i32) {
    %c0_i32 = arith.constant 0 : i32
    %c0_i32_0 = arith.constant 0 : i32
    %c0_i32_1 = arith.constant 0 : i32
    return %c0_i32, %c0_i32_0 : i32, i32
  }
  func.func @transform_11(%arg0: i32, %arg1: i32) -> (i32, i32) {
    %c0_i32 = arith.constant 0 : i32
    %c0_i32_0 = arith.constant 0 : i32
    %c0_i32_1 = arith.constant 0 : i32
    return %c0_i32, %c0_i32_0 : i32, i32
  }
  func.func @transform_12(%arg0: i32, %arg1: i32) -> (i32, i32) {
    %c0_i32 = arith.constant 0 : i32
    %c0_i32_0 = arith.constant 0 : i32
    %c0_i32_1 = arith.constant 0 : i32
    return %c0_i32, %c0_i32_0 : i32, i32
  }
  func.func @transform_13(%arg0: i32, %arg1: i32) -> (i32, i32, i32) {
    %c0_i32 = arith.constant 0 : i32
    %c0_i32_0 = arith.constant 0 : i32
    return %arg0, %arg1, %c0_i32 : i32, i32, i32
  }
}

</mosaic_0001>

<llo_original>
// kernel: tpu_custom_call.1
$region0: #{tpu_custom_call.1}
  #allocation0 [shape = 'u32[]', space=smem, size = 0x4, offset = 0x4, fixed_abs, tag = 'smem constant byte address 0x4 - core index']
  #allocation1 [shape = 'u32[144,128]{1,0:T(1,128)}', space=vmem, size = 0x12000, scoped, tag = 'internal scratch']
  #allocation2 [shape = 'f32[64,128]{1,0:T(8,128)}', space=vmem, size = 0x8000, scoped, tag = 'scratch operand']
  %s0 = inlined_call_operand.hbm [shape: f32[2,96,128], index: 0, kind: input, shape index: {}]
  %s1 = inlined_call_operand.hbm [shape: f32[2,64,128], index: 1, kind: input, shape index: {}]
  %s2 = inlined_call_operand.hbm [shape: f32[2,96,128], index: 2, kind: input, shape index: {}]
  %s3 = inlined_call_operand.hbm [shape: f32[1,128], index: 3, kind: input, shape index: {}]
  %s4 = inlined_call_operand.hbm [shape: f32[1,128], index: 4, kind: input, shape index: {}]
  %s5 = inlined_call_operand.hbm [shape: bf16[128,256], index: 5, kind: input, shape index: {}]
  %s6 = inlined_call_operand.hbm [shape: f32[1,256], index: 6, kind: input, shape index: {}]
  %s7 = inlined_call_operand.hbm [shape: bf16[128,256], index: 7, kind: input, shape index: {}]
  %s8 = inlined_call_operand.hbm [shape: f32[1,256], index: 8, kind: input, shape index: {}]
  %s9 = inlined_call_operand.hbm [shape: f32[31,256], index: 9, kind: input, shape index: {}]
  %s10 = inlined_call_operand.hbm [shape: f32[1,256], index: 10, kind: input, shape index: {}]
  %s11 = inlined_call_operand.hbm [shape: bf16[256,128], index: 11, kind: input, shape index: {}]
  %s12 = inlined_call_operand.hbm [shape: f32[1,128], index: 12, kind: input, shape index: {}]
  %s13 = inlined_call_operand.hbm [shape: f32[2,64,128], index: 13, kind: output, shape index: {}]
  %s14 = sld [smem:[#allocation0]]
  $region137: #{tpu_custom_call.1} parent=0
    _
  %s16 = ssub.s32 1, %s14
  %s17 = scalar_select 0, %s16, %s14
  $region1: #{tpu_custom_call.1} parent=0
    #allocation3 [shape = 'u8[16384]{0}', space=vmem, size = 0x4000, scoped, tag = 'input window, operand 0']
    #allocation4 [shape = 's32[2]{0}', space=sflag, size = 0x8, scoped, tag = 'scoped memory for tpu_custom_call.1']
    #allocation5 [shape = 's32[2]{0}', space=sflag, size = 0x8, scoped, tag = 'scoped memory for tpu_custom_call.1']
    #allocation6 [shape = 'u8[32768]{0}', space=vmem, size = 0x8000, scoped, tag = 'input window, operand 1']
    #allocation7 [shape = 's32[2]{0}', space=sflag, size = 0x8, scoped, tag = 'scoped memory for tpu_custom_call.1']
    #allocation8 [shape = 'u8[16384]{0}', space=vmem, size = 0x4000, scoped, tag = 'input window, operand 2']
    #allocation9 [shape = 'u8[512]{0}', space=vmem, size = 0x400, scoped, tag = 'input window, operand 3, single buffered']
    #allocation10 [shape = 's32[1]{0}', space=sflag, size = 0x4, scoped, tag = 'scoped memory for tpu_custom_call.1']
    #allocation11 [shape = 'u8[512]{0}', space=vmem, size = 0x400, scoped, tag = 'input window, operand 4, single buffered']
    #allocation12 [shape = 'u8[65536]{0}', space=vmem, size = 0x10000, scoped, tag = 'input window, operand 5, single buffered']
    #allocation13 [shape = 's32[1]{0}', space=sflag, size = 0x4, scoped, tag = 'scoped memory for tpu_custom_call.1']
    #allocation14 [shape = 'u8[1024]{0}', space=vmem, size = 0x400, scoped, tag = 'input window, operand 6, single buffered']
    #allocation15 [shape = 'u8[65536]{0}', space=vmem, size = 0x10000, scoped, tag = 'input window, operand 7, single buffered']
    #allocation16 [shape = 's32[1]{0}', space=sflag, size = 0x4, scoped, tag = 'scoped memory for tpu_custom_call.1']
    #allocation17 [shape = 'u8[1024]{0}', space=vmem, size = 0x400, scoped, tag = 'input window, operand 8, single buffered']
    #allocation18 [shape = 'u8[32768]{0}', space=vmem, size = 0x8000, scoped, tag = 'input window, operand 9, single buffered']
    #allocation19 [shape = 's32[1]{0}', space=sflag, size = 0x4, scoped, tag = 'scoped memory for tpu_custom_call.1']
    #allocation20 [shape = 'u8[1024]{0}', space=vmem, size = 0x400, scoped, tag = 'input window, operand 10, single buffered']
    #allocation21 [shape = 'u8[65536]{0}', space=vmem, size = 0x10000, scoped, tag = 'input window, operand 11, single buffered']
    #allocation22 [shape = 's32[1]{0}', space=sflag, size = 0x4, scoped, tag = 'scoped memory for tpu_custom_call.1']
    #allocation23 [shape = 'u8[512]{0}', space=vmem, size = 0x400, scoped, tag = 'input window, operand 12, single buffered']
    #allocation24 [shape = 'u8[32768]{0}', space=vmem, size = 0x8000, scoped, tag = 'output window, operand 0']
    %18 = vsyncpa [#allocation4], 0
    %s19 = scalar_lea.sflag [#allocation4], 1
    %20 = vsyncpa %s19, 0
    %21 = vsyncpa [#allocation7], 0
    %s22 = scalar_lea.sflag [#allocation7], 1
    %23 = vsyncpa %s22, 0
    %24 = vsyncpa [#allocation10], 0
    %25 = vsyncpa [#allocation13], 0
    %26 = vsyncpa [#allocation16], 0
    %27 = vsyncpa [#allocation19], 0
    %28 = vsyncpa [#allocation22], 0
    %29 = vsyncpa [#allocation5], 0
    %s30 = scalar_lea.sflag [#allocation5], 1
    %31 = vsyncpa %s30, 0
    loop: start=0, step=1, limit=6
    $region2: #{tpu_custom_call.1} parent=1 // loop_pre_header
      _
    $region3: #{tpu_custom_call.1} parent=1 // loop_header
      %s33 = sphi 0, %s37
      %p34 = scmp.ge.s32.totalorder %s33, 6
      %s40 = sphi 0, %s52
      %s41 = sphi 0, %s48
      %s42 = sphi 0, %s40
      %s43 = sphi 0, %s41
      %s44 = sphi 0, %s42
      %s45 = sphi 0, %s43
      %s59 = sphi 0, %s61
      %s62 = sphi 0, %s59
      %s63 = sphi 0, %s62
      %s79 = sphi 0, %s63
      %s87 = sphi 0, %s89
      %s90 = sphi 0, %s87
      %s91 = sphi 0, %s90
      %s107 = sphi 0, %s91
      %s121 = sphi 0, %s123
      %s124 = sphi 0, %s121
      %s125 = sphi 0, %s124
      %s141 = sphi 0, %s125
      %s145 = sphi 0, %s145
      %s147 = sphi 0, %s145
      %s148 = sphi 0, %s147
      %s162 = sphi 0, %s148
      %s166 = sphi 0, %s166
      %s168 = sphi 0, %s166
      %s169 = sphi 0, %s168
      %s183 = sphi 0, %s169
      %s187 = sphi 0, %s187
      %s189 = sphi 0, %s187
      %s190 = sphi 0, %s189
      %s204 = sphi 0, %s190
      %s208 = sphi 0, %s208
      %s210 = sphi 0, %s208
      %s211 = sphi 0, %s210
      %s225 = sphi 0, %s211
      %s229 = sphi 0, %s229
      %s231 = sphi 0, %s229
      %s232 = sphi 0, %s231
      %s246 = sphi 0, %s232
      %s250 = sphi 0, %s250
      %s252 = sphi 0, %s250
      %s253 = sphi 0, %s252
      %s267 = sphi 0, %s253
      %s271 = sphi 0, %s271
      %s273 = sphi 0, %s271
      %s274 = sphi 0, %s273
      %s288 = sphi 0, %s274
      %s292 = sphi 0, %s292
      %s294 = sphi 0, %s292
      %s295 = sphi 0, %s294
      %s309 = sphi 0, %s295
      %s313 = sphi 0, %s313
      %s315 = sphi 0, %s313
      %s316 = sphi 0, %s315
      %s330 = sphi 0, %s316
      %s334 = sphi 0, %s334
      %s336 = sphi 0, %s334
      %s337 = sphi 0, %s336
      %s351 = sphi 0, %s337
      %s359 = sphi 0, %s361
      %s362 = sphi 0, %s359
      %s363 = sphi 0, %s362
      %s379 = sphi 0, %s363
    $region4: #{tpu_custom_call.1} parent=1 // loop_header_branch
      %36 = sbr.rel (%p34) target = $region8
    $region5: #{tpu_custom_call.1} parent=1 // loop_body
      %s38 = ssub.s32 %s33, 1
      %s39 = ssub.s32 %s33, 2
      %s46 = sadd.s32 1, %s41
      %p47 = scmp.ge.s32.totalorder %s46, 2
      %s48 = scalar_select %p47, 0, %s46
      %s49 = sadd.s32 1, %s40
      %s50 = scalar_select %p47, %s49, %s40
      %p51 = scmp.ge.s32.totalorder %s50, 2
      %s52 = scalar_select %p51, 0, %s50
      %s53 = smul.u32 %s41, 2
      %s54 = smul.u32 %s48, 2
      %s55 = ssub.s32 %s40, %s52
      %s56 = ssub.s32 %s53, %s54
      %s57 = sor.u32 %s55, %s56
      %p58 = scmp.eq.s32.totalorder %s57, 0
      %s60 = sadd.s32 %s59, 1
      %s61 = scalar_select %p58, %s59, %s60
      %p64 = pneg %p58
      %p65 = scmp.eq.s32.totalorder %s33, 3
      %p66 = por %p64, %p65
      %p67 = scmp.ne.s32.totalorder %s59, %s62
      %p68 = scmp.eq.s32.totalorder %s33, 0
      %p69 = por %p67, %p68
      %p70 = scmp.ne.s32.totalorder %s59, %s62
      %p71 = scmp.eq.s32.totalorder %s38, 3
      %p72 = por %p70, %p71
      %p73 = scmp.ne.s32.totalorder %s62, %s63
      %p74 = scmp.eq.s32.totalorder %s38, 0
      %p75 = por %p73, %p74
      %p76 = scmp.ne.s32.totalorder %s62, %s63
      %p77 = scmp.eq.s32.totalorder %s39, 3
      %p78 = por %p76, %p77
      %p80 = scmp.ne.s32.totalorder %s63, %s79
      %p81 = scmp.eq.s32.totalorder %s39, 0
      %p82 = por %p80, %p81
      %s83 = ssub.s32 %s40, %s52
      %s84 = ssub.s32 %s41, %s48
      %s85 = sor.u32 %s83, %s84
      %p86 = scmp.eq.s32.totalorder %s85, 0
      %s88 = sadd.s32 %s87, 1
      %s89 = scalar_select %p86, %s87, %s88
      %p92 = pneg %p86
      %p93 = scmp.eq.s32.totalorder %s33, 3
      %p94 = por %p92, %p93
      %p95 = scmp.ne.s32.totalorder %s87, %s90
      %p96 = scmp.eq.s32.totalorder %s33, 0
      %p97 = por %p95, %p96
      %p98 = scmp.ne.s32.totalorder %s87, %s90
      %p99 = scmp.eq.s32.totalorder %s38, 3
      %p100 = por %p98, %p99
      %p101 = scmp.ne.s32.totalorder %s90, %s91
      %p102 = scmp.eq.s32.totalorder %s38, 0
      %p103 = por %p101, %p102
      %p104 = scmp.ne.s32.totalorder %s90, %s91
      %p105 = scmp.eq.s32.totalorder %s39, 3
      %p106 = por %p104, %p105
      %p108 = scmp.ne.s32.totalorder %s91, %s107
      %p109 = scmp.eq.s32.totalorder %s39, 0
      %p110 = por %p108, %p109
      %s111 = sadd.s32 %s41, 1
      %s112 = smul.u32 %s111, 2
      %s113 = sadd.s32 %s112, 1
      %s114 = sadd.s32 %s48, 1
      %s115 = smul.u32 %s114, 2
      %s116 = sadd.s32 %s115, 1
      %s117 = ssub.s32 %s40, %s52
      %s118 = ssub.s32 %s113, %s116
      %s119 = sor.u32 %s117, %s118
      %p120 = scmp.eq.s32.totalorder %s119, 0
      %s122 = sadd.s32 %s121, 1
      %s123 = scalar_select %p120, %s121, %s122
      %p126 = pneg %p120
      %p127 = scmp.eq.s32.totalorder %s33, 3
      %p128 = por %p126, %p127
      %p129 = scmp.ne.s32.totalorder %s121, %s124
      %p130 = scmp.eq.s32.totalorder %s33, 0
      %p131 = por %p129, %p130
      %p132 = scmp.ne.s32.totalorder %s121, %s124
      %p133 = scmp.eq.s32.totalorder %s38, 3
      %p134 = por %p132, %p133
      %p135 = scmp.ne.s32.totalorder %s124, %s125
      %p136 = scmp.eq.s32.totalorder %s38, 0
      %p137 = por %p135, %p136
      %p138 = scmp.ne.s32.totalorder %s124, %s125
      %p139 = scmp.eq.s32.totalorder %s39, 3
      %p140 = por %p138, %p139
      %p142 = scmp.ne.s32.totalorder %s125, %s141
      %p143 = scmp.eq.s32.totalorder %s39, 0
      %p144 = por %p142, %p143
      %s146 = sadd.s32 %s145, 1
      %p149 = scmp.eq.s32.totalorder %s33, 3
      %p150 = scmp.ne.s32.totalorder %s145, %s147
      %p151 = scmp.eq.s32.totalorder %s33, 0
      %p152 = por %p150, %p151
      %p153 = scmp.ne.s32.totalorder %s145, %s147
      %p154 = scmp.eq.s32.totalorder %s38, 3
      %p155 = por %p153, %p154
      %p156 = scmp.ne.s32.totalorder %s147, %s148
      %p157 = scmp.eq.s32.totalorder %s38, 0
      %p158 = por %p156, %p157
      %p159 = scmp.ne.s32.totalorder %s147, %s148
      %p160 = scmp.eq.s32.totalorder %s39, 3
      %p161 = por %p159, %p160
      %p163 = scmp.ne.s32.totalorder %s148, %s162
      %p164 = scmp.eq.s32.totalorder %s39, 0
      %p165 = por %p163, %p164
      %s167 = sadd.s32 %s166, 1
      %p170 = scmp.eq.s32.totalorder %s33, 3
      %p171 = scmp.ne.s32.totalorder %s166, %s168
      %p172 = scmp.eq.s32.totalorder %s33, 0
      %p173 = por %p171, %p172
      %p174 = scmp.ne.s32.totalorder %s166, %s168
      %p175 = scmp.eq.s32.totalorder %s38, 3
      %p176 = por %p174, %p175
      %p177 = scmp.ne.s32.totalorder %s168, %s169
      %p178 = scmp.eq.s32.totalorder %s38, 0
      %p179 = por %p177, %p178
      %p180 = scmp.ne.s32.totalorder %s168, %s169
      %p181 = scmp.eq.s32.totalorder %s39, 3
      %p182 = por %p180, %p181
      %p184 = scmp.ne.s32.totalorder %s169, %s183
      %p185 = scmp.eq.s32.totalorder %s39, 0
      %p186 = por %p184, %p185
      %s188 = sadd.s32 %s187, 1
      %p191 = scmp.eq.s32.totalorder %s33, 3
      %p192 = scmp.ne.s32.totalorder %s187, %s189
      %p193 = scmp.eq.s32.totalorder %s33, 0
      %p194 = por %p192, %p193
      %p195 = scmp.ne.s32.totalorder %s187, %s189
      %p196 = scmp.eq.s32.totalorder %s38, 3
      %p197 = por %p195, %p196
      %p198 = scmp.ne.s32.totalorder %s189, %s190
      %p199 = scmp.eq.s32.totalorder %s38, 0
      %p200 = por %p198, %p199
      %p201 = scmp.ne.s32.totalorder %s189, %s190
      %p202 = scmp.eq.s32.totalorder %s39, 3
      %p203 = por %p201, %p202
      %p205 = scmp.ne.s32.totalorder %s190, %s204
      %p206 = scmp.eq.s32.totalorder %s39, 0
      %p207 = por %p205, %p206
      %s209 = sadd.s32 %s208, 1
      %p212 = scmp.eq.s32.totalorder %s33, 3
      %p213 = scmp.ne.s32.totalorder %s208, %s210
      %p214 = scmp.eq.s32.totalorder %s33, 0
      %p215 = por %p213, %p214
      %p216 = scmp.ne.s32.totalorder %s208, %s210
      %p217 = scmp.eq.s32.totalorder %s38, 3
      %p218 = por %p216, %p217
      %p219 = scmp.ne.s32.totalorder %s210, %s211
      %p220 = scmp.eq.s32.totalorder %s38, 0
      %p221 = por %p219, %p220
      %p222 = scmp.ne.s32.totalorder %s210, %s211
      %p223 = scmp.eq.s32.totalorder %s39, 3
      %p224 = por %p222, %p223
      %p226 = scmp.ne.s32.totalorder %s211, %s225
      %p227 = scmp.eq.s32.totalorder %s39, 0
      %p228 = por %p226, %p227
      %s230 = sadd.s32 %s229, 1
      %p233 = scmp.eq.s32.totalorder %s33, 3
      %p234 = scmp.ne.s32.totalorder %s229, %s231
      %p235 = scmp.eq.s32.totalorder %s33, 0
      %p236 = por %p234, %p235
      %p237 = scmp.ne.s32.totalorder %s229, %s231
      %p238 = scmp.eq.s32.totalorder %s38, 3
      %p239 = por %p237, %p238
      %p240 = scmp.ne.s32.totalorder %s231, %s232
      %p241 = scmp.eq.s32.totalorder %s38, 0
      %p242 = por %p240, %p241
      %p243 = scmp.ne.s32.totalorder %s231, %s232
      %p244 = scmp.eq.s32.totalorder %s39, 3
      %p245 = por %p243, %p244
      %p247 = scmp.ne.s32.totalorder %s232, %s246
      %p248 = scmp.eq.s32.totalorder %s39, 0
      %p249 = por %p247, %p248
      %s251 = sadd.s32 %s250, 1
      %p254 = scmp.eq.s32.totalorder %s33, 3
      %p255 = scmp.ne.s32.totalorder %s250, %s252
      %p256 = scmp.eq.s32.totalorder %s33, 0
      %p257 = por %p255, %p256
      %p258 = scmp.ne.s32.totalorder %s250, %s252
      %p259 = scmp.eq.s32.totalorder %s38, 3
      %p260 = por %p258, %p259
      %p261 = scmp.ne.s32.totalorder %s252, %s253
      %p262 = scmp.eq.s32.totalorder %s38, 0
      %p263 = por %p261, %p262
      %p264 = scmp.ne.s32.totalorder %s252, %s253
      %p265 = scmp.eq.s32.totalorder %s39, 3
      %p266 = por %p264, %p265
      %p268 = scmp.ne.s32.totalorder %s253, %s267
      %p269 = scmp.eq.s32.totalorder %s39, 0
      %p270 = por %p268, %p269
      %s272 = sadd.s32 %s271, 1
      %p275 = scmp.eq.s32.totalorder %s33, 3
      %p276 = scmp.ne.s32.totalorder %s271, %s273
      %p277 = scmp.eq.s32.totalorder %s33, 0
      %p278 = por %p276, %p277
      %p279 = scmp.ne.s32.totalorder %s271, %s273
      %p280 = scmp.eq.s32.totalorder %s38, 3
      %p281 = por %p279, %p280
      %p282 = scmp.ne.s32.totalorder %s273, %s274
      %p283 = scmp.eq.s32.totalorder %s38, 0
      %p284 = por %p282, %p283
      %p285 = scmp.ne.s32.totalorder %s273, %s274
      %p286 = scmp.eq.s32.totalorder %s39, 3
      %p287 = por %p285, %p286
      %p289 = scmp.ne.s32.totalorder %s274, %s288
      %p290 = scmp.eq.s32.totalorder %s39, 0
      %p291 = por %p289, %p290
      %s293 = sadd.s32 %s292, 1
      %p296 = scmp.eq.s32.totalorder %s33, 3
      %p297 = scmp.ne.s32.totalorder %s292, %s294
      %p298 = scmp.eq.s32.totalorder %s33, 0
      %p299 = por %p297, %p298
      %p300 = scmp.ne.s32.totalorder %s292, %s294
      %p301 = scmp.eq.s32.totalorder %s38, 3
      %p302 = por %p300, %p301
      %p303 = scmp.ne.s32.totalorder %s294, %s295
      %p304 = scmp.eq.s32.totalorder %s38, 0
      %p305 = por %p303, %p304
      %p306 = scmp.ne.s32.totalorder %s294, %s295
      %p307 = scmp.eq.s32.totalorder %s39, 3
      %p308 = por %p306, %p307
      %p310 = scmp.ne.s32.totalorder %s295, %s309
      %p311 = scmp.eq.s32.totalorder %s39, 0
      %p312 = por %p310, %p311
      %s314 = sadd.s32 %s313, 1
      %p317 = scmp.eq.s32.totalorder %s33, 3
      %p318 = scmp.ne.s32.totalorder %s313, %s315
      %p319 = scmp.eq.s32.totalorder %s33, 0
      %p320 = por %p318, %p319
      %p321 = scmp.ne.s32.totalorder %s313, %s315
      %p322 = scmp.eq.s32.totalorder %s38, 3
      %p323 = por %p321, %p322
      %p324 = scmp.ne.s32.totalorder %s315, %s316
      %p325 = scmp.eq.s32.totalorder %s38, 0
      %p326 = por %p324, %p325
      %p327 = scmp.ne.s32.totalorder %s315, %s316
      %p328 = scmp.eq.s32.totalorder %s39, 3
      %p329 = por %p327, %p328
      %p331 = scmp.ne.s32.totalorder %s316, %s330
      %p332 = scmp.eq.s32.totalorder %s39, 0
      %p333 = por %p331, %p332
      %s335 = sadd.s32 %s334, 1
      %p338 = scmp.eq.s32.totalorder %s33, 3
      %p339 = scmp.ne.s32.totalorder %s334, %s336
      %p340 = scmp.eq.s32.totalorder %s33, 0
      %p341 = por %p339, %p340
      %p342 = scmp.ne.s32.totalorder %s334, %s336
      %p343 = scmp.eq.s32.totalorder %s38, 3
      %p344 = por %p342, %p343
      %p345 = scmp.ne.s32.totalorder %s336, %s337
      %p346 = scmp.eq.s32.totalorder %s38, 0
      %p347 = por %p345, %p346
      %p348 = scmp.ne.s32.totalorder %s336, %s337
      %p349 = scmp.eq.s32.totalorder %s39, 3
      %p350 = por %p348, %p349
      %p352 = scmp.ne.s32.totalorder %s337, %s351
      %p353 = scmp.eq.s32.totalorder %s39, 0
      %p354 = por %p352, %p353
      %s355 = ssub.s32 %s40, %s52
      %s356 = ssub.s32 %s41, %s48
      %s357 = sor.u32 %s355, %s356
      %p358 = scmp.eq.s32.totalorder %s357, 0
      %s360 = sadd.s32 %s359, 1
      %s361 = scalar_select %p358, %s359, %s360
      %p364 = pneg %p358
      %p365 = scmp.eq.s32.totalorder %s33, 3
      %p366 = por %p364, %p365
      %p367 = scmp.ne.s32.totalorder %s359, %s362
      %p368 = scmp.eq.s32.totalorder %s33, 0
      %p369 = por %p367, %p368
      %p370 = scmp.ne.s32.totalorder %s359, %s362
      %p371 = scmp.eq.s32.totalorder %s38, 3
      %p372 = por %p370, %p371
      %p373 = scmp.ne.s32.totalorder %s362, %s363
      %p374 = scmp.eq.s32.totalorder %s38, 0
      %p375 = por %p373, %p374
      %p376 = scmp.ne.s32.totalorder %s362, %s363
      %p377 = scmp.eq.s32.totalorder %s39, 3
      %p378 = por %p376, %p377
      %p380 = scmp.ne.s32.totalorder %s363, %s379
      %p381 = scmp.eq.s32.totalorder %s39, 0
      %p382 = por %p380, %p381
      %p383 = scmp.le.s32.totalorder 1, %s33
      %p384 = scmp.lt.s32.totalorder %s33, 5
      %p385 = pnand %p383, %p384
      %p386 = pneg %p385
      // Predicated region
      $region9: #{tpu_custom_call.1} parent=5 // pred_check
        _
      $region10: #{tpu_custom_call.1} parent=5 // pred_check_branch
        %388 = sbr.rel (%p385) target = $region12
      $region11: #{tpu_custom_call.1} parent=5 // pred_region
        %s389 = ssub.s32 %s33, 1
        // Predicated region
        $region13: #{tpu_custom_call.1} parent=11 // pred_check
          %p390 = pneg %p158
        $region14: #{tpu_custom_call.1} parent=11 // pred_check_branch
          %392 = sbr.rel (%p390) target = $region16
        $region15: #{tpu_custom_call.1} parent=11 // pred_region
          %s394 = ssub.s32 16, 16
          %395 = vsyncadd [#allocation10], %s394
          %s397 = sshll.u32 [#allocation9], 4
          %s398 = int_to_ptr.vmem [resolvable:$true] %s397
          %400 = dma.hbm_to_vmem [thread:$0]  %s3, 16, %s398, [#allocation10]
        $region16: #{tpu_custom_call.1} parent=11 // pred_fallthru
          _
        // Predicated region
        $region17: #{tpu_custom_call.1} parent=11 // pred_check
          %p401 = pneg %p179
        $region18: #{tpu_custom_call.1} parent=11 // pred_check_branch
          %403 = sbr.rel (%p401) target = $region20
        $region19: #{tpu_custom_call.1} parent=11 // pred_region
          %s405 = ssub.s32 16, 16
          %406 = vsyncadd [#allocation10], %s405
          %s408 = sshll.u32 [#allocation11], 4
          %s409 = int_to_ptr.vmem [resolvable:$true] %s408
          %411 = dma.hbm_to_vmem [thread:$0]  %s4, 16, %s409, [#allocation10]
        $region20: #{tpu_custom_call.1} parent=11 // pred_fallthru
          _
        // Predicated region
        $region21: #{tpu_custom_call.1} parent=11 // pred_check
          %p412 = pneg %p200
        $region22: #{tpu_custom_call.1} parent=11 // pred_check_branch
          %414 = sbr.rel (%p412) target = $region24
        $region23: #{tpu_custom_call.1} parent=11 // pred_region
          %s416 = ssub.s32 2048, 2048
          %417 = vsyncadd [#allocation13], %s416
          %s418 = sshll.u32 [#allocation12], 4
          %s419 = int_to_ptr.vmem [resolvable:$true] %s418
          %424 = dma.hbm_to_vmem [thread:$0]  %s5, 2048, %s419, [#allocation13], 128, 128, 8
        $region24: #{tpu_custom_call.1} parent=11 // pred_fallthru
          _
        // Predicated region
        $region25: #{tpu_custom_call.1} parent=11 // pred_check
          %p425 = pneg %p221
        $region26: #{tpu_custom_call.1} parent=11 // pred_check_branch
          %427 = sbr.rel (%p425) target = $region28
        $region27: #{tpu_custom_call.1} parent=11 // pred_region
          %s429 = ssub.s32 32, 32
          %430 = vsyncadd [#allocation13], %s429
          %s432 = sshll.u32 [#allocation14], 4
          %s433 = int_to_ptr.vmem [resolvable:$true] %s432
          %435 = dma.hbm_to_vmem [thread:$0]  %s6, 32, %s433, [#allocation13]
        $region28: #{tpu_custom_call.1} parent=11 // pred_fallthru
          _
        // Predicated region
        $region29: #{tpu_custom_call.1} parent=11 // pred_check
          %p436 = pneg %p242
        $region30: #{tpu_custom_call.1} parent=11 // pred_check_branch
          %438 = sbr.rel (%p436) target = $region32
        $region31: #{tpu_custom_call.1} parent=11 // pred_region
          %s440 = ssub.s32 2048, 2048
          %441 = vsyncadd [#allocation16], %s440
          %s442 = sshll.u32 [#allocation15], 4
          %s443 = int_to_ptr.vmem [resolvable:$true] %s442
          %448 = dma.hbm_to_vmem [thread:$0]  %s7, 2048, %s443, [#allocation16], 128, 128, 8
        $region32: #{tpu_custom_call.1} parent=11 // pred_fallthru
          _
        // Predicated region
        $region33: #{tpu_custom_call.1} parent=11 // pred_check
          %p449 = pneg %p263
        $region34: #{tpu_custom_call.1} parent=11 // pred_check_branch
          %451 = sbr.rel (%p449) target = $region36
        $region35: #{tpu_custom_call.1} parent=11 // pred_region
          %s453 = ssub.s32 32, 32
          %454 = vsyncadd [#allocation16], %s453
          %s456 = sshll.u32 [#allocation17], 4
          %s457 = int_to_ptr.vmem [resolvable:$true] %s456
          %459 = dma.hbm_to_vmem [thread:$0]  %s8, 32, %s457, [#allocation16]
        $region36: #{tpu_custom_call.1} parent=11 // pred_fallthru
          _
        // Predicated region
        $region37: #{tpu_custom_call.1} parent=11 // pred_check
          %p460 = pneg %p284
        $region38: #{tpu_custom_call.1} parent=11 // pred_check_branch
          %462 = sbr.rel (%p460) target = $region40
        $region39: #{tpu_custom_call.1} parent=11 // pred_region
          %s464 = ssub.s32 1024, 1024
          %465 = vsyncadd [#allocation19], %s464
          %s466 = sshll.u32 [#allocation18], 4
          %s467 = int_to_ptr.vmem [resolvable:$true] %s466
          %472 = dma.hbm_to_vmem [thread:$0]  %s9, 1024, %s467, [#allocation19], 256, 256, 16
        $region40: #{tpu_custom_call.1} parent=11 // pred_fallthru
          _
        // Predicated region
        $region41: #{tpu_custom_call.1} parent=11 // pred_check
          %p473 = pneg %p305
        $region42: #{tpu_custom_call.1} parent=11 // pred_check_branch
          %475 = sbr.rel (%p473) target = $region44
        $region43: #{tpu_custom_call.1} parent=11 // pred_region
          %s477 = ssub.s32 32, 32
          %478 = vsyncadd [#allocation19], %s477
          %s480 = sshll.u32 [#allocation20], 4
          %s481 = int_to_ptr.vmem [resolvable:$true] %s480
          %483 = dma.hbm_to_vmem [thread:$0]  %s10, 32, %s481, [#allocation19]
        $region44: #{tpu_custom_call.1} parent=11 // pred_fallthru
          _
        // Predicated region
        $region45: #{tpu_custom_call.1} parent=11 // pred_check
          %p484 = pneg %p326
        $region46: #{tpu_custom_call.1} parent=11 // pred_check_branch
          %486 = sbr.rel (%p484) target = $region48
        $region47: #{tpu_custom_call.1} parent=11 // pred_region
          %s488 = ssub.s32 2048, 2048
          %489 = vsyncadd [#allocation22], %s488
          %s490 = sshll.u32 [#allocation21], 4
          %s491 = int_to_ptr.vmem [resolvable:$true] %s490
          %496 = dma.hbm_to_vmem [thread:$0]  %s11, 2048, %s491, [#allocation22], 64, 64, 4
        $region48: #{tpu_custom_call.1} parent=11 // pred_fallthru
          _
        // Predicated region
        $region49: #{tpu_custom_call.1} parent=11 // pred_check
          %p497 = pneg %p347
        $region50: #{tpu_custom_call.1} parent=11 // pred_check_branch
          %499 = sbr.rel (%p497) target = $region52
        $region51: #{tpu_custom_call.1} parent=11 // pred_region
          %s501 = ssub.s32 16, 16
          %502 = vsyncadd [#allocation22], %s501
          %s504 = sshll.u32 [#allocation23], 4
          %s505 = int_to_ptr.vmem [resolvable:$true] %s504
          %507 = dma.hbm_to_vmem [thread:$0]  %s12, 16, %s505, [#allocation22]
        $region52: #{tpu_custom_call.1} parent=11 // pred_fallthru
          _
      $region12: #{tpu_custom_call.1} parent=5 // pred_fallthru
        _
      %p508 = scmp.lt.s32.totalorder %s33, 4
      // Predicated region
      $region53: #{tpu_custom_call.1} parent=5 // pred_check
        %p509 = pneg %p508
      $region54: #{tpu_custom_call.1} parent=5 // pred_check_branch
        %511 = sbr.rel (%p509) target = $region56
      $region55: #{tpu_custom_call.1} parent=5 // pred_region
        // Predicated region
        $region57: #{tpu_custom_call.1} parent=55 // pred_check
          %p512 = pneg %p69
        $region58: #{tpu_custom_call.1} parent=55 // pred_check_branch
          %514 = sbr.rel (%p512) target = $region60
        $region59: #{tpu_custom_call.1} parent=55 // pred_region
          %s515 = sand.u32 %s59, 1
          %s516 = scalar_lea.sflag [#allocation4], %s515
          %s517 = sand.u32 %s59, 1
          %s518 = smul.addr %s517, 16
          %s519 = scalar_lea.vmem [#allocation3], %s518
          %s520 = smul.u32 %s41, 2
          %s521 = smul.u32 2, %s520
          %s523 = ssub.s32 256, 256
          %524 = vsyncadd %s516, %s523
          %s525 = smul.addr %s40, 12
          %s526 = sadd.s32 %s521, %s525
          %s527 = smul.addr %s526, 128
          %s528 = scalar_lea.hbm %s0, %s527
          %s529 = sshll.u32 %s519, 4
          %s530 = int_to_ptr.vmem [resolvable:$true] %s529
          %535 = dma.hbm_to_vmem [thread:$0]  %s528, 256, %s530, %s516, 128, 128, 8
        $region60: #{tpu_custom_call.1} parent=55 // pred_fallthru
          _
        // Predicated region
        $region61: #{tpu_custom_call.1} parent=55 // pred_check
          %p536 = pneg %p97
        $region62: #{tpu_custom_call.1} parent=55 // pred_check_branch
          %538 = sbr.rel (%p536) target = $region64
        $region63: #{tpu_custom_call.1} parent=55 // pred_region
          %s539 = sand.u32 %s33, 1
          %s540 = scalar_lea.sflag [#allocation7], %s539
          %s541 = sand.u32 %s87, 1
          %s542 = smul.addr %s541, 32
          %s543 = scalar_lea.vmem [#allocation6], %s542
          %s544 = smul.u32 4, %s41
          %s546 = ssub.s32 512, 512
          %547 = vsyncadd %s540, %s546
          %s548 = smul.addr %s40, 8
          %s549 = sadd.s32 %s544, %s548
          %s550 = smul.addr %s549, 128
          %s551 = scalar_lea.hbm %s1, %s550
          %s552 = sshll.u32 %s543, 4
          %s553 = int_to_ptr.vmem [resolvable:$true] %s552
          %558 = dma.hbm_to_vmem [thread:$0]  %s551, 512, %s553, %s540, 128, 128, 8
        $region64: #{tpu_custom_call.1} parent=55 // pred_fallthru
          _
        // Predicated region
        $region65: #{tpu_custom_call.1} parent=55 // pred_check
          %p559 = pneg %p131
        $region66: #{tpu_custom_call.1} parent=55 // pred_check_branch
          %561 = sbr.rel (%p559) target = $region68
        $region67: #{tpu_custom_call.1} parent=55 // pred_region
          %s562 = sand.u32 %s33, 1
          %s563 = scalar_lea.sflag [#allocation7], %s562
          %s564 = sand.u32 %s121, 1
          %s565 = smul.addr %s564, 16
          %s566 = scalar_lea.vmem [#allocation8], %s565
          %s567 = sadd.s32 %s41, 1
          %s568 = smul.u32 %s567, 2
          %s569 = sadd.s32 %s568, 1
          %s570 = smul.u32 2, %s569
          %s572 = ssub.s32 256, 256
          %573 = vsyncadd %s563, %s572
          %s574 = smul.addr %s40, 12
          %s575 = sadd.s32 %s570, %s574
          %s576 = smul.addr %s575, 128
          %s577 = scalar_lea.hbm %s2, %s576
          %s578 = sshll.u32 %s566, 4
          %s579 = int_to_ptr.vmem [resolvable:$true] %s578
          %584 = dma.hbm_to_vmem [thread:$0]  %s577, 256, %s579, %s563, 128, 128, 8
        $region68: #{tpu_custom_call.1} parent=55 // pred_fallthru
          _
      $region56: #{tpu_custom_call.1} parent=5 // pred_fallthru
        _
      %p585 = scmp.le.s32.totalorder 1, %s33
      %p586 = scmp.lt.s32.totalorder %s33, 5
      %p587 = pnand %p585, %p586
      %p588 = pneg %p587
      // Predicated region
      $region69: #{tpu_custom_call.1} parent=5 // pred_check
        _
      $region70: #{tpu_custom_call.1} parent=5 // pred_check_branch
        %590 = sbr.rel (%p587) target = $region72
      $region71: #{tpu_custom_call.1} parent=5 // pred_region
        %s591 = ssub.s32 %s33, 1
        %s592 = sand.u32 %s62, 1
        %s593 = scalar_lea.sflag [#allocation4], %s592
        %s594 = sand.u32 %s62, 1
        %s595 = smul.addr %s594, 16
        %s596 = scalar_lea.vmem [#allocation3], %s595
        // Predicated region
        $region73: #{tpu_custom_call.1} parent=71 // pred_check
          %p597 = pneg %p75
        $region74: #{tpu_custom_call.1} parent=71 // pred_check_branch
          %599 = sbr.rel (%p597) target = $region76
        $region75: #{tpu_custom_call.1} parent=71 // pred_region
          %600 = dma.done %s593, 256
        $region76: #{tpu_custom_call.1} parent=71 // pred_fallthru
          _
        %s601 = sand.u32 %s38, 1
        %s602 = scalar_lea.sflag [#allocation7], %s601
        %s603 = sand.u32 %s90, 1
        %s604 = smul.addr %s603, 32
        %s605 = scalar_lea.vmem [#allocation6], %s604
        // Predicated region
        $region77: #{tpu_custom_call.1} parent=71 // pred_check
          %p606 = pneg %p103
        $region78: #{tpu_custom_call.1} parent=71 // pred_check_branch
          %608 = sbr.rel (%p606) target = $region80
        $region79: #{tpu_custom_call.1} parent=71 // pred_region
          %609 = dma.done %s602, 512
        $region80: #{tpu_custom_call.1} parent=71 // pred_fallthru
          _
        %s610 = sand.u32 %s38, 1
        %s611 = scalar_lea.sflag [#allocation7], %s610
        %s612 = sand.u32 %s124, 1
        %s613 = smul.addr %s612, 16
        %s614 = scalar_lea.vmem [#allocation8], %s613
        // Predicated region
        $region81: #{tpu_custom_call.1} parent=71 // pred_check
          %p615 = pneg %p137
        $region82: #{tpu_custom_call.1} parent=71 // pred_check_branch
          %617 = sbr.rel (%p615) target = $region84
        $region83: #{tpu_custom_call.1} parent=71 // pred_region
          %618 = dma.done %s611, 256
        $region84: #{tpu_custom_call.1} parent=71 // pred_fallthru
          _
        // Predicated region
        $region85: #{tpu_custom_call.1} parent=71 // pred_check
          %p619 = pneg %p158
        $region86: #{tpu_custom_call.1} parent=71 // pred_check_branch
          %621 = sbr.rel (%p619) target = $region88
        $region87: #{tpu_custom_call.1} parent=71 // pred_region
          %622 = dma.done [#allocation10], 16
        $region88: #{tpu_custom_call.1} parent=71 // pred_fallthru
          _
        // Predicated region
        $region89: #{tpu_custom_call.1} parent=71 // pred_check
          %p623 = pneg %p179
        $region90: #{tpu_custom_call.1} parent=71 // pred_check_branch
          %625 = sbr.rel (%p623) target = $region92
        $region91: #{tpu_custom_call.1} parent=71 // pred_region
          %626 = dma.done [#allocation10], 16
        $region92: #{tpu_custom_call.1} parent=71 // pred_fallthru
          _
        // Predicated region
        $region93: #{tpu_custom_call.1} parent=71 // pred_check
          %p627 = pneg %p200
        $region94: #{tpu_custom_call.1} parent=71 // pred_check_branch
          %629 = sbr.rel (%p627) target = $region96
        $region95: #{tpu_custom_call.1} parent=71 // pred_region
          %630 = dma.done [#allocation13], 2048
        $region96: #{tpu_custom_call.1} parent=71 // pred_fallthru
          _
        // Predicated region
        $region97: #{tpu_custom_call.1} parent=71 // pred_check
          %p631 = pneg %p221
        $region98: #{tpu_custom_call.1} parent=71 // pred_check_branch
          %633 = sbr.rel (%p631) target = $region100
        $region99: #{tpu_custom_call.1} parent=71 // pred_region
          %634 = dma.done [#allocation13], 32
        $region100: #{tpu_custom_call.1} parent=71 // pred_fallthru
          _
        // Predicated region
        $region101: #{tpu_custom_call.1} parent=71 // pred_check
          %p635 = pneg %p242
        $region102: #{tpu_custom_call.1} parent=71 // pred_check_branch
          %637 = sbr.rel (%p635) target = $region104
        $region103: #{tpu_custom_call.1} parent=71 // pred_region
          %638 = dma.done [#allocation16], 2048
        $region104: #{tpu_custom_call.1} parent=71 // pred_fallthru
          _
        // Predicated region
        $region105: #{tpu_custom_call.1} parent=71 // pred_check
          %p639 = pneg %p263
        $region106: #{tpu_custom_call.1} parent=71 // pred_check_branch
          %641 = sbr.rel (%p639) target = $region108
        $region107: #{tpu_custom_call.1} parent=71 // pred_region
          %642 = dma.done [#allocation16], 32
        $region108: #{tpu_custom_call.1} parent=71 // pred_fallthru
          _
        // Predicated region
        $region109: #{tpu_custom_call.1} parent=71 // pred_check
          %p643 = pneg %p284
        $region110: #{tpu_custom_call.1} parent=71 // pred_check_branch
          %645 = sbr.rel (%p643) target = $region112
        $region111: #{tpu_custom_call.1} parent=71 // pred_region
          %646 = dma.done [#allocation19], 1024
        $region112: #{tpu_custom_call.1} parent=71 // pred_fallthru
          _
        // Predicated region
        $region113: #{tpu_custom_call.1} parent=71 // pred_check
          %p647 = pneg %p305
        $region114: #{tpu_custom_call.1} parent=71 // pred_check_branch
          %649 = sbr.rel (%p647) target = $region116
        $region115: #{tpu_custom_call.1} parent=71 // pred_region
          %650 = dma.done [#allocation19], 32
        $region116: #{tpu_custom_call.1} parent=71 // pred_fallthru
          _
        // Predicated region
        $region117: #{tpu_custom_call.1} parent=71 // pred_check
          %p651 = pneg %p326
        $region118: #{tpu_custom_call.1} parent=71 // pred_check_branch
          %653 = sbr.rel (%p651) target = $region120
        $region119: #{tpu_custom_call.1} parent=71 // pred_region
          %654 = dma.done [#allocation22], 2048
        $region120: #{tpu_custom_call.1} parent=71 // pred_fallthru
          _
        // Predicated region
        $region121: #{tpu_custom_call.1} parent=71 // pred_check
          %p655 = pneg %p347
        $region122: #{tpu_custom_call.1} parent=71 // pred_check_branch
          %657 = sbr.rel (%p655) target = $region124
        $region123: #{tpu_custom_call.1} parent=71 // pred_region
          %658 = dma.done [#allocation22], 16
        $region124: #{tpu_custom_call.1} parent=71 // pred_fallthru
          _
        %s659 = sand.u32 %s62, 1
        %s660 = scalar_lea.sflag [#allocation4], %s659
        %s661 = sand.u32 %s62, 1
        %s662 = smul.addr %s661, 16
        %s663 = scalar_lea.vmem [#allocation3], %s662
        %p664 = pneg %p75
        %p665 = pneg %p72
        %s666 = sand.u32 %s38, 1
        %s667 = scalar_lea.sflag [#allocation7], %s666
        %s668 = sand.u32 %s90, 1
        %s669 = smul.addr %s668, 32
        %s670 = scalar_lea.vmem [#allocation6], %s669
        %p671 = pneg %p103
        %p672 = pneg %p100
        %s673 = sand.u32 %s38, 1
        %s674 = scalar_lea.sflag [#allocation7], %s673
        %s675 = sand.u32 %s124, 1
        %s676 = smul.addr %s675, 16
        %s677 = scalar_lea.vmem [#allocation8], %s676
        %p678 = pneg %p137
        %p679 = pneg %p134
        %p680 = pneg %p158
        %p681 = pneg %p155
        %p682 = pneg %p179
        %p683 = pneg %p176
        %p684 = pneg %p200
        %p685 = pneg %p197
        %p686 = pneg %p221
        %p687 = pneg %p218
        %p688 = pneg %p242
        %p689 = pneg %p239
        %p690 = pneg %p263
        %p691 = pneg %p260
        %p692 = pneg %p284
        %p693 = pneg %p281
        %p694 = pneg %p305
        %p695 = pneg %p302
        %p696 = pneg %p326
        %p697 = pneg %p323
        %p698 = pneg %p347
        %p699 = pneg %p344
        %p700 = pneg %p375
        %p701 = pneg %p372
        %s702 = sand.u32 %s362, 1
        %s703 = scalar_lea.sflag [#allocation5], %s702
        %s704 = sand.u32 %s362, 1
        %s705 = smul.addr %s704, 32
        %s706 = scalar_lea.vmem [#allocation24], %s705
        %s707 = smul.u32 %s43, 2
        %s708 = smul.u32 2, %s707
        %s709 = smul.u32 4, %s43
        %s710 = sadd.s32 %s43, 1
        %s711 = smul.u32 %s710, 2
        %s712 = sadd.s32 %s711, 1
        %s713 = smul.u32 2, %s712
        %s714 = smul.u32 4, %s43
        %v716 = vld [vmem:[%s596] sm:$0xff]
        %v717 = vld [vmem:[%s596 + $0x8] sm:$0xff]
        %718 = vst [vmem:[#allocation2] sm:$0xff] %v716
        %719 = vst [vmem:[#allocation2 + $0x8] sm:$0xff] %v717
        %v720 = vld [vmem:[%s605] sm:$0xff]
        %v721 = vld [vmem:[%s605 + $0x8] sm:$0xff]
        %v722 = vld [vmem:[%s605 + $0x10] sm:$0xff]
        %v723 = vld [vmem:[%s605 + $0x18] sm:$0xff]
        %724 = vst [vmem:[#allocation2 + $0x10] sm:$0xff] %v720
        %725 = vst [vmem:[#allocation2 + $0x18] sm:$0xff] %v721
        %726 = vst [vmem:[#allocation2 + $0x20] sm:$0xff] %v722
        %727 = vst [vmem:[#allocation2 + $0x28] sm:$0xff] %v723
        %v728 = vld [vmem:[%s614] sm:$0xff]
        %v729 = vld [vmem:[%s614 + $0x8] sm:$0xff]
        %730 = vst [vmem:[#allocation2 + $0x30] sm:$0xff] %v728
        %731 = vst [vmem:[#allocation2 + $0x38] sm:$0xff] %v729
        %v732 = vld [vmem:[#allocation2] sm:$0xff]
        %v733 = vld [vmem:[#allocation2 + $0x8] sm:$0xff]
        %v734 = vld [vmem:[#allocation2 + $0x10] sm:$0xff]
        %v735 = vld [vmem:[#allocation2 + $0x18] sm:$0xff]
        %v736 = vld [vmem:[#allocation2 + $0x20] sm:$0xff]
        %v737 = vld [vmem:[#allocation2 + $0x28] sm:$0xff]
        %v738 = vld [vmem:[#allocation2 + $0x30] sm:$0xff]
        %v739 = vld [vmem:[#allocation2 + $0x38] sm:$0xff]
        %740 = vadd.xlane.f32.xlu0 %v732
        %v741 = vpop.xlane.xlu0 %740
        %742 = vadd.xlane.f32.xlu0 %v733
        %v743 = vpop.xlane.xlu0 %742
        %744 = vadd.xlane.f32.xlu0 %v734
        %v745 = vpop.xlane.xlu0 %744
        %746 = vadd.xlane.f32.xlu0 %v735
        %v747 = vpop.xlane.xlu0 %746
        %748 = vadd.xlane.f32.xlu0 %v736
        %v749 = vpop.xlane.xlu0 %748
        %750 = vadd.xlane.f32.xlu0 %v737
        %v751 = vpop.xlane.xlu0 %750
        %752 = vadd.xlane.f32.xlu0 %v738
        %v753 = vpop.xlane.xlu0 %752
        %754 = vadd.xlane.f32.xlu0 %v739
        %v755 = vpop.xlane.xlu0 %754
        %v756 = vrcp.pop 128.0
        %v757 = vmul.f32 %v741, %v756
        %v758 = vmul.f32 %v743, %v756
        %v759 = vmul.f32 %v745, %v756
        %v760 = vmul.f32 %v747, %v756
        %v761 = vmul.f32 %v749, %v756
        %v762 = vmul.f32 %v751, %v756
        %v763 = vmul.f32 %v753, %v756
        %v764 = vmul.f32 %v755, %v756
        %v765 = vsub.f32 %v732, %v757
        %v766 = vsub.f32 %v733, %v758
        %v767 = vsub.f32 %v734, %v759
        %v768 = vsub.f32 %v735, %v760
        %v769 = vsub.f32 %v736, %v761
        %v770 = vsub.f32 %v737, %v762
        %v771 = vsub.f32 %v738, %v763
        %v772 = vsub.f32 %v739, %v764
        %v773 = vmul.f32 %v765, %v765
        %v774 = vmul.f32 %v766, %v766
        %v775 = vmul.f32 %v767, %v767
        %v776 = vmul.f32 %v768, %v768
        %v777 = vmul.f32 %v769, %v769
        %v778 = vmul.f32 %v770, %v770
        %v779 = vmul.f32 %v771, %v771
        %v780 = vmul.f32 %v772, %v772
        %781 = vadd.xlane.f32.xlu0 %v773
        %v782 = vpop.xlane.xlu0 %781
        %783 = vadd.xlane.f32.xlu0 %v774
        %v784 = vpop.xlane.xlu0 %783
        %785 = vadd.xlane.f32.xlu0 %v775
        %v786 = vpop.xlane.xlu0 %785
        %787 = vadd.xlane.f32.xlu0 %v776
        %v788 = vpop.xlane.xlu0 %787
        %789 = vadd.xlane.f32.xlu0 %v777
        %v790 = vpop.xlane.xlu0 %789
        %791 = vadd.xlane.f32.xlu0 %v778
        %v792 = vpop.xlane.xlu0 %791
        %793 = vadd.xlane.f32.xlu0 %v779
        %v794 = vpop.xlane.xlu0 %793
        %795 = vadd.xlane.f32.xlu0 %v780
        %v796 = vpop.xlane.xlu0 %795
        %v797 = vmul.f32 %v782, %v756
        %v798 = vmul.f32 %v784, %v756
        %v799 = vmul.f32 %v786, %v756
        %v800 = vmul.f32 %v788, %v756
        %v801 = vmul.f32 %v790, %v756
        %v802 = vmul.f32 %v792, %v756
        %v803 = vmul.f32 %v794, %v756
        %v804 = vmul.f32 %v796, %v756
        %v805 = vadd.f32 %v797, 1e-05
        %v806 = vadd.f32 %v798, 1e-05
        %v807 = vadd.f32 %v799, 1e-05
        %v808 = vadd.f32 %v800, 1e-05
        %v809 = vadd.f32 %v801, 1e-05
        %v810 = vadd.f32 %v802, 1e-05
        %v811 = vadd.f32 %v803, 1e-05
        %v812 = vadd.f32 %v804, 1e-05
        %v813 = vrsqrt.pop %v805
        %v814 = vrsqrt.pop %v806
        %v815 = vrsqrt.pop %v807
        %v816 = vrsqrt.pop %v808
        %v817 = vrsqrt.pop %v809
        %v818 = vrsqrt.pop %v810
        %v819 = vrsqrt.pop %v811
        %v820 = vrsqrt.pop %v812
        %v821 = vmul.f32 %v765, %v813
        %v822 = vmul.f32 %v766, %v814
        %v823 = vmul.f32 %v767, %v815
        %v824 = vmul.f32 %v768, %v816
        %v825 = vmul.f32 %v769, %v817
        %v826 = vmul.f32 %v770, %v818
        %v827 = vmul.f32 %v771, %v819
        %v828 = vmul.f32 %v772, %v820
        %v829 = vld [vmem:[#allocation9] sm:$0x1]
        %v831 = vlaneseq
        %v832 = vshrl.u32 %v831, 7
        %v833 = vsub.s32 0, %v832
        %v834 = vrot.slane %v829, %v833
        %v836 = vmul.f32 %v821, %v834
        %v837 = vmul.f32 %v822, %v834
        %v838 = vmul.f32 %v823, %v834
        %v839 = vmul.f32 %v824, %v834
        %v840 = vmul.f32 %v825, %v834
        %v841 = vmul.f32 %v826, %v834
        %v842 = vmul.f32 %v827, %v834
        %v843 = vmul.f32 %v828, %v834
        %v844 = vld [vmem:[#allocation11] sm:$0x1]
        %v846 = vlaneseq
        %v847 = vshrl.u32 %v846, 7
        %v848 = vsub.s32 0, %v847
        %v849 = vrot.slane %v844, %v848
        %v851 = vadd.f32 %v836, %v849
        %v852 = vadd.f32 %v837, %v849
        %v853 = vadd.f32 %v838, %v849
        %v854 = vadd.f32 %v839, %v849
        %v855 = vadd.f32 %v840, %v849
        %v856 = vadd.f32 %v841, %v849
        %v857 = vadd.f32 %v842, %v849
        %v858 = vadd.f32 %v843, %v849
        %v859 = vpack.c.bf16 %v852, %v851
        %v860 = vpack.c.bf16 %v854, %v853
        %v861 = vpack.c.bf16 %v856, %v855
        %v862 = vpack.c.bf16 %v858, %v857
        %v863 = vld [vmem:[#allocation12] sm:$0xff]
        %v864 = vld [vmem:[#allocation12 + $0x8] sm:$0xff]
        %v865 = vld [vmem:[#allocation12 + $0x10] sm:$0xff]
        %v866 = vld [vmem:[#allocation12 + $0x18] sm:$0xff]
        %v867 = vld [vmem:[#allocation12 + $0x20] sm:$0xff]
        %v868 = vld [vmem:[#allocation12 + $0x28] sm:$0xff]
        %v869 = vld [vmem:[#allocation12 + $0x30] sm:$0xff]
        %v870 = vld [vmem:[#allocation12 + $0x38] sm:$0xff]
        %v871 = vld [vmem:[#allocation12 + $0x40] sm:$0xff]
        %v872 = vld [vmem:[#allocation12 + $0x48] sm:$0xff]
        %v873 = vld [vmem:[#allocation12 + $0x50] sm:$0xff]
        %v874 = vld [vmem:[#allocation12 + $0x58] sm:$0xff]
        %v875 = vld [vmem:[#allocation12 + $0x60] sm:$0xff]
        %v876 = vld [vmem:[#allocation12 + $0x68] sm:$0xff]
        %v877 = vld [vmem:[#allocation12 + $0x70] sm:$0xff]
        %v878 = vld [vmem:[#allocation12 + $0x78] sm:$0xff]
        %v879 = vld [vmem:[#allocation14] sm:$0x3]
        %v881 = vlaneseq
        %v882 = vshrl.u32 %v881, 7
        %v883 = vsub.s32 0, %v882
        %v884 = vrot.slane %v879, %v883
        %v885 = vlaneseq
        %v886 = vshrl.u32 %v885, 7
        %v887 = vsub.s32 1, %v886
        %v888 = vrot.slane %v879, %v887
        %v907 = vunpack.c.l.b16 %v863
        %v908 = vunpack.c.h.b16 %v863
        %v909 = vunpack.c.l.b16 %v864
        %v910 = vunpack.c.h.b16 %v864
        %v911 = vunpack.c.l.b16 %v865
        %v912 = vunpack.c.h.b16 %v865
        %v913 = vunpack.c.l.b16 %v866
        %v914 = vunpack.c.h.b16 %v866
        %v915 = vunpack.c.l.b16 %v867
        %v916 = vunpack.c.h.b16 %v867
        %v917 = vunpack.c.l.b16 %v868
        %v918 = vunpack.c.h.b16 %v868
        %v919 = vunpack.c.l.b16 %v869
        %v920 = vunpack.c.h.b16 %v869
        %v921 = vunpack.c.l.b16 %v870
        %v922 = vunpack.c.h.b16 %v870
        %v923 = vunpack.c.l.b16 %v871
        %v924 = vunpack.c.h.b16 %v871
        %v925 = vunpack.c.l.b16 %v872
        %v926 = vunpack.c.h.b16 %v872
        %v927 = vunpack.c.l.b16 %v873
        %v928 = vunpack.c.h.b16 %v873
        %v929 = vunpack.c.l.b16 %v874
        %v930 = vunpack.c.h.b16 %v874
        %v931 = vunpack.c.l.b16 %v875
        %v932 = vunpack.c.h.b16 %v875
        %v933 = vunpack.c.l.b16 %v876
        %v934 = vunpack.c.h.b16 %v876
        %v935 = vunpack.c.l.b16 %v877
        %v936 = vunpack.c.h.b16 %v877
        %v937 = vunpack.c.l.b16 %v878
        %v938 = vunpack.c.h.b16 %v878
        %v939 = vpack.c.b16 %v909, %v907
        %v940 = vpack.c.b16 %v910, %v908
        %v941 = vpack.c.b16 %v913, %v911
        %v942 = vpack.c.b16 %v914, %v912
        %v943 = vpack.c.b16 %v917, %v915
        %v944 = vpack.c.b16 %v918, %v916
        %v945 = vpack.c.b16 %v921, %v919
        %v946 = vpack.c.b16 %v922, %v920
        %v947 = vpack.c.b16 %v925, %v923
        %v948 = vpack.c.b16 %v926, %v924
        %v949 = vpack.c.b16 %v929, %v927
        %v950 = vpack.c.b16 %v930, %v928
        %v951 = vpack.c.b16 %v933, %v931
        %v952 = vpack.c.b16 %v934, %v932
        %v953 = vpack.c.b16 %v937, %v935
        %v954 = vpack.c.b16 %v938, %v936
        %971 = vmatprep.subr.bf16.mxu0 %v940
        %972 = vmatpush1.bf16.msra.mxu0 %v939
        %973 = vmatprep.subr.bf16.mxu0 %v942
        %974 = vmatpush1.bf16.msra.mxu0 %v941
        %975 = vmatprep.subr.bf16.mxu0 %v944
        %976 = vmatpush1.bf16.msra.mxu0 %v943
        %977 = vmatprep.subr.bf16.mxu0 %v946
        %978 = vmatpush1.bf16.msra.mxu0 %v945
        %979 = vmatprep.subr.bf16.mxu0 %v948
        %980 = vmatpush1.bf16.msra.mxu0 %v947
        %981 = vmatprep.subr.bf16.mxu0 %v950
        %982 = vmatpush1.bf16.msra.mxu0 %v949
        %983 = vmatprep.subr.bf16.mxu0 %v952
        %984 = vmatpush1.bf16.msra.mxu0 %v951
        %985 = vmatprep.subr.bf16.mxu0 %v954
        %986 = vmatpush1.bf16.msra.mxu0 %v953
        %987 = vmatprep.subr.bf16.mxu0 0
        %988 = vmatpush1.bf16.msra.mxu0 0
        %989 = vmatprep.subr.bf16.mxu0 0
        %990 = vmatpush1.bf16.msra.mxu0 0
        %991 = vmatprep.subr.bf16.mxu0 0
        %992 = vmatpush1.bf16.msra.mxu0 0
        %993 = vmatprep.subr.bf16.mxu0 0
        %994 = vmatpush1.bf16.msra.mxu0 0
        %995 = vmatprep.subr.bf16.mxu0 0
        %996 = vmatpush1.bf16.msra.mxu0 0
        %997 = vmatprep.subr.bf16.mxu0 0
        %998 = vmatpush1.bf16.msra.mxu0 0
        %999 = vmatprep.subr.bf16.mxu0 0
        %1000 = vmatpush1.bf16.msra.mxu0 0
        %1001 = vmatprep.subr.bf16.mxu0 0
        %1002 = vmatpush1.bf16.msra.mxu0 0
        %1003 = vmatprep.mubr.bf16.mxu0 0
        %1004 = vmatmul.mubr.bf16.gmra.mrb[0].mxu0 %v859
        %v1005 = vpop.f32.mrb[0].mxu0
        %v1006 = vadd.f32 %v884, %v1005
        %v1007 = vpop.f32.mrb[0].mxu0
        %v1008 = vadd.f32 %v888, %v1007
        %v1009 = vpop.f32.mrb[0].mxu0
        %v1010 = vadd.f32 %v884, %v1009
        %v1011 = vpop.f32.mrb[0].mxu0
        %v1012 = vadd.f32 %v888, %v1011
        %1013 = vmatprep.mubr.bf16.mxu0 0
        %1014 = vmatmul.mubr.bf16.gmra.mrb[0].mxu0 %v860
        %v1015 = vpop.f32.mrb[0].mxu0
        %v1016 = vadd.f32 %v884, %v1015
        %v1017 = vpop.f32.mrb[0].mxu0
        %v1018 = vadd.f32 %v888, %v1017
        %v1019 = vpop.f32.mrb[0].mxu0
        %v1020 = vadd.f32 %v884, %v1019
        %v1021 = vpop.f32.mrb[0].mxu0
        %v1022 = vadd.f32 %v888, %v1021
        %1023 = vmatprep.mubr.bf16.mxu0 0
        %1024 = vmatmul.mubr.bf16.gmra.mrb[0].mxu0 %v861
        %v1025 = vpop.f32.mrb[0].mxu0
        %v1026 = vadd.f32 %v884, %v1025
        %v1027 = vpop.f32.mrb[0].mxu0
        %v1028 = vadd.f32 %v888, %v1027
        %v1029 = vpop.f32.mrb[0].mxu0
        %v1030 = vadd.f32 %v884, %v1029
        %v1031 = vpop.f32.mrb[0].mxu0
        %v1032 = vadd.f32 %v888, %v1031
        %1033 = vmatprep.mubr.bf16.mxu0 0
        %1034 = vmatmul.mubr.bf16.gmra.mrb[0].mxu0 %v862
        %v1035 = vpop.f32.mrb[0].mxu0
        %v1036 = vadd.f32 %v884, %v1035
        %v1037 = vpop.f32.mrb[0].mxu0
        %v1038 = vadd.f32 %v888, %v1037
        %v1039 = vpop.f32.mrb[0].mxu0
        %v1040 = vadd.f32 %v884, %v1039
        %v1041 = vpop.f32.mrb[0].mxu0
        %v1042 = vadd.f32 %v888, %v1041
        %1043 = vdwg.mxu0
        %v1044 = vld [vmem:[#allocation15] sm:$0xff]
        %v1045 = vld [vmem:[#allocation15 + $0x8] sm:$0xff]
        %v1046 = vld [vmem:[#allocation15 + $0x10] sm:$0xff]
        %v1047 = vld [vmem:[#allocation15 + $0x18] sm:$0xff]
        %v1048 = vld [vmem:[#allocation15 + $0x20] sm:$0xff]
        %v1049 = vld [vmem:[#allocation15 + $0x28] sm:$0xff]
        %v1050 = vld [vmem:[#allocation15 + $0x30] sm:$0xff]
        %v1051 = vld [vmem:[#allocation15 + $0x38] sm:$0xff]
        %v1052 = vld [vmem:[#allocation15 + $0x40] sm:$0xff]
        %v1053 = vld [vmem:[#allocation15 + $0x48] sm:$0xff]
        %v1054 = vld [vmem:[#allocation15 + $0x50] sm:$0xff]
        %v1055 = vld [vmem:[#allocation15 + $0x58] sm:$0xff]
        %v1056 = vld [vmem:[#allocation15 + $0x60] sm:$0xff]
        %v1057 = vld [vmem:[#allocation15 + $0x68] sm:$0xff]
        %v1058 = vld [vmem:[#allocation15 + $0x70] sm:$0xff]
        %v1059 = vld [vmem:[#allocation15 + $0x78] sm:$0xff]
        %v1060 = vld [vmem:[#allocation17] sm:$0x3]
        %v1062 = vlaneseq
        %v1063 = vshrl.u32 %v1062, 7
        %v1064 = vsub.s32 0, %v1063
        %v1065 = vrot.slane %v1060, %v1064
        %v1066 = vlaneseq
        %v1067 = vshrl.u32 %v1066, 7
        %v1068 = vsub.s32 1, %v1067
        %v1069 = vrot.slane %v1060, %v1068
        %v1088 = vunpack.c.l.b16 %v1044
        %v1089 = vunpack.c.h.b16 %v1044
        %v1090 = vunpack.c.l.b16 %v1045
        %v1091 = vunpack.c.h.b16 %v1045
        %v1092 = vunpack.c.l.b16 %v1046
        %v1093 = vunpack.c.h.b16 %v1046
        %v1094 = vunpack.c.l.b16 %v1047
        %v1095 = vunpack.c.h.b16 %v1047
        %v1096 = vunpack.c.l.b16 %v1048
        %v1097 = vunpack.c.h.b16 %v1048
        %v1098 = vunpack.c.l.b16 %v1049
        %v1099 = vunpack.c.h.b16 %v1049
        %v1100 = vunpack.c.l.b16 %v1050
        %v1101 = vunpack.c.h.b16 %v1050
        %v1102 = vunpack.c.l.b16 %v1051
        %v1103 = vunpack.c.h.b16 %v1051
        %v1104 = vunpack.c.l.b16 %v1052
        %v1105 = vunpack.c.h.b16 %v1052
        %v1106 = vunpack.c.l.b16 %v1053
        %v1107 = vunpack.c.h.b16 %v1053
        %v1108 = vunpack.c.l.b16 %v1054
        %v1109 = vunpack.c.h.b16 %v1054
        %v1110 = vunpack.c.l.b16 %v1055
        %v1111 = vunpack.c.h.b16 %v1055
        %v1112 = vunpack.c.l.b16 %v1056
        %v1113 = vunpack.c.h.b16 %v1056
        %v1114 = vunpack.c.l.b16 %v1057
        %v1115 = vunpack.c.h.b16 %v1057
        %v1116 = vunpack.c.l.b16 %v1058
        %v1117 = vunpack.c.h.b16 %v1058
        %v1118 = vunpack.c.l.b16 %v1059
        %v1119 = vunpack.c.h.b16 %v1059
        %v1120 = vpack.c.b16 %v1090, %v1088
        %v1121 = vpack.c.b16 %v1091, %v1089
        %v1122 = vpack.c.b16 %v1094, %v1092
        %v1123 = vpack.c.b16 %v1095, %v1093
        %v1124 = vpack.c.b16 %v1098, %v1096
        %v1125 = vpack.c.b16 %v1099, %v1097
        %v1126 = vpack.c.b16 %v1102, %v1100
        %v1127 = vpack.c.b16 %v1103, %v1101
        %v1128 = vpack.c.b16 %v1106, %v1104
        %v1129 = vpack.c.b16 %v1107, %v1105
        %v1130 = vpack.c.b16 %v1110, %v1108
        %v1131 = vpack.c.b16 %v1111, %v1109
        %v1132 = vpack.c.b16 %v1114, %v1112
        %v1133 = vpack.c.b16 %v1115, %v1113
        %v1134 = vpack.c.b16 %v1118, %v1116
        %v1135 = vpack.c.b16 %v1119, %v1117
        %1152 = vmatprep.subr.bf16.mxu0 %v1121
        %1153 = vmatpush1.bf16.msra.mxu0 %v1120
        %1154 = vmatprep.subr.bf16.mxu0 %v1123
        %1155 = vmatpush1.bf16.msra.mxu0 %v1122
        %1156 = vmatprep.subr.bf16.mxu0 %v1125
        %1157 = vmatpush1.bf16.msra.mxu0 %v1124
        %1158 = vmatprep.subr.bf16.mxu0 %v1127
        %1159 = vmatpush1.bf16.msra.mxu0 %v1126
        %1160 = vmatprep.subr.bf16.mxu0 %v1129
        %1161 = vmatpush1.bf16.msra.mxu0 %v1128
        %1162 = vmatprep.subr.bf16.mxu0 %v1131
        %1163 = vmatpush1.bf16.msra.mxu0 %v1130
        %1164 = vmatprep.subr.bf16.mxu0 %v1133
        %1165 = vmatpush1.bf16.msra.mxu0 %v1132
        %1166 = vmatprep.subr.bf16.mxu0 %v1135
        %1167 = vmatpush1.bf16.msra.mxu0 %v1134
        %1168 = vmatprep.subr.bf16.mxu0 0
        %1169 = vmatpush1.bf16.msra.mxu0 0
        %1170 = vmatprep.subr.bf16.mxu0 0
        %1171 = vmatpush1.bf16.msra.mxu0 0
        %1172 = vmatprep.subr.bf16.mxu0 0
        %1173 = vmatpush1.bf16.msra.mxu0 0
        %1174 = vmatprep.subr.bf16.mxu0 0
        %1175 = vmatpush1.bf16.msra.mxu0 0
        %1176 = vmatprep.subr.bf16.mxu0 0
        %1177 = vmatpush1.bf16.msra.mxu0 0
        %1178 = vmatprep.subr.bf16.mxu0 0
        %1179 = vmatpush1.bf16.msra.mxu0 0
        %1180 = vmatprep.subr.bf16.mxu0 0
        %1181 = vmatpush1.bf16.msra.mxu0 0
        %1182 = vmatprep.subr.bf16.mxu0 0
        %1183 = vmatpush1.bf16.msra.mxu0 0
        %1184 = vmatprep.mubr.bf16.mxu0 0
        %1185 = vmatmul.mubr.bf16.gmra.mrb[0].mxu0 %v859
        %v1186 = vpop.f32.mrb[0].mxu0
        %v1187 = vadd.f32 %v1065, %v1186
        %v1188 = vpop.f32.mrb[0].mxu0
        %v1189 = vadd.f32 %v1069, %v1188
        %v1190 = vpop.f32.mrb[0].mxu0
        %v1191 = vadd.f32 %v1065, %v1190
        %v1192 = vpop.f32.mrb[0].mxu0
        %v1193 = vadd.f32 %v1069, %v1192
        %1194 = vmatprep.mubr.bf16.mxu0 0
        %1195 = vmatmul.mubr.bf16.gmra.mrb[0].mxu0 %v860
        %v1196 = vpop.f32.mrb[0].mxu0
        %v1197 = vadd.f32 %v1065, %v1196
        %v1198 = vpop.f32.mrb[0].mxu0
        %v1199 = vadd.f32 %v1069, %v1198
        %v1200 = vpop.f32.mrb[0].mxu0
        %v1201 = vadd.f32 %v1065, %v1200
        %v1202 = vpop.f32.mrb[0].mxu0
        %v1203 = vadd.f32 %v1069, %v1202
        %1204 = vmatprep.mubr.bf16.mxu0 0
        %1205 = vmatmul.mubr.bf16.gmra.mrb[0].mxu0 %v861
        %v1206 = vpop.f32.mrb[0].mxu0
        %v1207 = vadd.f32 %v1065, %v1206
        %v1208 = vpop.f32.mrb[0].mxu0
        %v1209 = vadd.f32 %v1069, %v1208
        %v1210 = vpop.f32.mrb[0].mxu0
        %v1211 = vadd.f32 %v1065, %v1210
        %v1212 = vpop.f32.mrb[0].mxu0
        %v1213 = vadd.f32 %v1069, %v1212
        %1214 = vmatprep.mubr.bf16.mxu0 0
        %1215 = vmatmul.mubr.bf16.gmra.mrb[0].mxu0 %v862
        %v1216 = vpop.f32.mrb[0].mxu0
        %v1217 = vadd.f32 %v1065, %v1216
        %v1218 = vpop.f32.mrb[0].mxu0
        %v1219 = vadd.f32 %v1069, %v1218
        %v1220 = vpop.f32.mrb[0].mxu0
        %v1221 = vadd.f32 %v1065, %v1220
        %v1222 = vpop.f32.mrb[0].mxu0
        %v1223 = vadd.f32 %v1069, %v1222
        %1224 = vdwg.mxu0
        %v1225 = vmul.f32 %v1187, 0.5
        %v1226 = vmul.f32 %v1189, 0.5
        %v1227 = vmul.f32 %v1191, 0.5
        %v1228 = vmul.f32 %v1193, 0.5
        %v1229 = vmul.f32 %v1197, 0.5
        %v1230 = vmul.f32 %v1199, 0.5
        %v1231 = vmul.f32 %v1201, 0.5
        %v1232 = vmul.f32 %v1203, 0.5
        %v1233 = vmul.f32 %v1207, 0.5
        %v1234 = vmul.f32 %v1209, 0.5
        %v1235 = vmul.f32 %v1211, 0.5
        %v1236 = vmul.f32 %v1213, 0.5
        %v1237 = vmul.f32 %v1217, 0.5
        %v1238 = vmul.f32 %v1219, 0.5
        %v1239 = vmul.f32 %v1221, 0.5
        %v1240 = vmul.f32 %v1223, 0.5
        %v1241 = vtanh.pop %v1225
        %v1242 = vtanh.pop %v1226
        %v1243 = vtanh.pop %v1227
        %v1244 = vtanh.pop %v1228
        %v1245 = vtanh.pop %v1229
        %v1246 = vtanh.pop %v1230
        %v1247 = vtanh.pop %v1231
        %v1248 = vtanh.pop %v1232
        %v1249 = vtanh.pop %v1233
        %v1250 = vtanh.pop %v1234
        %v1251 = vtanh.pop %v1235
        %v1252 = vtanh.pop %v1236
        %v1253 = vtanh.pop %v1237
        %v1254 = vtanh.pop %v1238
        %v1255 = vtanh.pop %v1239
        %v1256 = vtanh.pop %v1240
        %v1257 = vmul.f32 %v1241, 0.5
        %v1258 = vmul.f32 %v1242, 0.5
        %v1259 = vmul.f32 %v1243, 0.5
        %v1260 = vmul.f32 %v1244, 0.5
        %v1261 = vmul.f32 %v1245, 0.5
        %v1262 = vmul.f32 %v1246, 0.5
        %v1263 = vmul.f32 %v1247, 0.5
        %v1264 = vmul.f32 %v1248, 0.5
        %v1265 = vmul.f32 %v1249, 0.5
        %v1266 = vmul.f32 %v1250, 0.5
        %v1267 = vmul.f32 %v1251, 0.5
        %v1268 = vmul.f32 %v1252, 0.5
        %v1269 = vmul.f32 %v1253, 0.5
        %v1270 = vmul.f32 %v1254, 0.5
        %v1271 = vmul.f32 %v1255, 0.5
        %v1272 = vmul.f32 %v1256, 0.5
        %v1273 = vadd.f32 %v1257, 0.5
        %v1274 = vadd.f32 %v1258, 0.5
        %v1275 = vadd.f32 %v1259, 0.5
        %v1276 = vadd.f32 %v1260, 0.5
        %v1277 = vadd.f32 %v1261, 0.5
        %v1278 = vadd.f32 %v1262, 0.5
        %v1279 = vadd.f32 %v1263, 0.5
        %v1280 = vadd.f32 %v1264, 0.5
        %v1281 = vadd.f32 %v1265, 0.5
        %v1282 = vadd.f32 %v1266, 0.5
        %v1283 = vadd.f32 %v1267, 0.5
        %v1284 = vadd.f32 %v1268, 0.5
        %v1285 = vadd.f32 %v1269, 0.5
        %v1286 = vadd.f32 %v1270, 0.5
        %v1287 = vadd.f32 %v1271, 0.5
        %v1288 = vadd.f32 %v1272, 0.5
        %v1289 = vmul.f32 %v1006, %v1273
        %v1290 = vmul.f32 %v1008, %v1274
        %v1291 = vmul.f32 %v1010, %v1275
        %v1292 = vmul.f32 %v1012, %v1276
        %v1293 = vmul.f32 %v1016, %v1277
        %v1294 = vmul.f32 %v1018, %v1278
        %v1295 = vmul.f32 %v1020, %v1279
        %v1296 = vmul.f32 %v1022, %v1280
        %v1297 = vmul.f32 %v1026, %v1281
        %v1298 = vmul.f32 %v1028, %v1282
        %v1299 = vmul.f32 %v1030, %v1283
        %v1300 = vmul.f32 %v1032, %v1284
        %v1301 = vmul.f32 %v1036, %v1285
        %v1302 = vmul.f32 %v1038, %v1286
        %v1303 = vmul.f32 %v1040, %v1287
        %v1304 = vmul.f32 %v1042, %v1288
        %v1305 = vlaneseq
        %v1306 = vshrl.u32 %v1305, 7
        %v1307 = vadd.s32 %v1306, 8
        %v1308 = vadd.s32 %v1306, 16
        %v1309 = vadd.s32 %v1306, 24
        %v1310 = vadd.s32 %v1306, 32
        %v1311 = vadd.s32 %v1306, 40
        %v1312 = vadd.s32 %v1306, 48
        %v1313 = vadd.s32 %v1306, 56
        %s1314 = smul.u32 %s43, 32
        %s1315 = ssub.s32 %s1314, 16
        %v1316 = vstv %s1315
        %v1317 = vadd.s32 %v1306, %v1316
        %v1318 = vadd.s32 %v1307, %v1316
        %v1319 = vadd.s32 %v1308, %v1316
        %v1320 = vadd.s32 %v1309, %v1316
        %v1321 = vadd.s32 %v1310, %v1316
        %v1322 = vadd.s32 %v1311, %v1316
        %v1323 = vadd.s32 %v1312, %v1316
        %v1324 = vadd.s32 %v1313, %v1316
        %vm1325 = vcmp.ge.s32.totalorder %v1317, 0
        %vm1326 = vcmp.ge.s32.totalorder %v1318, 0
        %vm1327 = vcmp.ge.s32.totalorder %v1319, 0
        %vm1328 = vcmp.ge.s32.totalorder %v1320, 0
        %vm1329 = vcmp.ge.s32.totalorder %v1321, 0
        %vm1330 = vcmp.ge.s32.totalorder %v1322, 0
        %vm1331 = vcmp.ge.s32.totalorder %v1323, 0
        %vm1332 = vcmp.ge.s32.totalorder %v1324, 0
        %vm1333 = vcmp.lt.s32.totalorder %v1317, 48
        %vm1334 = vcmp.lt.s32.totalorder %v1318, 48
        %vm1335 = vcmp.lt.s32.totalorder %v1319, 48
        %vm1336 = vcmp.lt.s32.totalorder %v1320, 48
        %vm1337 = vcmp.lt.s32.totalorder %v1321, 48
        %vm1338 = vcmp.lt.s32.totalorder %v1322, 48
        %vm1339 = vcmp.lt.s32.totalorder %v1323, 48
        %vm1340 = vcmp.lt.s32.totalorder %v1324, 48
        %vm1341 = vmand %vm1325, %vm1333
        %vm1342 = vmand %vm1326, %vm1334
        %vm1343 = vmand %vm1327, %vm1335
        %vm1344 = vmand %vm1328, %vm1336
        %vm1345 = vmand %vm1329, %vm1337
        %vm1346 = vmand %vm1330, %vm1338
        %vm1347 = vmand %vm1331, %vm1339
        %vm1348 = vmand %vm1332, %vm1340
        %v1349 = vsel %vm1341, 1, 0
        %v1350 = vsel %vm1342, 1, 0
        %v1351 = vsel %vm1343, 1, 0
        %v1352 = vsel %vm1344, 1, 0
        %v1353 = vsel %vm1345, 1, 0
        %v1354 = vsel %vm1346, 1, 0
        %v1355 = vsel %vm1347, 1, 0
        %v1356 = vsel %vm1348, 1, 0
        %v1357 = vcvt.s32.f32 %v1349
        %v1358 = vcvt.s32.f32 %v1350
        %v1359 = vcvt.s32.f32 %v1351
        %v1360 = vcvt.s32.f32 %v1352
        %v1361 = vcvt.s32.f32 %v1353
        %v1362 = vcvt.s32.f32 %v1354
        %v1363 = vcvt.s32.f32 %v1355
        %v1364 = vcvt.s32.f32 %v1356
        %v1365 = vmul.f32 %v1289, %v1357
        %v1366 = vmul.f32 %v1290, %v1357
        %v1367 = vmul.f32 %v1291, %v1358
        %v1368 = vmul.f32 %v1292, %v1358
        %v1369 = vmul.f32 %v1293, %v1359
        %v1370 = vmul.f32 %v1294, %v1359
        %v1371 = vmul.f32 %v1295, %v1360
        %v1372 = vmul.f32 %v1296, %v1360
        %v1373 = vmul.f32 %v1297, %v1361
        %v1374 = vmul.f32 %v1298, %v1361
        %v1375 = vmul.f32 %v1299, %v1362
        %v1376 = vmul.f32 %v1300, %v1362
        %v1377 = vmul.f32 %v1301, %v1363
        %v1378 = vmul.f32 %v1302, %v1363
        %v1379 = vmul.f32 %v1303, %v1364
        %v1380 = vmul.f32 %v1304, %v1364
        %v1381 = vld [vmem:[#allocation18] sm:$0xff]
        %v1382 = vld [vmem:[#allocation18 + $0x8] sm:$0xff]
        %v1383 = vld [vmem:[#allocation18 + $0x10] sm:$0xff]
        %v1384 = vld [vmem:[#allocation18 + $0x18] sm:$0xff]
        %v1385 = vld [vmem:[#allocation18 + $0x20] sm:$0xff]
        %v1386 = vld [vmem:[#allocation18 + $0x28] sm:$0xff]
        %v1387 = vld [vmem:[#allocation18 + $0x30] sm:$0x7f]
        %v1388 = vld [vmem:[#allocation18 + $0x38] sm:$0x7f]
        %v1389 = vlaneseq
        %v1390 = vshrl.u32 %v1389, 7
        %v1391 = vsub.s32 7, %v1390
        %v1392 = vrot.slane %v1381, %v1391
        %v1393 = vlaneseq
        %v1394 = vshrl.u32 %v1393, 7
        %v1395 = vsub.s32 7, %v1394
        %v1396 = vrot.slane %v1382, %v1395
        %v1397 = vmul.f32 %v1367, %v1392
        %v1398 = vmul.f32 %v1368, %v1396
        %v1399 = vmul.f32 %v1369, %v1392
        %v1400 = vmul.f32 %v1370, %v1396
        %v1401 = vmul.f32 %v1371, %v1392
        %v1402 = vmul.f32 %v1372, %v1396
        %v1403 = vmul.f32 %v1373, %v1392
        %v1404 = vmul.f32 %v1374, %v1396
        %v1405 = vadd.f32 %v1397, 0.0
        %v1406 = vadd.f32 %v1398, 0.0
        %v1407 = vadd.f32 %v1399, 0.0
        %v1408 = vadd.f32 %v1400, 0.0
        %v1409 = vadd.f32 %v1401, 0.0
        %v1410 = vadd.f32 %v1402, 0.0
        %v1411 = vadd.f32 %v1403, 0.0
        %v1412 = vadd.f32 %v1404, 0.0
        %v1413 = vlaneseq
        %v1414 = vshrl.u32 %v1413, 7
        %v1415 = vsub.s32 7, %v1414
        %v1416 = vrot.slane %v1383, %v1415
        %v1417 = vlaneseq
        %v1418 = vshrl.u32 %v1417, 7
        %v1419 = vsub.s32 7, %v1418
        %v1420 = vrot.slane %v1384, %v1419
        %v1421 = vmul.f32 %v1369, %v1416
        %v1422 = vmul.f32 %v1370, %v1420
        %v1423 = vmul.f32 %v1371, %v1416
        %v1424 = vmul.f32 %v1372, %v1420
        %v1425 = vmul.f32 %v1373, %v1416
        %v1426 = vmul.f32 %v1374, %v1420
        %v1427 = vmul.f32 %v1375, %v1416
        %v1428 = vmul.f32 %v1376, %v1420
        %v1429 = vadd.f32 %v1405, %v1421
        %v1430 = vadd.f32 %v1406, %v1422
        %v1431 = vadd.f32 %v1407, %v1423
        %v1432 = vadd.f32 %v1408, %v1424
        %v1433 = vadd.f32 %v1409, %v1425
        %v1434 = vadd.f32 %v1410, %v1426
        %v1435 = vadd.f32 %v1411, %v1427
        %v1436 = vadd.f32 %v1412, %v1428
        %v1437 = vlaneseq
        %v1438 = vshrl.u32 %v1437, 7
        %v1439 = vsub.s32 7, %v1438
        %v1440 = vrot.slane %v1385, %v1439
        %v1441 = vlaneseq
        %v1442 = vshrl.u32 %v1441, 7
        %v1443 = vsub.s32 7, %v1442
        %v1444 = vrot.slane %v1386, %v1443
        %v1445 = vmul.f32 %v1371, %v1440
        %v1446 = vmul.f32 %v1372, %v1444
        %v1447 = vmul.f32 %v1373, %v1440
        %v1448 = vmul.f32 %v1374, %v1444
        %v1449 = vmul.f32 %v1375, %v1440
        %v1450 = vmul.f32 %v1376, %v1444
        %v1451 = vmul.f32 %v1377, %v1440
        %v1452 = vmul.f32 %v1378, %v1444
        %v1453 = vadd.f32 %v1429, %v1445
        %v1454 = vadd.f32 %v1430, %v1446
        %v1455 = vadd.f32 %v1431, %v1447
        %v1456 = vadd.f32 %v1432, %v1448
        %v1457 = vadd.f32 %v1433, %v1449
        %v1458 = vadd.f32 %v1434, %v1450
        %v1459 = vadd.f32 %v1435, %v1451
        %v1460 = vadd.f32 %v1436, %v1452
        %v1461 = vrot.slane %v1365, 1
        %v1462 = vrot.slane %v1366, 1
        %v1463 = vrot.slane %v1367, 1
        %v1464 = vrot.slane %v1368, 1
        %v1465 = vrot.slane %v1369, 1
        %v1466 = vrot.slane %v1370, 1
        %v1467 = vrot.slane %v1371, 1
        %v1468 = vrot.slane %v1372, 1
        %v1469 = vrot.slane %v1373, 1
        %v1470 = vrot.slane %v1374, 1
        %v1471 = vrot.slane %v1375, 1
        %v1472 = vrot.slane %v1376, 1
        %v1473 = vrot.slane %v1377, 1
        %v1474 = vrot.slane %v1378, 1
        %v1475 = vrot.slane %v1379, 1
        %v1476 = vrot.slane %v1380, 1
        %vm1477 = vcmp.lt.s32.totalorder %v1306, 7
        %v1478 = vsel %vm1477, %v1473, %v1475
        %v1479 = vsel %vm1477, %v1474, %v1476
        %v1480 = vsel %vm1477, %v1471, %v1473
        %v1481 = vsel %vm1477, %v1472, %v1474
        %v1482 = vsel %vm1477, %v1469, %v1471
        %v1483 = vsel %vm1477, %v1470, %v1472
        %v1484 = vsel %vm1477, %v1467, %v1469
        %v1485 = vsel %vm1477, %v1468, %v1470
        %v1486 = vsel %vm1477, %v1465, %v1467
        %v1487 = vsel %vm1477, %v1466, %v1468
        %v1488 = vsel %vm1477, %v1463, %v1465
        %v1489 = vsel %vm1477, %v1464, %v1466
        %v1490 = vsel %vm1477, %v1461, %v1463
        %v1491 = vsel %vm1477, %v1462, %v1464
        %v1492 = vlaneseq
        %v1493 = vshrl.u32 %v1492, 7
        %v1494 = vsub.s32 0, %v1493
        %v1495 = vrot.slane %v1381, %v1494
        %v1496 = vlaneseq
        %v1497 = vshrl.u32 %v1496, 7
        %v1498 = vsub.s32 0, %v1497
        %v1499 = vrot.slane %v1382, %v1498
        %v1500 = vmul.f32 %v1490, %v1495
        %v1501 = vmul.f32 %v1491, %v1499
        %v1502 = vmul.f32 %v1488, %v1495
        %v1503 = vmul.f32 %v1489, %v1499
        %v1504 = vmul.f32 %v1486, %v1495
        %v1505 = vmul.f32 %v1487, %v1499
        %v1506 = vmul.f32 %v1484, %v1495
        %v1507 = vmul.f32 %v1485, %v1499
        %v1508 = vadd.f32 %v1453, %v1500
        %v1509 = vadd.f32 %v1454, %v1501
        %v1510 = vadd.f32 %v1455, %v1502
        %v1511 = vadd.f32 %v1456, %v1503
        %v1512 = vadd.f32 %v1457, %v1504
        %v1513 = vadd.f32 %v1458, %v1505
        %v1514 = vadd.f32 %v1459, %v1506
        %v1515 = vadd.f32 %v1460, %v1507
        %v1516 = vlaneseq
        %v1517 = vshrl.u32 %v1516, 7
        %v1518 = vsub.s32 0, %v1517
        %v1519 = vrot.slane %v1383, %v1518
        %v1520 = vlaneseq
        %v1521 = vshrl.u32 %v1520, 7
        %v1522 = vsub.s32 0, %v1521
        %v1523 = vrot.slane %v1384, %v1522
        %v1524 = vmul.f32 %v1488, %v1519
        %v1525 = vmul.f32 %v1489, %v1523
        %v1526 = vmul.f32 %v1486, %v1519
        %v1527 = vmul.f32 %v1487, %v1523
        %v1528 = vmul.f32 %v1484, %v1519
        %v1529 = vmul.f32 %v1485, %v1523
        %v1530 = vmul.f32 %v1482, %v1519
        %v1531 = vmul.f32 %v1483, %v1523
        %v1532 = vadd.f32 %v1508, %v1524
        %v1533 = vadd.f32 %v1509, %v1525
        %v1534 = vadd.f32 %v1510, %v1526
        %v1535 = vadd.f32 %v1511, %v1527
        %v1536 = vadd.f32 %v1512, %v1528
        %v1537 = vadd.f32 %v1513, %v1529
        %v1538 = vadd.f32 %v1514, %v1530
        %v1539 = vadd.f32 %v1515, %v1531
        %v1540 = vlaneseq
        %v1541 = vshrl.u32 %v1540, 7
        %v1542 = vsub.s32 0, %v1541
        %v1543 = vrot.slane %v1385, %v1542
        %v1544 = vlaneseq
        %v1545 = vshrl.u32 %v1544, 7
        %v1546 = vsub.s32 0, %v1545
        %v1547 = vrot.slane %v1386, %v1546
        %v1548 = vmul.f32 %v1486, %v1543
        %v1549 = vmul.f32 %v1487, %v1547
        %v1550 = vmul.f32 %v1484, %v1543
        %v1551 = vmul.f32 %v1485, %v1547
        %v1552 = vmul.f32 %v1482, %v1543
        %v1553 = vmul.f32 %v1483, %v1547
        %v1554 = vmul.f32 %v1480, %v1543
        %v1555 = vmul.f32 %v1481, %v1547
        %v1556 = vadd.f32 %v1532, %v1548
        %v1557 = vadd.f32 %v1533, %v1549
        %v1558 = vadd.f32 %v1534, %v1550
        %v1559 = vadd.f32 %v1535, %v1551
        %v1560 = vadd.f32 %v1536, %v1552
        %v1561 = vadd.f32 %v1537, %v1553
        %v1562 = vadd.f32 %v1538, %v1554
        %v1563 = vadd.f32 %v1539, %v1555
        %v1564 = vlaneseq
        %v1565 = vshrl.u32 %v1564, 7
        %v1566 = vsub.s32 0, %v1565
        %v1567 = vrot.slane %v1387, %v1566
        %v1568 = vlaneseq
        %v1569 = vshrl.u32 %v1568, 7
        %v1570 = vsub.s32 0, %v1569
        %v1571 = vrot.slane %v1388, %v1570
        %v1572 = vmul.f32 %v1484, %v1567
        %v1573 = vmul.f32 %v1485, %v1571
        %v1574 = vmul.f32 %v1482, %v1567
        %v1575 = vmul.f32 %v1483, %v1571
        %v1576 = vmul.f32 %v1480, %v1567
        %v1577 = vmul.f32 %v1481, %v1571
        %v1578 = vmul.f32 %v1478, %v1567
        %v1579 = vmul.f32 %v1479, %v1571
        %v1580 = vadd.f32 %v1556, %v1572
        %v1581 = vadd.f32 %v1557, %v1573
        %v1582 = vadd.f32 %v1558, %v1574
        %v1583 = vadd.f32 %v1559, %v1575
        %v1584 = vadd.f32 %v1560, %v1576
        %v1585 = vadd.f32 %v1561, %v1577
        %v1586 = vadd.f32 %v1562, %v1578
        %v1587 = vadd.f32 %v1563, %v1579
        %v1588 = vrot.slane %v1365, 2
        %v1589 = vrot.slane %v1366, 2
        %v1590 = vrot.slane %v1367, 2
        %v1591 = vrot.slane %v1368, 2
        %v1592 = vrot.slane %v1369, 2
        %v1593 = vrot.slane %v1370, 2
        %v1594 = vrot.slane %v1371, 2
        %v1595 = vrot.slane %v1372, 2
        %v1596 = vrot.slane %v1373, 2
        %v1597 = vrot.slane %v1374, 2
        %v1598 = vrot.slane %v1375, 2
        %v1599 = vrot.slane %v1376, 2
        %v1600 = vrot.slane %v1377, 2
        %v1601 = vrot.slane %v1378, 2
        %v1602 = vrot.slane %v1379, 2
        %v1603 = vrot.slane %v1380, 2
        %vm1604 = vcmp.lt.s32.totalorder %v1306, 6
        %v1605 = vsel %vm1604, %v1600, %v1602
        %v1606 = vsel %vm1604, %v1601, %v1603
        %v1607 = vsel %vm1604, %v1598, %v1600
        %v1608 = vsel %vm1604, %v1599, %v1601
        %v1609 = vsel %vm1604, %v1596, %v1598
        %v1610 = vsel %vm1604, %v1597, %v1599
        %v1611 = vsel %vm1604, %v1594, %v1596
        %v1612 = vsel %vm1604, %v1595, %v1597
        %v1613 = vsel %vm1604, %v1592, %v1594
        %v1614 = vsel %vm1604, %v1593, %v1595
        %v1615 = vsel %vm1604, %v1590, %v1592
        %v1616 = vsel %vm1604, %v1591, %v1593
        %v1617 = vsel %vm1604, %v1588, %v1590
        %v1618 = vsel %vm1604, %v1589, %v1591
        %v1619 = vlaneseq
        %v1620 = vshrl.u32 %v1619, 7
        %v1621 = vsub.s32 1, %v1620
        %v1622 = vrot.slane %v1381, %v1621
        %v1623 = vlaneseq
        %v1624 = vshrl.u32 %v1623, 7
        %v1625 = vsub.s32 1, %v1624
        %v1626 = vrot.slane %v1382, %v1625
        %v1627 = vmul.f32 %v1617, %v1622
        %v1628 = vmul.f32 %v1618, %v1626
        %v1629 = vmul.f32 %v1615, %v1622
        %v1630 = vmul.f32 %v1616, %v1626
        %v1631 = vmul.f32 %v1613, %v1622
        %v1632 = vmul.f32 %v1614, %v1626
        %v1633 = vmul.f32 %v1611, %v1622
        %v1634 = vmul.f32 %v1612, %v1626
        %v1635 = vadd.f32 %v1580, %v1627
        %v1636 = vadd.f32 %v1581, %v1628
        %v1637 = vadd.f32 %v1582, %v1629
        %v1638 = vadd.f32 %v1583, %v1630
        %v1639 = vadd.f32 %v1584, %v1631
        %v1640 = vadd.f32 %v1585, %v1632
        %v1641 = vadd.f32 %v1586, %v1633
        %v1642 = vadd.f32 %v1587, %v1634
        %v1643 = vlaneseq
        %v1644 = vshrl.u32 %v1643, 7
        %v1645 = vsub.s32 1, %v1644
        %v1646 = vrot.slane %v1383, %v1645
        %v1647 = vlaneseq
        %v1648 = vshrl.u32 %v1647, 7
        %v1649 = vsub.s32 1, %v1648
        %v1650 = vrot.slane %v1384, %v1649
        %v1651 = vmul.f32 %v1615, %v1646
        %v1652 = vmul.f32 %v1616, %v1650
        %v1653 = vmul.f32 %v1613, %v1646
        %v1654 = vmul.f32 %v1614, %v1650
        %v1655 = vmul.f32 %v1611, %v1646
        %v1656 = vmul.f32 %v1612, %v1650
        %v1657 = vmul.f32 %v1609, %v1646
        %v1658 = vmul.f32 %v1610, %v1650
        %v1659 = vadd.f32 %v1635, %v1651
        %v1660 = vadd.f32 %v1636, %v1652
        %v1661 = vadd.f32 %v1637, %v1653
        %v1662 = vadd.f32 %v1638, %v1654
        %v1663 = vadd.f32 %v1639, %v1655
        %v1664 = vadd.f32 %v1640, %v1656
        %v1665 = vadd.f32 %v1641, %v1657
        %v1666 = vadd.f32 %v1642, %v1658
        %v1667 = vlaneseq
        %v1668 = vshrl.u32 %v1667, 7
        %v1669 = vsub.s32 1, %v1668
        %v1670 = vrot.slane %v1385, %v1669
        %v1671 = vlaneseq
        %v1672 = vshrl.u32 %v1671, 7
        %v1673 = vsub.s32 1, %v1672
        %v1674 = vrot.slane %v1386, %v1673
        %v1675 = vmul.f32 %v1613, %v1670
        %v1676 = vmul.f32 %v1614, %v1674
        %v1677 = vmul.f32 %v1611, %v1670
        %v1678 = vmul.f32 %v1612, %v1674
        %v1679 = vmul.f32 %v1609, %v1670
        %v1680 = vmul.f32 %v1610, %v1674
        %v1681 = vmul.f32 %v1607, %v1670
        %v1682 = vmul.f32 %v1608, %v1674
        %v1683 = vadd.f32 %v1659, %v1675
        %v1684 = vadd.f32 %v1660, %v1676
        %v1685 = vadd.f32 %v1661, %v1677
        %v1686 = vadd.f32 %v1662, %v1678
        %v1687 = vadd.f32 %v1663, %v1679
        %v1688 = vadd.f32 %v1664, %v1680
        %v1689 = vadd.f32 %v1665, %v1681
        %v1690 = vadd.f32 %v1666, %v1682
        %v1691 = vlaneseq
        %v1692 = vshrl.u32 %v1691, 7
        %v1693 = vsub.s32 1, %v1692
        %v1694 = vrot.slane %v1387, %v1693
        %v1695 = vlaneseq
        %v1696 = vshrl.u32 %v1695, 7
        %v1697 = vsub.s32 1, %v1696
        %v1698 = vrot.slane %v1388, %v1697
        %v1699 = vmul.f32 %v1611, %v1694
        %v1700 = vmul.f32 %v1612, %v1698
        %v1701 = vmul.f32 %v1609, %v1694
        %v1702 = vmul.f32 %v1610, %v1698
        %v1703 = vmul.f32 %v1607, %v1694
        %v1704 = vmul.f32 %v1608, %v1698
        %v1705 = vmul.f32 %v1605, %v1694
        %v1706 = vmul.f32 %v1606, %v1698
        %v1707 = vadd.f32 %v1683, %v1699
        %v1708 = vadd.f32 %v1684, %v1700
        %v1709 = vadd.f32 %v1685, %v1701
        %v1710 = vadd.f32 %v1686, %v1702
        %v1711 = vadd.f32 %v1687, %v1703
        %v1712 = vadd.f32 %v1688, %v1704
        %v1713 = vadd.f32 %v1689, %v1705
        %v1714 = vadd.f32 %v1690, %v1706
        %v1715 = vrot.slane %v1365, 3
        %v1716 = vrot.slane %v1366, 3
        %v1717 = vrot.slane %v1367, 3
        %v1718 = vrot.slane %v1368, 3
        %v1719 = vrot.slane %v1369, 3
        %v1720 = vrot.slane %v1370, 3
        %v1721 = vrot.slane %v1371, 3
        %v1722 = vrot.slane %v1372, 3
        %v1723 = vrot.slane %v1373, 3
        %v1724 = vrot.slane %v1374, 3
        %v1725 = vrot.slane %v1375, 3
        %v1726 = vrot.slane %v1376, 3
        %v1727 = vrot.slane %v1377, 3
        %v1728 = vrot.slane %v1378, 3
        %v1729 = vrot.slane %v1379, 3
        %v1730 = vrot.slane %v1380, 3
        %vm1731 = vcmp.lt.s32.totalorder %v1306, 5
        %v1732 = vsel %vm1731, %v1727, %v1729
        %v1733 = vsel %vm1731, %v1728, %v1730
        %v1734 = vsel %vm1731, %v1725, %v1727
        %v1735 = vsel %vm1731, %v1726, %v1728
        %v1736 = vsel %vm1731, %v1723, %v1725
        %v1737 = vsel %vm1731, %v1724, %v1726
        %v1738 = vsel %vm1731, %v1721, %v1723
        %v1739 = vsel %vm1731, %v1722, %v1724
        %v1740 = vsel %vm1731, %v1719, %v1721
        %v1741 = vsel %vm1731, %v1720, %v1722
        %v1742 = vsel %vm1731, %v1717, %v1719
        %v1743 = vsel %vm1731, %v1718, %v1720
        %v1744 = vsel %vm1731, %v1715, %v1717
        %v1745 = vsel %vm1731, %v1716, %v1718
        %v1746 = vlaneseq
        %v1747 = vshrl.u32 %v1746, 7
        %v1748 = vsub.s32 2, %v1747
        %v1749 = vrot.slane %v1381, %v1748
        %v1750 = vlaneseq
        %v1751 = vshrl.u32 %v1750, 7
        %v1752 = vsub.s32 2, %v1751
        %v1753 = vrot.slane %v1382, %v1752
        %v1754 = vmul.f32 %v1744, %v1749
        %v1755 = vmul.f32 %v1745, %v1753
        %v1756 = vmul.f32 %v1742, %v1749
        %v1757 = vmul.f32 %v1743, %v1753
        %v1758 = vmul.f32 %v1740, %v1749
        %v1759 = vmul.f32 %v1741, %v1753
        %v1760 = vmul.f32 %v1738, %v1749
        %v1761 = vmul.f32 %v1739, %v1753
        %v1762 = vadd.f32 %v1707, %v1754
        %v1763 = vadd.f32 %v1708, %v1755
        %v1764 = vadd.f32 %v1709, %v1756
        %v1765 = vadd.f32 %v1710, %v1757
        %v1766 = vadd.f32 %v1711, %v1758
        %v1767 = vadd.f32 %v1712, %v1759
        %v1768 = vadd.f32 %v1713, %v1760
        %v1769 = vadd.f32 %v1714, %v1761
        %v1770 = vlaneseq
        %v1771 = vshrl.u32 %v1770, 7
        %v1772 = vsub.s32 2, %v1771
        %v1773 = vrot.slane %v1383, %v1772
        %v1774 = vlaneseq
        %v1775 = vshrl.u32 %v1774, 7
        %v1776 = vsub.s32 2, %v1775
        %v1777 = vrot.slane %v1384, %v1776
        %v1778 = vmul.f32 %v1742, %v1773
        %v1779 = vmul.f32 %v1743, %v1777
        %v1780 = vmul.f32 %v1740, %v1773
        %v1781 = vmul.f32 %v1741, %v1777
        %v1782 = vmul.f32 %v1738, %v1773
        %v1783 = vmul.f32 %v1739, %v1777
        %v1784 = vmul.f32 %v1736, %v1773
        %v1785 = vmul.f32 %v1737, %v1777
        %v1786 = vadd.f32 %v1762, %v1778
        %v1787 = vadd.f32 %v1763, %v1779
        %v1788 = vadd.f32 %v1764, %v1780
        %v1789 = vadd.f32 %v1765, %v1781
        %v1790 = vadd.f32 %v1766, %v1782
        %v1791 = vadd.f32 %v1767, %v1783
        %v1792 = vadd.f32 %v1768, %v1784
        %v1793 = vadd.f32 %v1769, %v1785
        %v1794 = vlaneseq
        %v1795 = vshrl.u32 %v1794, 7
        %v1796 = vsub.s32 2, %v1795
        %v1797 = vrot.slane %v1385, %v1796
        %v1798 = vlaneseq
        %v1799 = vshrl.u32 %v1798, 7
        %v1800 = vsub.s32 2, %v1799
        %v1801 = vrot.slane %v1386, %v1800
        %v1802 = vmul.f32 %v1740, %v1797
        %v1803 = vmul.f32 %v1741, %v1801
        %v1804 = vmul.f32 %v1738, %v1797
        %v1805 = vmul.f32 %v1739, %v1801
        %v1806 = vmul.f32 %v1736, %v1797
        %v1807 = vmul.f32 %v1737, %v1801
        %v1808 = vmul.f32 %v1734, %v1797
        %v1809 = vmul.f32 %v1735, %v1801
        %v1810 = vadd.f32 %v1786, %v1802
        %v1811 = vadd.f32 %v1787, %v1803
        %v1812 = vadd.f32 %v1788, %v1804
        %v1813 = vadd.f32 %v1789, %v1805
        %v1814 = vadd.f32 %v1790, %v1806
        %v1815 = vadd.f32 %v1791, %v1807
        %v1816 = vadd.f32 %v1792, %v1808
        %v1817 = vadd.f32 %v1793, %v1809
        %v1818 = vlaneseq
        %v1819 = vshrl.u32 %v1818, 7
        %v1820 = vsub.s32 2, %v1819
        %v1821 = vrot.slane %v1387, %v1820
        %v1822 = vlaneseq
        %v1823 = vshrl.u32 %v1822, 7
        %v1824 = vsub.s32 2, %v1823
        %v1825 = vrot.slane %v1388, %v1824
        %v1826 = vmul.f32 %v1738, %v1821
        %v1827 = vmul.f32 %v1739, %v1825
        %v1828 = vmul.f32 %v1736, %v1821
        %v1829 = vmul.f32 %v1737, %v1825
        %v1830 = vmul.f32 %v1734, %v1821
        %v1831 = vmul.f32 %v1735, %v1825
        %v1832 = vmul.f32 %v1732, %v1821
        %v1833 = vmul.f32 %v1733, %v1825
        %v1834 = vadd.f32 %v1810, %v1826
        %v1835 = vadd.f32 %v1811, %v1827
        %v1836 = vadd.f32 %v1812, %v1828
        %v1837 = vadd.f32 %v1813, %v1829
        %v1838 = vadd.f32 %v1814, %v1830
        %v1839 = vadd.f32 %v1815, %v1831
        %v1840 = vadd.f32 %v1816, %v1832
        %v1841 = vadd.f32 %v1817, %v1833
        %v1842 = vrot.slane %v1365, 4
        %v1843 = vrot.slane %v1366, 4
        %v1844 = vrot.slane %v1367, 4
        %v1845 = vrot.slane %v1368, 4
        %v1846 = vrot.slane %v1369, 4
        %v1847 = vrot.slane %v1370, 4
        %v1848 = vrot.slane %v1371, 4
        %v1849 = vrot.slane %v1372, 4
        %v1850 = vrot.slane %v1373, 4
        %v1851 = vrot.slane %v1374, 4
        %v1852 = vrot.slane %v1375, 4
        %v1853 = vrot.slane %v1376, 4
        %v1854 = vrot.slane %v1377, 4
        %v1855 = vrot.slane %v1378, 4
        %v1856 = vrot.slane %v1379, 4
        %v1857 = vrot.slane %v1380, 4
        %vm1858 = vcmp.lt.s32.totalorder %v1306, 4
        %v1859 = vsel %vm1858, %v1854, %v1856
        %v1860 = vsel %vm1858, %v1855, %v1857
        %v1861 = vsel %vm1858, %v1852, %v1854
        %v1862 = vsel %vm1858, %v1853, %v1855
        %v1863 = vsel %vm1858, %v1850, %v1852
        %v1864 = vsel %vm1858, %v1851, %v1853
        %v1865 = vsel %vm1858, %v1848, %v1850
        %v1866 = vsel %vm1858, %v1849, %v1851
        %v1867 = vsel %vm1858, %v1846, %v1848
        %v1868 = vsel %vm1858, %v1847, %v1849
        %v1869 = vsel %vm1858, %v1844, %v1846
        %v1870 = vsel %vm1858, %v1845, %v1847
        %v1871 = vsel %vm1858, %v1842, %v1844
        %v1872 = vsel %vm1858, %v1843, %v1845
        %v1873 = vlaneseq
        %v1874 = vshrl.u32 %v1873, 7
        %v1875 = vsub.s32 3, %v1874
        %v1876 = vrot.slane %v1381, %v1875
        %v1877 = vlaneseq
        %v1878 = vshrl.u32 %v1877, 7
        %v1879 = vsub.s32 3, %v1878
        %v1880 = vrot.slane %v1382, %v1879
        %v1881 = vmul.f32 %v1871, %v1876
        %v1882 = vmul.f32 %v1872, %v1880
        %v1883 = vmul.f32 %v1869, %v1876
        %v1884 = vmul.f32 %v1870, %v1880
        %v1885 = vmul.f32 %v1867, %v1876
        %v1886 = vmul.f32 %v1868, %v1880
        %v1887 = vmul.f32 %v1865, %v1876
        %v1888 = vmul.f32 %v1866, %v1880
        %v1889 = vadd.f32 %v1834, %v1881
        %v1890 = vadd.f32 %v1835, %v1882
        %v1891 = vadd.f32 %v1836, %v1883
        %v1892 = vadd.f32 %v1837, %v1884
        %v1893 = vadd.f32 %v1838, %v1885
        %v1894 = vadd.f32 %v1839, %v1886
        %v1895 = vadd.f32 %v1840, %v1887
        %v1896 = vadd.f32 %v1841, %v1888
        %v1897 = vlaneseq
        %v1898 = vshrl.u32 %v1897, 7
        %v1899 = vsub.s32 3, %v1898
        %v1900 = vrot.slane %v1383, %v1899
        %v1901 = vlaneseq
        %v1902 = vshrl.u32 %v1901, 7
        %v1903 = vsub.s32 3, %v1902
        %v1904 = vrot.slane %v1384, %v1903
        %v1905 = vmul.f32 %v1869, %v1900
        %v1906 = vmul.f32 %v1870, %v1904
        %v1907 = vmul.f32 %v1867, %v1900
        %v1908 = vmul.f32 %v1868, %v1904
        %v1909 = vmul.f32 %v1865, %v1900
        %v1910 = vmul.f32 %v1866, %v1904
        %v1911 = vmul.f32 %v1863, %v1900
        %v1912 = vmul.f32 %v1864, %v1904
        %v1913 = vadd.f32 %v1889, %v1905
        %v1914 = vadd.f32 %v1890, %v1906
        %v1915 = vadd.f32 %v1891, %v1907
        %v1916 = vadd.f32 %v1892, %v1908
        %v1917 = vadd.f32 %v1893, %v1909
        %v1918 = vadd.f32 %v1894, %v1910
        %v1919 = vadd.f32 %v1895, %v1911
        %v1920 = vadd.f32 %v1896, %v1912
        %v1921 = vlaneseq
        %v1922 = vshrl.u32 %v1921, 7
        %v1923 = vsub.s32 3, %v1922
        %v1924 = vrot.slane %v1385, %v1923
        %v1925 = vlaneseq
        %v1926 = vshrl.u32 %v1925, 7
        %v1927 = vsub.s32 3, %v1926
        %v1928 = vrot.slane %v1386, %v1927
        %v1929 = vmul.f32 %v1867, %v1924
        %v1930 = vmul.f32 %v1868, %v1928
        %v1931 = vmul.f32 %v1865, %v1924
        %v1932 = vmul.f32 %v1866, %v1928
        %v1933 = vmul.f32 %v1863, %v1924
        %v1934 = vmul.f32 %v1864, %v1928
        %v1935 = vmul.f32 %v1861, %v1924
        %v1936 = vmul.f32 %v1862, %v1928
        %v1937 = vadd.f32 %v1913, %v1929
        %v1938 = vadd.f32 %v1914, %v1930
        %v1939 = vadd.f32 %v1915, %v1931
        %v1940 = vadd.f32 %v1916, %v1932
        %v1941 = vadd.f32 %v1917, %v1933
        %v1942 = vadd.f32 %v1918, %v1934
        %v1943 = vadd.f32 %v1919, %v1935
        %v1944 = vadd.f32 %v1920, %v1936
        %v1945 = vlaneseq
        %v1946 = vshrl.u32 %v1945, 7
        %v1947 = vsub.s32 3, %v1946
        %v1948 = vrot.slane %v1387, %v1947
        %v1949 = vlaneseq
        %v1950 = vshrl.u32 %v1949, 7
        %v1951 = vsub.s32 3, %v1950
        %v1952 = vrot.slane %v1388, %v1951
        %v1953 = vmul.f32 %v1865, %v1948
        %v1954 = vmul.f32 %v1866, %v1952
        %v1955 = vmul.f32 %v1863, %v1948
        %v1956 = vmul.f32 %v1864, %v1952
        %v1957 = vmul.f32 %v1861, %v1948
        %v1958 = vmul.f32 %v1862, %v1952
        %v1959 = vmul.f32 %v1859, %v1948
        %v1960 = vmul.f32 %v1860, %v1952
        %v1961 = vadd.f32 %v1937, %v1953
        %v1962 = vadd.f32 %v1938, %v1954
        %v1963 = vadd.f32 %v1939, %v1955
        %v1964 = vadd.f32 %v1940, %v1956
        %v1965 = vadd.f32 %v1941, %v1957
        %v1966 = vadd.f32 %v1942, %v1958
        %v1967 = vadd.f32 %v1943, %v1959
        %v1968 = vadd.f32 %v1944, %v1960
        %v1969 = vrot.slane %v1365, 5
        %v1970 = vrot.slane %v1366, 5
        %v1971 = vrot.slane %v1367, 5
        %v1972 = vrot.slane %v1368, 5
        %v1973 = vrot.slane %v1369, 5
        %v1974 = vrot.slane %v1370, 5
        %v1975 = vrot.slane %v1371, 5
        %v1976 = vrot.slane %v1372, 5
        %v1977 = vrot.slane %v1373, 5
        %v1978 = vrot.slane %v1374, 5
        %v1979 = vrot.slane %v1375, 5
        %v1980 = vrot.slane %v1376, 5
        %v1981 = vrot.slane %v1377, 5
        %v1982 = vrot.slane %v1378, 5
        %v1983 = vrot.slane %v1379, 5
        %v1984 = vrot.slane %v1380, 5
        %vm1985 = vcmp.lt.s32.totalorder %v1306, 3
        %v1986 = vsel %vm1985, %v1981, %v1983
        %v1987 = vsel %vm1985, %v1982, %v1984
        %v1988 = vsel %vm1985, %v1979, %v1981
        %v1989 = vsel %vm1985, %v1980, %v1982
        %v1990 = vsel %vm1985, %v1977, %v1979
        %v1991 = vsel %vm1985, %v1978, %v1980
        %v1992 = vsel %vm1985, %v1975, %v1977
        %v1993 = vsel %vm1985, %v1976, %v1978
        %v1994 = vsel %vm1985, %v1973, %v1975
        %v1995 = vsel %vm1985, %v1974, %v1976
        %v1996 = vsel %vm1985, %v1971, %v1973
        %v1997 = vsel %vm1985, %v1972, %v1974
        %v1998 = vsel %vm1985, %v1969, %v1971
        %v1999 = vsel %vm1985, %v1970, %v1972
        %v2000 = vlaneseq
        %v2001 = vshrl.u32 %v2000, 7
        %v2002 = vsub.s32 4, %v2001
        %v2003 = vrot.slane %v1381, %v2002
        %v2004 = vlaneseq
        %v2005 = vshrl.u32 %v2004, 7
        %v2006 = vsub.s32 4, %v2005
        %v2007 = vrot.slane %v1382, %v2006
        %v2008 = vmul.f32 %v1998, %v2003
        %v2009 = vmul.f32 %v1999, %v2007
        %v2010 = vmul.f32 %v1996, %v2003
        %v2011 = vmul.f32 %v1997, %v2007
        %v2012 = vmul.f32 %v1994, %v2003
        %v2013 = vmul.f32 %v1995, %v2007
        %v2014 = vmul.f32 %v1992, %v2003
        %v2015 = vmul.f32 %v1993, %v2007
        %v2016 = vadd.f32 %v1961, %v2008
        %v2017 = vadd.f32 %v1962, %v2009
        %v2018 = vadd.f32 %v1963, %v2010
        %v2019 = vadd.f32 %v1964, %v2011
        %v2020 = vadd.f32 %v1965, %v2012
        %v2021 = vadd.f32 %v1966, %v2013
        %v2022 = vadd.f32 %v1967, %v2014
        %v2023 = vadd.f32 %v1968, %v2015
        %v2024 = vlaneseq
        %v2025 = vshrl.u32 %v2024, 7
        %v2026 = vsub.s32 4, %v2025
        %v2027 = vrot.slane %v1383, %v2026
        %v2028 = vlaneseq
        %v2029 = vshrl.u32 %v2028, 7
        %v2030 = vsub.s32 4, %v2029
        %v2031 = vrot.slane %v1384, %v2030
        %v2032 = vmul.f32 %v1996, %v2027
        %v2033 = vmul.f32 %v1997, %v2031
        %v2034 = vmul.f32 %v1994, %v2027
        %v2035 = vmul.f32 %v1995, %v2031
        %v2036 = vmul.f32 %v1992, %v2027
        %v2037 = vmul.f32 %v1993, %v2031
        %v2038 = vmul.f32 %v1990, %v2027
        %v2039 = vmul.f32 %v1991, %v2031
        %v2040 = vadd.f32 %v2016, %v2032
        %v2041 = vadd.f32 %v2017, %v2033
        %v2042 = vadd.f32 %v2018, %v2034
        %v2043 = vadd.f32 %v2019, %v2035
        %v2044 = vadd.f32 %v2020, %v2036
        %v2045 = vadd.f32 %v2021, %v2037
        %v2046 = vadd.f32 %v2022, %v2038
        %v2047 = vadd.f32 %v2023, %v2039
        %v2048 = vlaneseq
        %v2049 = vshrl.u32 %v2048, 7
        %v2050 = vsub.s32 4, %v2049
        %v2051 = vrot.slane %v1385, %v2050
        %v2052 = vlaneseq
        %v2053 = vshrl.u32 %v2052, 7
        %v2054 = vsub.s32 4, %v2053
        %v2055 = vrot.slane %v1386, %v2054
        %v2056 = vmul.f32 %v1994, %v2051
        %v2057 = vmul.f32 %v1995, %v2055
        %v2058 = vmul.f32 %v1992, %v2051
        %v2059 = vmul.f32 %v1993, %v2055
        %v2060 = vmul.f32 %v1990, %v2051
        %v2061 = vmul.f32 %v1991, %v2055
        %v2062 = vmul.f32 %v1988, %v2051
        %v2063 = vmul.f32 %v1989, %v2055
        %v2064 = vadd.f32 %v2040, %v2056
        %v2065 = vadd.f32 %v2041, %v2057
        %v2066 = vadd.f32 %v2042, %v2058
        %v2067 = vadd.f32 %v2043, %v2059
        %v2068 = vadd.f32 %v2044, %v2060
        %v2069 = vadd.f32 %v2045, %v2061
        %v2070 = vadd.f32 %v2046, %v2062
        %v2071 = vadd.f32 %v2047, %v2063
        %v2072 = vlaneseq
        %v2073 = vshrl.u32 %v2072, 7
        %v2074 = vsub.s32 4, %v2073
        %v2075 = vrot.slane %v1387, %v2074
        %v2076 = vlaneseq
        %v2077 = vshrl.u32 %v2076, 7
        %v2078 = vsub.s32 4, %v2077
        %v2079 = vrot.slane %v1388, %v2078
        %v2080 = vmul.f32 %v1992, %v2075
        %v2081 = vmul.f32 %v1993, %v2079
        %v2082 = vmul.f32 %v1990, %v2075
        %v2083 = vmul.f32 %v1991, %v2079
        %v2084 = vmul.f32 %v1988, %v2075
        %v2085 = vmul.f32 %v1989, %v2079
        %v2086 = vmul.f32 %v1986, %v2075
        %v2087 = vmul.f32 %v1987, %v2079
        %v2088 = vadd.f32 %v2064, %v2080
        %v2089 = vadd.f32 %v2065, %v2081
        %v2090 = vadd.f32 %v2066, %v2082
        %v2091 = vadd.f32 %v2067, %v2083
        %v2092 = vadd.f32 %v2068, %v2084
        %v2093 = vadd.f32 %v2069, %v2085
        %v2094 = vadd.f32 %v2070, %v2086
        %v2095 = vadd.f32 %v2071, %v2087
        %v2096 = vrot.slane %v1365, 6
        %v2097 = vrot.slane %v1366, 6
        %v2098 = vrot.slane %v1367, 6
        %v2099 = vrot.slane %v1368, 6
        %v2100 = vrot.slane %v1369, 6
        %v2101 = vrot.slane %v1370, 6
        %v2102 = vrot.slane %v1371, 6
        %v2103 = vrot.slane %v1372, 6
        %v2104 = vrot.slane %v1373, 6
        %v2105 = vrot.slane %v1374, 6
        %v2106 = vrot.slane %v1375, 6
        %v2107 = vrot.slane %v1376, 6
        %v2108 = vrot.slane %v1377, 6
        %v2109 = vrot.slane %v1378, 6
        %v2110 = vrot.slane %v1379, 6
        %v2111 = vrot.slane %v1380, 6
        %vm2112 = vcmp.lt.s32.totalorder %v1306, 2
        %v2113 = vsel %vm2112, %v2108, %v2110
        %v2114 = vsel %vm2112, %v2109, %v2111
        %v2115 = vsel %vm2112, %v2106, %v2108
        %v2116 = vsel %vm2112, %v2107, %v2109
        %v2117 = vsel %vm2112, %v2104, %v2106
        %v2118 = vsel %vm2112, %v2105, %v2107
        %v2119 = vsel %vm2112, %v2102, %v2104
        %v2120 = vsel %vm2112, %v2103, %v2105
        %v2121 = vsel %vm2112, %v2100, %v2102
        %v2122 = vsel %vm2112, %v2101, %v2103
        %v2123 = vsel %vm2112, %v2098, %v2100
        %v2124 = vsel %vm2112, %v2099, %v2101
        %v2125 = vsel %vm2112, %v2096, %v2098
        %v2126 = vsel %vm2112, %v2097, %v2099
        %v2127 = vlaneseq
        %v2128 = vshrl.u32 %v2127, 7
        %v2129 = vsub.s32 5, %v2128
        %v2130 = vrot.slane %v1381, %v2129
        %v2131 = vlaneseq
        %v2132 = vshrl.u32 %v2131, 7
        %v2133 = vsub.s32 5, %v2132
        %v2134 = vrot.slane %v1382, %v2133
        %v2135 = vmul.f32 %v2125, %v2130
        %v2136 = vmul.f32 %v2126, %v2134
        %v2137 = vmul.f32 %v2123, %v2130
        %v2138 = vmul.f32 %v2124, %v2134
        %v2139 = vmul.f32 %v2121, %v2130
        %v2140 = vmul.f32 %v2122, %v2134
        %v2141 = vmul.f32 %v2119, %v2130
        %v2142 = vmul.f32 %v2120, %v2134
        %v2143 = vadd.f32 %v2088, %v2135
        %v2144 = vadd.f32 %v2089, %v2136
        %v2145 = vadd.f32 %v2090, %v2137
        %v2146 = vadd.f32 %v2091, %v2138
        %v2147 = vadd.f32 %v2092, %v2139
        %v2148 = vadd.f32 %v2093, %v2140
        %v2149 = vadd.f32 %v2094, %v2141
        %v2150 = vadd.f32 %v2095, %v2142
        %v2151 = vlaneseq
        %v2152 = vshrl.u32 %v2151, 7
        %v2153 = vsub.s32 5, %v2152
        %v2154 = vrot.slane %v1383, %v2153
        %v2155 = vlaneseq
        %v2156 = vshrl.u32 %v2155, 7
        %v2157 = vsub.s32 5, %v2156
        %v2158 = vrot.slane %v1384, %v2157
        %v2159 = vmul.f32 %v2123, %v2154
        %v2160 = vmul.f32 %v2124, %v2158
        %v2161 = vmul.f32 %v2121, %v2154
        %v2162 = vmul.f32 %v2122, %v2158
        %v2163 = vmul.f32 %v2119, %v2154
        %v2164 = vmul.f32 %v2120, %v2158
        %v2165 = vmul.f32 %v2117, %v2154
        %v2166 = vmul.f32 %v2118, %v2158
        %v2167 = vadd.f32 %v2143, %v2159
        %v2168 = vadd.f32 %v2144, %v2160
        %v2169 = vadd.f32 %v2145, %v2161
        %v2170 = vadd.f32 %v2146, %v2162
        %v2171 = vadd.f32 %v2147, %v2163
        %v2172 = vadd.f32 %v2148, %v2164
        %v2173 = vadd.f32 %v2149, %v2165
        %v2174 = vadd.f32 %v2150, %v2166
        %v2175 = vlaneseq
        %v2176 = vshrl.u32 %v2175, 7
        %v2177 = vsub.s32 5, %v2176
        %v2178 = vrot.slane %v1385, %v2177
        %v2179 = vlaneseq
        %v2180 = vshrl.u32 %v2179, 7
        %v2181 = vsub.s32 5, %v2180
        %v2182 = vrot.slane %v1386, %v2181
        %v2183 = vmul.f32 %v2121, %v2178
        %v2184 = vmul.f32 %v2122, %v2182
        %v2185 = vmul.f32 %v2119, %v2178
        %v2186 = vmul.f32 %v2120, %v2182
        %v2187 = vmul.f32 %v2117, %v2178
        %v2188 = vmul.f32 %v2118, %v2182
        %v2189 = vmul.f32 %v2115, %v2178
        %v2190 = vmul.f32 %v2116, %v2182
        %v2191 = vadd.f32 %v2167, %v2183
        %v2192 = vadd.f32 %v2168, %v2184
        %v2193 = vadd.f32 %v2169, %v2185
        %v2194 = vadd.f32 %v2170, %v2186
        %v2195 = vadd.f32 %v2171, %v2187
        %v2196 = vadd.f32 %v2172, %v2188
        %v2197 = vadd.f32 %v2173, %v2189
        %v2198 = vadd.f32 %v2174, %v2190
        %v2199 = vlaneseq
        %v2200 = vshrl.u32 %v2199, 7
        %v2201 = vsub.s32 5, %v2200
        %v2202 = vrot.slane %v1387, %v2201
        %v2203 = vlaneseq
        %v2204 = vshrl.u32 %v2203, 7
        %v2205 = vsub.s32 5, %v2204
        %v2206 = vrot.slane %v1388, %v2205
        %v2207 = vmul.f32 %v2119, %v2202
        %v2208 = vmul.f32 %v2120, %v2206
        %v2209 = vmul.f32 %v2117, %v2202
        %v2210 = vmul.f32 %v2118, %v2206
        %v2211 = vmul.f32 %v2115, %v2202
        %v2212 = vmul.f32 %v2116, %v2206
        %v2213 = vmul.f32 %v2113, %v2202
        %v2214 = vmul.f32 %v2114, %v2206
        %v2215 = vadd.f32 %v2191, %v2207
        %v2216 = vadd.f32 %v2192, %v2208
        %v2217 = vadd.f32 %v2193, %v2209
        %v2218 = vadd.f32 %v2194, %v2210
        %v2219 = vadd.f32 %v2195, %v2211
        %v2220 = vadd.f32 %v2196, %v2212
        %v2221 = vadd.f32 %v2197, %v2213
        %v2222 = vadd.f32 %v2198, %v2214
        %v2223 = vrot.slane %v1365, 7
        %v2224 = vrot.slane %v1366, 7
        %v2225 = vrot.slane %v1367, 7
        %v2226 = vrot.slane %v1368, 7
        %v2227 = vrot.slane %v1369, 7
        %v2228 = vrot.slane %v1370, 7
        %v2229 = vrot.slane %v1371, 7
        %v2230 = vrot.slane %v1372, 7
        %v2231 = vrot.slane %v1373, 7
        %v2232 = vrot.slane %v1374, 7
        %v2233 = vrot.slane %v1375, 7
        %v2234 = vrot.slane %v1376, 7
        %v2235 = vrot.slane %v1377, 7
        %v2236 = vrot.slane %v1378, 7
        %v2237 = vrot.slane %v1379, 7
        %v2238 = vrot.slane %v1380, 7
        %vm2239 = vcmp.lt.s32.totalorder %v1306, 1
        %v2240 = vsel %vm2239, %v2235, %v2237
        %v2241 = vsel %vm2239, %v2236, %v2238
        %v2242 = vsel %vm2239, %v2233, %v2235
        %v2243 = vsel %vm2239, %v2234, %v2236
        %v2244 = vsel %vm2239, %v2231, %v2233
        %v2245 = vsel %vm2239, %v2232, %v2234
        %v2246 = vsel %vm2239, %v2229, %v2231
        %v2247 = vsel %vm2239, %v2230, %v2232
        %v2248 = vsel %vm2239, %v2227, %v2229
        %v2249 = vsel %vm2239, %v2228, %v2230
        %v2250 = vsel %vm2239, %v2225, %v2227
        %v2251 = vsel %vm2239, %v2226, %v2228
        %v2252 = vsel %vm2239, %v2223, %v2225
        %v2253 = vsel %vm2239, %v2224, %v2226
        %v2254 = vlaneseq
        %v2255 = vshrl.u32 %v2254, 7
        %v2256 = vsub.s32 6, %v2255
        %v2257 = vrot.slane %v1381, %v2256
        %v2258 = vlaneseq
        %v2259 = vshrl.u32 %v2258, 7
        %v2260 = vsub.s32 6, %v2259
        %v2261 = vrot.slane %v1382, %v2260
        %v2262 = vmul.f32 %v2252, %v2257
        %v2263 = vmul.f32 %v2253, %v2261
        %v2264 = vmul.f32 %v2250, %v2257
        %v2265 = vmul.f32 %v2251, %v2261
        %v2266 = vmul.f32 %v2248, %v2257
        %v2267 = vmul.f32 %v2249, %v2261
        %v2268 = vmul.f32 %v2246, %v2257
        %v2269 = vmul.f32 %v2247, %v2261
        %v2270 = vadd.f32 %v2215, %v2262
        %v2271 = vadd.f32 %v2216, %v2263
        %v2272 = vadd.f32 %v2217, %v2264
        %v2273 = vadd.f32 %v2218, %v2265
        %v2274 = vadd.f32 %v2219, %v2266
        %v2275 = vadd.f32 %v2220, %v2267
        %v2276 = vadd.f32 %v2221, %v2268
        %v2277 = vadd.f32 %v2222, %v2269
        %v2278 = vlaneseq
        %v2279 = vshrl.u32 %v2278, 7
        %v2280 = vsub.s32 6, %v2279
        %v2281 = vrot.slane %v1383, %v2280
        %v2282 = vlaneseq
        %v2283 = vshrl.u32 %v2282, 7
        %v2284 = vsub.s32 6, %v2283
        %v2285 = vrot.slane %v1384, %v2284
        %v2286 = vmul.f32 %v2250, %v2281
        %v2287 = vmul.f32 %v2251, %v2285
        %v2288 = vmul.f32 %v2248, %v2281
        %v2289 = vmul.f32 %v2249, %v2285
        %v2290 = vmul.f32 %v2246, %v2281
        %v2291 = vmul.f32 %v2247, %v2285
        %v2292 = vmul.f32 %v2244, %v2281
        %v2293 = vmul.f32 %v2245, %v2285
        %v2294 = vadd.f32 %v2270, %v2286
        %v2295 = vadd.f32 %v2271, %v2287
        %v2296 = vadd.f32 %v2272, %v2288
        %v2297 = vadd.f32 %v2273, %v2289
        %v2298 = vadd.f32 %v2274, %v2290
        %v2299 = vadd.f32 %v2275, %v2291
        %v2300 = vadd.f32 %v2276, %v2292
        %v2301 = vadd.f32 %v2277, %v2293
        %v2302 = vlaneseq
        %v2303 = vshrl.u32 %v2302, 7
        %v2304 = vsub.s32 6, %v2303
        %v2305 = vrot.slane %v1385, %v2304
        %v2306 = vlaneseq
        %v2307 = vshrl.u32 %v2306, 7
        %v2308 = vsub.s32 6, %v2307
        %v2309 = vrot.slane %v1386, %v2308
        %v2310 = vmul.f32 %v2248, %v2305
        %v2311 = vmul.f32 %v2249, %v2309
        %v2312 = vmul.f32 %v2246, %v2305
        %v2313 = vmul.f32 %v2247, %v2309
        %v2314 = vmul.f32 %v2244, %v2305
        %v2315 = vmul.f32 %v2245, %v2309
        %v2316 = vmul.f32 %v2242, %v2305
        %v2317 = vmul.f32 %v2243, %v2309
        %v2318 = vadd.f32 %v2294, %v2310
        %v2319 = vadd.f32 %v2295, %v2311
        %v2320 = vadd.f32 %v2296, %v2312
        %v2321 = vadd.f32 %v2297, %v2313
        %v2322 = vadd.f32 %v2298, %v2314
        %v2323 = vadd.f32 %v2299, %v2315
        %v2324 = vadd.f32 %v2300, %v2316
        %v2325 = vadd.f32 %v2301, %v2317
        %v2326 = vlaneseq
        %v2327 = vshrl.u32 %v2326, 7
        %v2328 = vsub.s32 6, %v2327
        %v2329 = vrot.slane %v1387, %v2328
        %v2330 = vlaneseq
        %v2331 = vshrl.u32 %v2330, 7
        %v2332 = vsub.s32 6, %v2331
        %v2333 = vrot.slane %v1388, %v2332
        %v2334 = vmul.f32 %v2246, %v2329
        %v2335 = vmul.f32 %v2247, %v2333
        %v2336 = vmul.f32 %v2244, %v2329
        %v2337 = vmul.f32 %v2245, %v2333
        %v2338 = vmul.f32 %v2242, %v2329
        %v2339 = vmul.f32 %v2243, %v2333
        %v2340 = vmul.f32 %v2240, %v2329
        %v2341 = vmul.f32 %v2241, %v2333
        %v2342 = vadd.f32 %v2318, %v2334
        %v2343 = vadd.f32 %v2319, %v2335
        %v2344 = vadd.f32 %v2320, %v2336
        %v2345 = vadd.f32 %v2321, %v2337
        %v2346 = vadd.f32 %v2322, %v2338
        %v2347 = vadd.f32 %v2323, %v2339
        %v2348 = vadd.f32 %v2324, %v2340
        %v2349 = vadd.f32 %v2325, %v2341
        %v2350 = vld [vmem:[#allocation20] sm:$0x3]
        %v2352 = vlaneseq
        %v2353 = vshrl.u32 %v2352, 7
        %v2354 = vsub.s32 0, %v2353
        %v2355 = vrot.slane %v2350, %v2354
        %v2356 = vlaneseq
        %v2357 = vshrl.u32 %v2356, 7
        %v2358 = vsub.s32 1, %v2357
        %v2359 = vrot.slane %v2350, %v2358
        %v2362 = vadd.f32 %v2342, %v2355
        %v2363 = vadd.f32 %v2343, %v2359
        %v2364 = vadd.f32 %v2344, %v2355
        %v2365 = vadd.f32 %v2345, %v2359
        %v2366 = vadd.f32 %v2346, %v2355
        %v2367 = vadd.f32 %v2347, %v2359
        %v2368 = vadd.f32 %v2348, %v2355
        %v2369 = vadd.f32 %v2349, %v2359
        %v2370 = vmul.f32 %v2362, 0.5
        %v2371 = vmul.f32 %v2363, 0.5
        %v2372 = vmul.f32 %v2364, 0.5
        %v2373 = vmul.f32 %v2365, 0.5
        %v2374 = vmul.f32 %v2366, 0.5
        %v2375 = vmul.f32 %v2367, 0.5
        %v2376 = vmul.f32 %v2368, 0.5
        %v2377 = vmul.f32 %v2369, 0.5
        %v2378 = vtanh.pop %v2370
        %v2379 = vtanh.pop %v2371
        %v2380 = vtanh.pop %v2372
        %v2381 = vtanh.pop %v2373
        %v2382 = vtanh.pop %v2374
        %v2383 = vtanh.pop %v2375
        %v2384 = vtanh.pop %v2376
        %v2385 = vtanh.pop %v2377
        %v2386 = vmul.f32 %v2378, 0.5
        %v2387 = vmul.f32 %v2379, 0.5
        %v2388 = vmul.f32 %v2380, 0.5
        %v2389 = vmul.f32 %v2381, 0.5
        %v2390 = vmul.f32 %v2382, 0.5
        %v2391 = vmul.f32 %v2383, 0.5
        %v2392 = vmul.f32 %v2384, 0.5
        %v2393 = vmul.f32 %v2385, 0.5
        %v2394 = vadd.f32 %v2386, 0.5
        %v2395 = vadd.f32 %v2387, 0.5
        %v2396 = vadd.f32 %v2388, 0.5
        %v2397 = vadd.f32 %v2389, 0.5
        %v2398 = vadd.f32 %v2390, 0.5
        %v2399 = vadd.f32 %v2391, 0.5
        %v2400 = vadd.f32 %v2392, 0.5
        %v2401 = vadd.f32 %v2393, 0.5
        %v2402 = vmul.f32 %v2362, %v2394
        %v2403 = vmul.f32 %v2363, %v2395
        %v2404 = vmul.f32 %v2364, %v2396
        %v2405 = vmul.f32 %v2365, %v2397
        %v2406 = vmul.f32 %v2366, %v2398
        %v2407 = vmul.f32 %v2367, %v2399
        %v2408 = vmul.f32 %v2368, %v2400
        %v2409 = vmul.f32 %v2369, %v2401
        %v2410 = vpack.c.bf16 %v2404, %v2402
        %v2411 = vpack.c.bf16 %v2405, %v2403
        %v2412 = vpack.c.bf16 %v2408, %v2406
        %v2413 = vpack.c.bf16 %v2409, %v2407
        %v2414 = vld [vmem:[#allocation21] sm:$0xf]
        %v2415 = vld [vmem:[#allocation21 + $0x4] sm:$0xf]
        %v2416 = vld [vmem:[#allocation21 + $0x8] sm:$0xf]
        %v2417 = vld [vmem:[#allocation21 + $0xc] sm:$0xf]
        %v2418 = vld [vmem:[#allocation21 + $0x10] sm:$0xf]
        %v2419 = vld [vmem:[#allocation21 + $0x14] sm:$0xf]
        %v2420 = vld [vmem:[#allocation21 + $0x18] sm:$0xf]
        %v2421 = vld [vmem:[#allocation21 + $0x1c] sm:$0xf]
        %v2422 = vld [vmem:[#allocation21 + $0x20] sm:$0xf]
        %v2423 = vld [vmem:[#allocation21 + $0x24] sm:$0xf]
        %v2424 = vld [vmem:[#allocation21 + $0x28] sm:$0xf]
        %v2425 = vld [vmem:[#allocation21 + $0x2c] sm:$0xf]
        %v2426 = vld [vmem:[#allocation21 + $0x30] sm:$0xf]
        %v2427 = vld [vmem:[#allocation21 + $0x34] sm:$0xf]
        %v2428 = vld [vmem:[#allocation21 + $0x38] sm:$0xf]
        %v2429 = vld [vmem:[#allocation21 + $0x3c] sm:$0xf]
        %v2430 = vld [vmem:[#allocation21 + $0x40] sm:$0xf]
        %v2431 = vld [vmem:[#allocation21 + $0x44] sm:$0xf]
        %v2432 = vld [vmem:[#allocation21 + $0x48] sm:$0xf]
        %v2433 = vld [vmem:[#allocation21 + $0x4c] sm:$0xf]
        %v2434 = vld [vmem:[#allocation21 + $0x50] sm:$0xf]
        %v2435 = vld [vmem:[#allocation21 + $0x54] sm:$0xf]
        %v2436 = vld [vmem:[#allocation21 + $0x58] sm:$0xf]
        %v2437 = vld [vmem:[#allocation21 + $0x5c] sm:$0xf]
        %v2438 = vld [vmem:[#allocation21 + $0x60] sm:$0xf]
        %v2439 = vld [vmem:[#allocation21 + $0x64] sm:$0xf]
        %v2440 = vld [vmem:[#allocation21 + $0x68] sm:$0xf]
        %v2441 = vld [vmem:[#allocation21 + $0x6c] sm:$0xf]
        %v2442 = vld [vmem:[#allocation21 + $0x70] sm:$0xf]
        %v2443 = vld [vmem:[#allocation21 + $0x74] sm:$0xf]
        %v2444 = vld [vmem:[#allocation21 + $0x78] sm:$0xf]
        %v2445 = vld [vmem:[#allocation21 + $0x7c] sm:$0xf]
        %v2446 = vld [vmem:[#allocation23] sm:$0x1]
        %v2448 = vlaneseq
        %v2449 = vshrl.u32 %v2448, 7
        %v2450 = vsub.s32 0, %v2449
        %v2451 = vrot.slane %v2446, %v2450
        %v2485 = vunpack.c.l.b16 %v2414
        %v2486 = vunpack.c.l.b16 %v2415
        %v2487 = vunpack.c.l.b16 %v2416
        %v2488 = vunpack.c.l.b16 %v2417
        %v2489 = vunpack.c.l.b16 %v2418
        %v2490 = vunpack.c.l.b16 %v2419
        %v2491 = vunpack.c.l.b16 %v2420
        %v2492 = vunpack.c.l.b16 %v2421
        %v2493 = vunpack.c.l.b16 %v2422
        %v2494 = vunpack.c.l.b16 %v2423
        %v2495 = vunpack.c.l.b16 %v2424
        %v2496 = vunpack.c.l.b16 %v2425
        %v2497 = vunpack.c.l.b16 %v2426
        %v2498 = vunpack.c.l.b16 %v2427
        %v2499 = vunpack.c.l.b16 %v2428
        %v2500 = vunpack.c.l.b16 %v2429
        %v2501 = vunpack.c.l.b16 %v2430
        %v2502 = vunpack.c.l.b16 %v2431
        %v2503 = vunpack.c.l.b16 %v2432
        %v2504 = vunpack.c.l.b16 %v2433
        %v2505 = vunpack.c.l.b16 %v2434
        %v2506 = vunpack.c.l.b16 %v2435
        %v2507 = vunpack.c.l.b16 %v2436
        %v2508 = vunpack.c.l.b16 %v2437
        %v2509 = vunpack.c.l.b16 %v2438
        %v2510 = vunpack.c.l.b16 %v2439
        %v2511 = vunpack.c.l.b16 %v2440
        %v2512 = vunpack.c.l.b16 %v2441
        %v2513 = vunpack.c.l.b16 %v2442
        %v2514 = vunpack.c.l.b16 %v2443
        %v2515 = vunpack.c.l.b16 %v2444
        %v2516 = vunpack.c.l.b16 %v2445
        %v2517 = vpack.c.b16 %v2486, %v2485
        %v2518 = vpack.c.b16 %v2488, %v2487
        %v2519 = vpack.c.b16 %v2490, %v2489
        %v2520 = vpack.c.b16 %v2492, %v2491
        %v2521 = vpack.c.b16 %v2494, %v2493
        %v2522 = vpack.c.b16 %v2496, %v2495
        %v2523 = vpack.c.b16 %v2498, %v2497
        %v2524 = vpack.c.b16 %v2500, %v2499
        %v2525 = vpack.c.b16 %v2502, %v2501
        %v2526 = vpack.c.b16 %v2504, %v2503
        %v2527 = vpack.c.b16 %v2506, %v2505
        %v2528 = vpack.c.b16 %v2508, %v2507
        %v2529 = vpack.c.b16 %v2510, %v2509
        %v2530 = vpack.c.b16 %v2512, %v2511
        %v2531 = vpack.c.b16 %v2514, %v2513
        %v2532 = vpack.c.b16 %v2516, %v2515
        %2549 = vmatprep.subr.bf16.mxu0 0
        %2550 = vmatpush1.bf16.msra.mxu0 %v2517
        %2551 = vmatprep.subr.bf16.mxu0 0
        %2552 = vmatpush1.bf16.msra.mxu0 %v2518
        %2553 = vmatprep.subr.bf16.mxu0 0
        %2554 = vmatpush1.bf16.msra.mxu0 %v2519
        %2555 = vmatprep.subr.bf16.mxu0 0
        %2556 = vmatpush1.bf16.msra.mxu0 %v2520
        %2557 = vmatprep.subr.bf16.mxu0 0
        %2558 = vmatpush1.bf16.msra.mxu0 %v2521
        %2559 = vmatprep.subr.bf16.mxu0 0
        %2560 = vmatpush1.bf16.msra.mxu0 %v2522
        %2561 = vmatprep.subr.bf16.mxu0 0
        %2562 = vmatpush1.bf16.msra.mxu0 %v2523
        %2563 = vmatprep.subr.bf16.mxu0 0
        %2564 = vmatpush1.bf16.msra.mxu0 %v2524
        %2565 = vmatprep.subr.bf16.mxu0 0
        %2566 = vmatpush1.bf16.msra.mxu0 %v2525
        %2567 = vmatprep.subr.bf16.mxu0 0
        %2568 = vmatpush1.bf16.msra.mxu0 %v2526
        %2569 = vmatprep.subr.bf16.mxu0 0
        %2570 = vmatpush1.bf16.msra.mxu0 %v2527
        %2571 = vmatprep.subr.bf16.mxu0 0
        %2572 = vmatpush1.bf16.msra.mxu0 %v2528
        %2573 = vmatprep.subr.bf16.mxu0 0
        %2574 = vmatpush1.bf16.msra.mxu0 %v2529
        %2575 = vmatprep.subr.bf16.mxu0 0
        %2576 = vmatpush1.bf16.msra.mxu0 %v2530
        %2577 = vmatprep.subr.bf16.mxu0 0
        %2578 = vmatpush1.bf16.msra.mxu0 %v2531
        %2579 = vmatprep.subr.bf16.mxu0 0
        %2580 = vmatpush1.bf16.msra.mxu0 %v2532
        %2581 = vmatprep.mubr.bf16.mxu0 %v2411
        %2582 = vmatmul.mubr.bf16.gmra.mrb[0].mxu0 %v2410
        %v2583 = vpop.f32.mrb[0].mxu0
        %v2584 = vadd.f32 %v2451, %v2583
        %v2585 = vpop.f32.mrb[0].mxu0
        %v2586 = vpop.f32.mrb[0].mxu0
        %v2587 = vadd.f32 %v2451, %v2586
        %v2588 = vpop.f32.mrb[0].mxu0
        %2589 = vmatprep.mubr.bf16.mxu0 %v2413
        %2590 = vmatmul.mubr.bf16.gmra.mrb[0].mxu0 %v2412
        %v2591 = vpop.f32.mrb[0].mxu0
        %v2592 = vadd.f32 %v2451, %v2591
        %v2593 = vpop.f32.mrb[0].mxu0
        %v2594 = vpop.f32.mrb[0].mxu0
        %v2595 = vadd.f32 %v2451, %v2594
        %v2596 = vpop.f32.mrb[0].mxu0
        %2597 = vdwg.mxu0
        %v2598 = vld [vmem:[%s605] sm:$0xff]
        %v2599 = vld [vmem:[%s605 + $0x8] sm:$0xff]
        %v2600 = vld [vmem:[%s605 + $0x10] sm:$0xff]
        %v2601 = vld [vmem:[%s605 + $0x18] sm:$0xff]
        %v2602 = vadd.f32 %v2598, %v2584
        %v2603 = vadd.f32 %v2599, %v2587
        %v2604 = vadd.f32 %v2600, %v2592
        %v2605 = vadd.f32 %v2601, %v2595
        %2606 = vst [vmem:[%s706] sm:$0xff] %v2602
        %2607 = vst [vmem:[%s706 + $0x8] sm:$0xff] %v2603
        %2608 = vst [vmem:[%s706 + $0x10] sm:$0xff] %v2604
        %2609 = vst [vmem:[%s706 + $0x18] sm:$0xff] %v2605
        %s2610 = sand.u32 %s362, 1
        %s2611 = scalar_lea.sflag [#allocation5], %s2610
        %s2612 = sand.u32 %s362, 1
        %s2613 = smul.addr %s2612, 32
        %s2614 = scalar_lea.vmem [#allocation24], %s2613
        // Predicated region
        $region125: #{tpu_custom_call.1} parent=71 // pred_check
          %p2615 = pneg %p372
        $region126: #{tpu_custom_call.1} parent=71 // pred_check_branch
          %2617 = sbr.rel (%p2615) target = $region128
        $region127: #{tpu_custom_call.1} parent=71 // pred_region
          %s2618 = smul.u32 4, %s43
          %s2620 = ssub.s32 512, 512
          %2621 = vsyncadd %s2611, %s2620
          %s2622 = smul.addr %s42, 8
          %s2623 = sadd.s32 %s2618, %s2622
          %s2624 = smul.addr %s2623, 128
          %s2625 = scalar_lea.hbm %s13, %s2624
          %s2626 = sshll.u32 %s2614, 4
          %s2627 = int_to_ptr.vmem [resolvable:$true] %s2626
          %2632 = dma.vmem_to_hbm [thread:$0]  %s2627, 512, %s2625, %s2611, 128, 128, 8
        $region128: #{tpu_custom_call.1} parent=71 // pred_fallthru
          _
      $region72: #{tpu_custom_call.1} parent=5 // pred_fallthru
        _
      %p2633 = scmp.le.s32.totalorder 2, %s33
      // Predicated region
      $region129: #{tpu_custom_call.1} parent=5 // pred_check
        %p2634 = pneg %p2633
      $region130: #{tpu_custom_call.1} parent=5 // pred_check_branch
        %2636 = sbr.rel (%p2634) target = $region132
      $region131: #{tpu_custom_call.1} parent=5 // pred_region
        %s2637 = ssub.s32 %s33, 2
        // Predicated region
        $region133: #{tpu_custom_call.1} parent=131 // pred_check
          %p2638 = pneg %p378
        $region134: #{tpu_custom_call.1} parent=131 // pred_check_branch
          %2640 = sbr.rel (%p2638) target = $region136
        $region135: #{tpu_custom_call.1} parent=131 // pred_region
          %s2641 = sand.u32 %s363, 1
          %s2642 = scalar_lea.sflag [#allocation5], %s2641
          %s2643 = sand.u32 %s363, 1
          %s2644 = smul.addr %s2643, 32
          %s2645 = scalar_lea.vmem [#allocation24], %s2644
          %2646 = dma.done %s2642, 512
        $region136: #{tpu_custom_call.1} parent=131 // pred_fallthru
          _
      $region132: #{tpu_custom_call.1} parent=5 // pred_fallthru
        _
    $region6: #{tpu_custom_call.1} parent=1 // loop_footer
      %s37 = sadd.s32 1, %s33
    $region7: #{tpu_custom_call.1} parent=1 // loop_footer_branch
      %32 = sbr.rel target = $region3
    $region8: #{tpu_custom_call.1} parent=1 // loop_exit
      _
    %2647 = vsyncpa [#allocation4], 1
    %s2648 = scalar_lea.sflag [#allocation4], 1
    %2649 = vsyncpa %s2648, 1
    %2650 = vsyncpa [#allocation7], 1
    %s2651 = scalar_lea.sflag [#allocation7], 1
    %2652 = vsyncpa %s2651, 1
    %2653 = vsyncpa [#allocation10], 1
    %2654 = vsyncpa [#allocation13], 1
    %2655 = vsyncpa [#allocation16], 1
    %2656 = vsyncpa [#allocation19], 1
    %2657 = vsyncpa [#allocation22], 1
    %2658 = vsyncpa [#allocation5], 1
    %s2659 = scalar_lea.sflag [#allocation5], 1
    %2660 = vsyncpa %s2659, 1

</llo_original>
